<compile_context>
chip_gen: v7x
topology: tpu7x:2x2x1
jax: 0.10.0
libtpu: 0.0.40
codegen_flags: <defaults>
</compile_context>

<pallas_src>
import functools

import jax
import jax.numpy as jnp
from jax.experimental import pallas as pl
from jax.experimental.pallas import tpu as pltpu


# ----------------------------------------------------------------------------
# Fused [Conv3x3 + ReLU] x L  +  MaxPool2d(2) kernel (one batch element / grid step)
# ----------------------------------------------------------------------------
def _conv_block_kernel(x_ref, mask_ref, w_ref, b_ref, o_ref, act_ref, slab_ref,
                       *, H, W, Wp, Ho, Wo, n_layers, c_out, c_max):
    """
    x_ref    : (1, H, W, Cmax)     input tile (channels zero-padded to Cmax)
    mask_ref : (H*Wp, 1)           1.0 on valid width columns, 0.0 on pad columns
    w_ref    : (L, 9*Cmax, Cmax)   tap-major, channel-padded conv weights
    b_ref    : (L, 1, Cmax)        channel-padded biases
    o_ref    : (1, Ho, Wo, c_out)  pooled output
    act_ref  : ((H+3)*Wp, Cmax)    zero-padded, row-flattened activation (VMEM scratch)
    slab_ref : (H*Wp, 9*Cmax)      im2col slab (VMEM scratch)
    """
    # ---- in-kernel zero padding: memset the padded activation scratch ----
    act_ref[...] = jnp.zeros_like(act_ref)

    # Copy the input into the interior of the padded, row-flattened image:
    #   act[(h+1)*Wp + (w+1), c] = x[h, w, c]
    for h in range(H):
        act_ref[pl.ds((h + 1) * Wp + 1, W), :] = x_ref[0, h]

    mask = mask_ref[...]                                    # (H*Wp, 1)

    for l in range(n_layers):
        # ---- im2col: 9 shifted views of the padded image -> (H*Wp, 9*Cmax) ----
        for t in range(9):
            dy, dx = t // 3, t % 3
            slab_ref[:, pl.ds(t * c_max, c_max)] = act_ref[pl.ds(dy * Wp + dx, H * Wp)]

        # ---- one fused MXU matmul (K = 9*Cmax) + bias + ReLU ----
        # TODO(synk): optionally cast slab/weights to bf16 (f32 accumulation) on
        #             v6e/v7x for MXU throughput; kept f32 to match fp32 PyTorch.
        y = jnp.dot(slab_ref[...], w_ref[l], preferred_element_type=jnp.float32)
        y = jnp.maximum(y + b_ref[l], 0.0) * mask           # zero width-pad garbage cols

        # Write back into the interior (row 1, col 1) of the padded scratch. The
        # masked garbage columns land exactly on the padding ring as zeros, so the
        # zero-padding stays valid for the next layer.
        act_ref[pl.ds(Wp + 1, H * Wp), :] = y

    # ---- fused MaxPool2d(kernel_size=2, stride=2) epilogue, straight from VMEM ----
    for ho in range(Ho):
        m = None
        for py in range(2):
            base = (1 + 2 * ho + py) * Wp + 1
            a = act_ref[pl.ds(base, Wo, stride=2)]          # image cols 2*wo     (px=0)
            b = act_ref[pl.ds(base + 1, Wo, stride=2)]      # image cols 2*wo + 1 (px=1)
            mm = jnp.maximum(a, b)
            m = mm if m is None else jnp.maximum(m, mm)
        if c_out < c_max:
            m = m[:, :c_out]
        o_ref[0, ho] = m


# ----------------------------------------------------------------------------
# Jitted wrapper (NCHW in / NCHW out, like the PyTorch module)
# ----------------------------------------------------------------------------
@functools.partial(jax.jit, static_argnames=("out_c",))
def conv_block_forward(x_nchw, w_stack, b_stack, *, out_c):
    N, c_in, H, W = x_nchw.shape
    L, k9, c_max = w_stack.shape
    assert k9 == 9 * c_max
    Wp = W + 2                     # padded row pitch (1 zero column each side)
    Hp = H + 3                     # 1 top + 2 bottom zero rows (keeps shifted views in range)
    Ho, Wo = H // 2, W // 2

    # NCHW -> NHWC (channels on the lane dim), pad channels once to Cmax.
    x = jnp.transpose(x_nchw, (0, 2, 3, 1)).astype(jnp.float32)
    if c_in < c_max:
        x = jnp.pad(x, ((0, 0), (0, 0), (0, 0), (0, c_max - c_in)))

    # 1.0 on valid width columns of the row-flattened (H, Wp) grid, 0.0 on pad cols.
    mask = (jnp.arange(H * Wp, dtype=jnp.int32) % Wp < W)
    mask = mask.astype(jnp.float32).reshape(H * Wp, 1)

    out_nhwc = pl.pallas_call(
        functools.partial(_conv_block_kernel, H=H, W=W, Wp=Wp, Ho=Ho, Wo=Wo,
                          n_layers=L, c_out=out_c, c_max=c_max),
        out_shape=jax.ShapeDtypeStruct((N, Ho, Wo, out_c), jnp.float32),
        grid=(N,),
        in_specs=[
            pl.BlockSpec((1, H, W, c_max), lambda n: (n, 0, 0, 0)),
            pl.BlockSpec((H * Wp, 1), lambda n: (0, 0)),
            pl.BlockSpec((L, 9 * c_max, c_max), lambda n: (0, 0, 0)),
            pl.BlockSpec((L, 1, c_max), lambda n: (0, 0, 0)),
        ],
        out_specs=pl.BlockSpec((1, Ho, Wo, out_c), lambda n: (n, 0, 0, 0)),
        scratch_shapes=[
            pltpu.VMEM((Hp * Wp, c_max), jnp.float32),      # padded activation
            pltpu.VMEM((H * Wp, 9 * c_max), jnp.float32),   # im2col slab
        ],
        compiler_params=pltpu.CompilerParams(
            dimension_semantics=("parallel",),              # batch across TCs (v7x)
        ),
    )(x, mask, w_stack, b_stack)

    return jnp.transpose(out_nhwc, (0, 3, 1, 2))            # NHWC -> NCHW


# ----------------------------------------------------------------------------
# ConvBlock module equivalent
# ----------------------------------------------------------------------------
class ConvBlockPallas:
    def __init__(self, in_c, out_c, n_iteration, key):
        self.in_c, self.out_c, self.n_iteration = in_c, out_c, n_iteration
        self.c_max = max(in_c, out_c)
        self.params = []
        c = in_c
        for _ in range(n_iteration):
            key, kw, kb = jax.random.split(key, 3)
            fan_in = c * 3 * 3
            bound = 1.0 / (fan_in ** 0.5)
            w = jax.random.uniform(kw, (out_c, c, 3, 3), jnp.float32, -bound, bound)
            b = jax.random.uniform(kb, (out_c,), jnp.float32, -bound, bound)
            self.params.append((w, b))
            c = out_c

        # Repack weights ONCE (not per call): OIHW -> tap-major (9*Cmax, Cmax),
        # zero-padded in both channel dims so every layer has identical K/N.
        w_list, b_list = [], []
        for (w, b) in self.params:
            co, ci = w.shape[0], w.shape[1]
            wt = jnp.transpose(w, (2, 3, 1, 0))                          # (ky,kx,ci,co)
            wt = jnp.pad(wt, ((0, 0), (0, 0),
                              (0, self.c_max - ci), (0, self.c_max - co)))
            w_list.append(wt.reshape(9 * self.c_max, self.c_max))
            b_list.append(jnp.pad(b, (0, self.c_max - co)).reshape(1, self.c_max))
        self.w_stack = jnp.stack(w_list)                                 # (L, 9*Cmax, Cmax)
        self.b_stack = jnp.stack(b_list)                                 # (L, 1, Cmax)

    def __call__(self, x_nchw):
        return conv_block_forward(x_nchw, self.w_stack, self.b_stack, out_c=self.out_c)


# Pure-JAX reference (matches PyTorch semantics) for a correctness check.
def _reference(x_nchw, params):
    x = x_nchw
    for w, b in params:
        x = jax.lax.conv_general_dilated(
            x, w, window_strides=(1, 1), padding=((1, 1), (1, 1)),
            dimension_numbers=("NCHW", "OIHW", "NCHW"))
        x = jnp.maximum(x + b[None, :, None, None], 0.0)
    x = jax.lax.reduce_window(x, -jnp.inf, jax.lax.max,
                              (1, 1, 2, 2), (1, 1, 2, 2), "VALID")
    return x


if __name__ == "__main__":
    key = jax.random.PRNGKey(0)
    k_x, k_p = jax.random.split(key)

    N, IN_C, OUT_C, HW, N_ITER = 2, 4, 8, 16, 2
    x = jax.random.normal(k_x, (N, IN_C, HW, HW), jnp.float32)   # NCHW, like PyTorch

    block = ConvBlockPallas(IN_C, OUT_C, N_ITER, k_p)
    out = jax.block_until_ready(block(x))

    assert out.shape == (N, OUT_C, HW // 2, HW // 2), out.shape

    ref = jax.block_until_ready(_reference(x, block.params))
    assert jnp.allclose(out, ref, atol=1e-3, rtol=1e-3), float(jnp.max(jnp.abs(out - ref)))

    print("KERNEL_OK")
</pallas_src>

<mosaic_0001>
module attributes {stable_mosaic.version = 11 : i64} {
  func.func @_conv_block_kernel(%arg0: i32, %arg1: memref<1x16x16x8xf32, #tpu.memory_space<vmem>>, %arg2: memref<288x1xf32, #tpu.memory_space<vmem>>, %arg3: memref<2x72x8xf32, #tpu.memory_space<vmem>>, %arg4: memref<2x1x8xf32, #tpu.memory_space<vmem>>, %arg5: memref<1x8x8x8xf32, #tpu.memory_space<vmem>>, %arg6: memref<342x8xf32, #tpu.memory_space<vmem>>, %arg7: memref<288x72xf32, #tpu.memory_space<vmem>>) attributes {dimension_semantics = [#tpu.dimension_semantics<parallel>], iteration_bounds = array<i64: 2>, scalar_prefetch = 0 : i64, scratch_operands = 2 : i64, tpu.core_type = #tpu.core_type<tc>, window_params = [{transform_indices = @transform_0, window_bounds = array<i64: 1, 16, 16, 8>}, {pipeline_mode = #tpu.pipeline_mode<synchronous>, transform_indices = @transform_1, window_bounds = array<i64: 288, 1>}, {pipeline_mode = #tpu.pipeline_mode<synchronous>, transform_indices = @transform_2, window_bounds = array<i64: 2, 72, 8>}, {pipeline_mode = #tpu.pipeline_mode<synchronous>, transform_indices = @transform_3, window_bounds = array<i64: 2, 1, 8>}, {transform_indices = @transform_4, window_bounds = array<i64: 1, 8, 8, 8>}]} {
    %cst = arith.constant 0.000000e+00 : f32
    %0 = vector.broadcast %cst : f32 to vector<342x8xf32>
    %c0 = arith.constant 0 : index
    %c0_0 = arith.constant 0 : index
    %1 = vector.load %arg6[%c0, %c0_0] : memref<342x8xf32, #tpu.memory_space<vmem>>, vector<342x8xf32>
    tpu.vector_store %arg6[%c0, %c0_0], %0 {strides = array<i32>} : memref<342x8xf32, #tpu.memory_space<vmem>>, vector<342x8xf32>,
    %c0_1 = arith.constant 0 : index
    %c0_2 = arith.constant 0 : index
    %c0_3 = arith.constant 0 : index
    %c0_4 = arith.constant 0 : index
    %2 = vector.load %arg1[%c0_1, %c0_2, %c0_3, %c0_4] : memref<1x16x16x8xf32, #tpu.memory_space<vmem>>, vector<1x1x16x8xf32>
    %3 = vector.shape_cast %2 : vector<1x1x16x8xf32> to vector<16x8xf32>
    %c19 = arith.constant 19 : index
    %c0_5 = arith.constant 0 : index
    %4 = vector.load %arg6[%c19, %c0_5] : memref<342x8xf32, #tpu.memory_space<vmem>>, vector<16x8xf32>
    tpu.vector_store %arg6[%c19, %c0_5], %3 {strides = array<i32>} : memref<342x8xf32, #tpu.memory_space<vmem>>, vector<16x8xf32>,
    %c0_6 = arith.constant 0 : index
    %c1 = arith.constant 1 : index
    %c0_7 = arith.constant 0 : index
    %c0_8 = arith.constant 0 : index
    %5 = vector.load %arg1[%c0_6, %c1, %c0_7, %c0_8] : memref<1x16x16x8xf32, #tpu.memory_space<vmem>>, vector<1x1x16x8xf32>
    %6 = vector.shape_cast %5 : vector<1x1x16x8xf32> to vector<16x8xf32>
    %c37 = arith.constant 37 : index
    %c0_9 = arith.constant 0 : index
    %7 = vector.load %arg6[%c37, %c0_9] : memref<342x8xf32, #tpu.memory_space<vmem>>, vector<16x8xf32>
    tpu.vector_store %arg6[%c37, %c0_9], %6 {strides = array<i32>} : memref<342x8xf32, #tpu.memory_space<vmem>>, vector<16x8xf32>,
    %c0_10 = arith.constant 0 : index
    %c2 = arith.constant 2 : index
    %c0_11 = arith.constant 0 : index
    %c0_12 = arith.constant 0 : index
    %8 = vector.load %arg1[%c0_10, %c2, %c0_11, %c0_12] : memref<1x16x16x8xf32, #tpu.memory_space<vmem>>, vector<1x1x16x8xf32>
    %9 = vector.shape_cast %8 : vector<1x1x16x8xf32> to vector<16x8xf32>
    %c55 = arith.constant 55 : index
    %c0_13 = arith.constant 0 : index
    %10 = vector.load %arg6[%c55, %c0_13] : memref<342x8xf32, #tpu.memory_space<vmem>>, vector<16x8xf32>
    tpu.vector_store %arg6[%c55, %c0_13], %9 {strides = array<i32>} : memref<342x8xf32, #tpu.memory_space<vmem>>, vector<16x8xf32>,
    %c0_14 = arith.constant 0 : index
    %c3 = arith.constant 3 : index
    %c0_15 = arith.constant 0 : index
    %c0_16 = arith.constant 0 : index
    %11 = vector.load %arg1[%c0_14, %c3, %c0_15, %c0_16] : memref<1x16x16x8xf32, #tpu.memory_space<vmem>>, vector<1x1x16x8xf32>
    %12 = vector.shape_cast %11 : vector<1x1x16x8xf32> to vector<16x8xf32>
    %c73 = arith.constant 73 : index
    %c0_17 = arith.constant 0 : index
    %13 = vector.load %arg6[%c73, %c0_17] : memref<342x8xf32, #tpu.memory_space<vmem>>, vector<16x8xf32>
    tpu.vector_store %arg6[%c73, %c0_17], %12 {strides = array<i32>} : memref<342x8xf32, #tpu.memory_space<vmem>>, vector<16x8xf32>,
    %c0_18 = arith.constant 0 : index
    %c4 = arith.constant 4 : index
    %c0_19 = arith.constant 0 : index
    %c0_20 = arith.constant 0 : index
    %14 = vector.load %arg1[%c0_18, %c4, %c0_19, %c0_20] : memref<1x16x16x8xf32, #tpu.memory_space<vmem>>, vector<1x1x16x8xf32>
    %15 = vector.shape_cast %14 : vector<1x1x16x8xf32> to vector<16x8xf32>
    %c91 = arith.constant 91 : index
    %c0_21 = arith.constant 0 : index
    %16 = vector.load %arg6[%c91, %c0_21] : memref<342x8xf32, #tpu.memory_space<vmem>>, vector<16x8xf32>
    tpu.vector_store %arg6[%c91, %c0_21], %15 {strides = array<i32>} : memref<342x8xf32, #tpu.memory_space<vmem>>, vector<16x8xf32>,
    %c0_22 = arith.constant 0 : index
    %c5 = arith.constant 5 : index
    %c0_23 = arith.constant 0 : index
    %c0_24 = arith.constant 0 : index
    %17 = vector.load %arg1[%c0_22, %c5, %c0_23, %c0_24] : memref<1x16x16x8xf32, #tpu.memory_space<vmem>>, vector<1x1x16x8xf32>
    %18 = vector.shape_cast %17 : vector<1x1x16x8xf32> to vector<16x8xf32>
    %c109 = arith.constant 109 : index
    %c0_25 = arith.constant 0 : index
    %19 = vector.load %arg6[%c109, %c0_25] : memref<342x8xf32, #tpu.memory_space<vmem>>, vector<16x8xf32>
    tpu.vector_store %arg6[%c109, %c0_25], %18 {strides = array<i32>} : memref<342x8xf32, #tpu.memory_space<vmem>>, vector<16x8xf32>,
    %c0_26 = arith.constant 0 : index
    %c6 = arith.constant 6 : index
    %c0_27 = arith.constant 0 : index
    %c0_28 = arith.constant 0 : index
    %20 = vector.load %arg1[%c0_26, %c6, %c0_27, %c0_28] : memref<1x16x16x8xf32, #tpu.memory_space<vmem>>, vector<1x1x16x8xf32>
    %21 = vector.shape_cast %20 : vector<1x1x16x8xf32> to vector<16x8xf32>
    %c127 = arith.constant 127 : index
    %c0_29 = arith.constant 0 : index
    %22 = vector.load %arg6[%c127, %c0_29] : memref<342x8xf32, #tpu.memory_space<vmem>>, vector<16x8xf32>
    tpu.vector_store %arg6[%c127, %c0_29], %21 {strides = array<i32>} : memref<342x8xf32, #tpu.memory_space<vmem>>, vector<16x8xf32>,
    %c0_30 = arith.constant 0 : index
    %c7 = arith.constant 7 : index
    %c0_31 = arith.constant 0 : index
    %c0_32 = arith.constant 0 : index
    %23 = vector.load %arg1[%c0_30, %c7, %c0_31, %c0_32] : memref<1x16x16x8xf32, #tpu.memory_space<vmem>>, vector<1x1x16x8xf32>
    %24 = vector.shape_cast %23 : vector<1x1x16x8xf32> to vector<16x8xf32>
    %c145 = arith.constant 145 : index
    %c0_33 = arith.constant 0 : index
    %25 = vector.load %arg6[%c145, %c0_33] : memref<342x8xf32, #tpu.memory_space<vmem>>, vector<16x8xf32>
    tpu.vector_store %arg6[%c145, %c0_33], %24 {strides = array<i32>} : memref<342x8xf32, #tpu.memory_space<vmem>>, vector<16x8xf32>,
    %c0_34 = arith.constant 0 : index
    %c8 = arith.constant 8 : index
    %c0_35 = arith.constant 0 : index
    %c0_36 = arith.constant 0 : index
    %26 = vector.load %arg1[%c0_34, %c8, %c0_35, %c0_36] : memref<1x16x16x8xf32, #tpu.memory_space<vmem>>, vector<1x1x16x8xf32>
    %27 = vector.shape_cast %26 : vector<1x1x16x8xf32> to vector<16x8xf32>
    %c163 = arith.constant 163 : index
    %c0_37 = arith.constant 0 : index
    %28 = vector.load %arg6[%c163, %c0_37] : memref<342x8xf32, #tpu.memory_space<vmem>>, vector<16x8xf32>
    tpu.vector_store %arg6[%c163, %c0_37], %27 {strides = array<i32>} : memref<342x8xf32, #tpu.memory_space<vmem>>, vector<16x8xf32>,
    %c0_38 = arith.constant 0 : index
    %c9 = arith.constant 9 : index
    %c0_39 = arith.constant 0 : index
    %c0_40 = arith.constant 0 : index
    %29 = vector.load %arg1[%c0_38, %c9, %c0_39, %c0_40] : memref<1x16x16x8xf32, #tpu.memory_space<vmem>>, vector<1x1x16x8xf32>
    %30 = vector.shape_cast %29 : vector<1x1x16x8xf32> to vector<16x8xf32>
    %c181 = arith.constant 181 : index
    %c0_41 = arith.constant 0 : index
    %31 = vector.load %arg6[%c181, %c0_41] : memref<342x8xf32, #tpu.memory_space<vmem>>, vector<16x8xf32>
    tpu.vector_store %arg6[%c181, %c0_41], %30 {strides = array<i32>} : memref<342x8xf32, #tpu.memory_space<vmem>>, vector<16x8xf32>,
    %c0_42 = arith.constant 0 : index
    %c10 = arith.constant 10 : index
    %c0_43 = arith.constant 0 : index
    %c0_44 = arith.constant 0 : index
    %32 = vector.load %arg1[%c0_42, %c10, %c0_43, %c0_44] : memref<1x16x16x8xf32, #tpu.memory_space<vmem>>, vector<1x1x16x8xf32>
    %33 = vector.shape_cast %32 : vector<1x1x16x8xf32> to vector<16x8xf32>
    %c199 = arith.constant 199 : index
    %c0_45 = arith.constant 0 : index
    %34 = vector.load %arg6[%c199, %c0_45] : memref<342x8xf32, #tpu.memory_space<vmem>>, vector<16x8xf32>
    tpu.vector_store %arg6[%c199, %c0_45], %33 {strides = array<i32>} : memref<342x8xf32, #tpu.memory_space<vmem>>, vector<16x8xf32>,
    %c0_46 = arith.constant 0 : index
    %c11 = arith.constant 11 : index
    %c0_47 = arith.constant 0 : index
    %c0_48 = arith.constant 0 : index
    %35 = vector.load %arg1[%c0_46, %c11, %c0_47, %c0_48] : memref<1x16x16x8xf32, #tpu.memory_space<vmem>>, vector<1x1x16x8xf32>
    %36 = vector.shape_cast %35 : vector<1x1x16x8xf32> to vector<16x8xf32>
    %c217 = arith.constant 217 : index
    %c0_49 = arith.constant 0 : index
    %37 = vector.load %arg6[%c217, %c0_49] : memref<342x8xf32, #tpu.memory_space<vmem>>, vector<16x8xf32>
    tpu.vector_store %arg6[%c217, %c0_49], %36 {strides = array<i32>} : memref<342x8xf32, #tpu.memory_space<vmem>>, vector<16x8xf32>,
    %c0_50 = arith.constant 0 : index
    %c12 = arith.constant 12 : index
    %c0_51 = arith.constant 0 : index
    %c0_52 = arith.constant 0 : index
    %38 = vector.load %arg1[%c0_50, %c12, %c0_51, %c0_52] : memref<1x16x16x8xf32, #tpu.memory_space<vmem>>, vector<1x1x16x8xf32>
    %39 = vector.shape_cast %38 : vector<1x1x16x8xf32> to vector<16x8xf32>
    %c235 = arith.constant 235 : index
    %c0_53 = arith.constant 0 : index
    %40 = vector.load %arg6[%c235, %c0_53] : memref<342x8xf32, #tpu.memory_space<vmem>>, vector<16x8xf32>
    tpu.vector_store %arg6[%c235, %c0_53], %39 {strides = array<i32>} : memref<342x8xf32, #tpu.memory_space<vmem>>, vector<16x8xf32>,
    %c0_54 = arith.constant 0 : index
    %c13 = arith.constant 13 : index
    %c0_55 = arith.constant 0 : index
    %c0_56 = arith.constant 0 : index
    %41 = vector.load %arg1[%c0_54, %c13, %c0_55, %c0_56] : memref<1x16x16x8xf32, #tpu.memory_space<vmem>>, vector<1x1x16x8xf32>
    %42 = vector.shape_cast %41 : vector<1x1x16x8xf32> to vector<16x8xf32>
    %c253 = arith.constant 253 : index
    %c0_57 = arith.constant 0 : index
    %43 = vector.load %arg6[%c253, %c0_57] : memref<342x8xf32, #tpu.memory_space<vmem>>, vector<16x8xf32>
    tpu.vector_store %arg6[%c253, %c0_57], %42 {strides = array<i32>} : memref<342x8xf32, #tpu.memory_space<vmem>>, vector<16x8xf32>,
    %c0_58 = arith.constant 0 : index
    %c14 = arith.constant 14 : index
    %c0_59 = arith.constant 0 : index
    %c0_60 = arith.constant 0 : index
    %44 = vector.load %arg1[%c0_58, %c14, %c0_59, %c0_60] : memref<1x16x16x8xf32, #tpu.memory_space<vmem>>, vector<1x1x16x8xf32>
    %45 = vector.shape_cast %44 : vector<1x1x16x8xf32> to vector<16x8xf32>
    %c271 = arith.constant 271 : index
    %c0_61 = arith.constant 0 : index
    %46 = vector.load %arg6[%c271, %c0_61] : memref<342x8xf32, #tpu.memory_space<vmem>>, vector<16x8xf32>
    tpu.vector_store %arg6[%c271, %c0_61], %45 {strides = array<i32>} : memref<342x8xf32, #tpu.memory_space<vmem>>, vector<16x8xf32>,
    %c0_62 = arith.constant 0 : index
    %c15 = arith.constant 15 : index
    %c0_63 = arith.constant 0 : index
    %c0_64 = arith.constant 0 : index
    %47 = vector.load %arg1[%c0_62, %c15, %c0_63, %c0_64] : memref<1x16x16x8xf32, #tpu.memory_space<vmem>>, vector<1x1x16x8xf32>
    %48 = vector.shape_cast %47 : vector<1x1x16x8xf32> to vector<16x8xf32>
    %c289 = arith.constant 289 : index
    %c0_65 = arith.constant 0 : index
    %49 = vector.load %arg6[%c289, %c0_65] : memref<342x8xf32, #tpu.memory_space<vmem>>, vector<16x8xf32>
    tpu.vector_store %arg6[%c289, %c0_65], %48 {strides = array<i32>} : memref<342x8xf32, #tpu.memory_space<vmem>>, vector<16x8xf32>,
    %c0_66 = arith.constant 0 : index
    %c0_67 = arith.constant 0 : index
    %50 = vector.load %arg2[%c0_66, %c0_67] : memref<288x1xf32, #tpu.memory_space<vmem>>, vector<288x1xf32>
    %c0_68 = arith.constant 0 : index
    %c0_69 = arith.constant 0 : index
    %51 = vector.load %arg6[%c0_68, %c0_69] : memref<342x8xf32, #tpu.memory_space<vmem>>, vector<288x8xf32>
    %c0_70 = arith.constant 0 : index
    %c0_71 = arith.constant 0 : index
    %52 = vector.load %arg7[%c0_70, %c0_71] : memref<288x72xf32, #tpu.memory_space<vmem>>, vector<288x8xf32>
    tpu.vector_store %arg7[%c0_70, %c0_71], %51 {strides = array<i32>} : memref<288x72xf32, #tpu.memory_space<vmem>>, vector<288x8xf32>,
    %c1_72 = arith.constant 1 : index
    %c0_73 = arith.constant 0 : index
    %53 = vector.load %arg6[%c1_72, %c0_73] : memref<342x8xf32, #tpu.memory_space<vmem>>, vector<288x8xf32>
    %c0_74 = arith.constant 0 : index
    %c8_75 = arith.constant 8 : index
    %54 = vector.load %arg7[%c0_74, %c8_75] : memref<288x72xf32, #tpu.memory_space<vmem>>, vector<288x8xf32>
    tpu.vector_store %arg7[%c0_74, %c8_75], %53 {strides = array<i32>} : memref<288x72xf32, #tpu.memory_space<vmem>>, vector<288x8xf32>,
    %c2_76 = arith.constant 2 : index
    %c0_77 = arith.constant 0 : index
    %55 = vector.load %arg6[%c2_76, %c0_77] : memref<342x8xf32, #tpu.memory_space<vmem>>, vector<288x8xf32>
    %c0_78 = arith.constant 0 : index
    %c16 = arith.constant 16 : index
    %56 = vector.load %arg7[%c0_78, %c16] : memref<288x72xf32, #tpu.memory_space<vmem>>, vector<288x8xf32>
    tpu.vector_store %arg7[%c0_78, %c16], %55 {strides = array<i32>} : memref<288x72xf32, #tpu.memory_space<vmem>>, vector<288x8xf32>,
    %c18 = arith.constant 18 : index
    %c0_79 = arith.constant 0 : index
    %57 = vector.load %arg6[%c18, %c0_79] : memref<342x8xf32, #tpu.memory_space<vmem>>, vector<288x8xf32>
    %c0_80 = arith.constant 0 : index
    %c24 = arith.constant 24 : index
    %58 = vector.load %arg7[%c0_80, %c24] : memref<288x72xf32, #tpu.memory_space<vmem>>, vector<288x8xf32>
    tpu.vector_store %arg7[%c0_80, %c24], %57 {strides = array<i32>} : memref<288x72xf32, #tpu.memory_space<vmem>>, vector<288x8xf32>,
    %c19_81 = arith.constant 19 : index
    %c0_82 = arith.constant 0 : index
    %59 = vector.load %arg6[%c19_81, %c0_82] : memref<342x8xf32, #tpu.memory_space<vmem>>, vector<288x8xf32>
    %c0_83 = arith.constant 0 : index
    %c32 = arith.constant 32 : index
    %60 = vector.load %arg7[%c0_83, %c32] : memref<288x72xf32, #tpu.memory_space<vmem>>, vector<288x8xf32>
    tpu.vector_store %arg7[%c0_83, %c32], %59 {strides = array<i32>} : memref<288x72xf32, #tpu.memory_space<vmem>>, vector<288x8xf32>,
    %c20 = arith.constant 20 : index
    %c0_84 = arith.constant 0 : index
    %61 = vector.load %arg6[%c20, %c0_84] : memref<342x8xf32, #tpu.memory_space<vmem>>, vector<288x8xf32>
    %c0_85 = arith.constant 0 : index
    %c40 = arith.constant 40 : index
    %62 = vector.load %arg7[%c0_85, %c40] : memref<288x72xf32, #tpu.memory_space<vmem>>, vector<288x8xf32>
    tpu.vector_store %arg7[%c0_85, %c40], %61 {strides = array<i32>} : memref<288x72xf32, #tpu.memory_space<vmem>>, vector<288x8xf32>,
    %c36 = arith.constant 36 : index
    %c0_86 = arith.constant 0 : index
    %63 = vector.load %arg6[%c36, %c0_86] : memref<342x8xf32, #tpu.memory_space<vmem>>, vector<288x8xf32>
    %c0_87 = arith.constant 0 : index
    %c48 = arith.constant 48 : index
    %64 = vector.load %arg7[%c0_87, %c48] : memref<288x72xf32, #tpu.memory_space<vmem>>, vector<288x8xf32>
    tpu.vector_store %arg7[%c0_87, %c48], %63 {strides = array<i32>} : memref<288x72xf32, #tpu.memory_space<vmem>>, vector<288x8xf32>,
    %c37_88 = arith.constant 37 : index
    %c0_89 = arith.constant 0 : index
    %65 = vector.load %arg6[%c37_88, %c0_89] : memref<342x8xf32, #tpu.memory_space<vmem>>, vector<288x8xf32>
    %c0_90 = arith.constant 0 : index
    %c56 = arith.constant 56 : index
    %66 = vector.load %arg7[%c0_90, %c56] : memref<288x72xf32, #tpu.memory_space<vmem>>, vector<288x8xf32>
    tpu.vector_store %arg7[%c0_90, %c56], %65 {strides = array<i32>} : memref<288x72xf32, #tpu.memory_space<vmem>>, vector<288x8xf32>,
    %c38 = arith.constant 38 : index
    %c0_91 = arith.constant 0 : index
    %67 = vector.load %arg6[%c38, %c0_91] : memref<342x8xf32, #tpu.memory_space<vmem>>, vector<288x8xf32>
    %c0_92 = arith.constant 0 : index
    %c64 = arith.constant 64 : index
    %68 = vector.load %arg7[%c0_92, %c64] : memref<288x72xf32, #tpu.memory_space<vmem>>, vector<288x8xf32>
    tpu.vector_store %arg7[%c0_92, %c64], %67 {strides = array<i32>} : memref<288x72xf32, #tpu.memory_space<vmem>>, vector<288x8xf32>,
    %c0_93 = arith.constant 0 : index
    %c0_94 = arith.constant 0 : index
    %69 = vector.load %arg7[%c0_93, %c0_94] : memref<288x72xf32, #tpu.memory_space<vmem>>, vector<288x72xf32>
    %c0_95 = arith.constant 0 : index
    %c0_96 = arith.constant 0 : index
    %c0_97 = arith.constant 0 : index
    %70 = vector.load %arg3[%c0_95, %c0_96, %c0_97] : memref<2x72x8xf32, #tpu.memory_space<vmem>>, vector<1x72x8xf32>
    %71 = vector.shape_cast %70 : vector<1x72x8xf32> to vector<72x8xf32>
    %cst_98 = arith.constant dense<0.000000e+00> : vector<288x8xf32>
    %72 = tpu.matmul %69, %71, %cst_98 {dimension_numbers = #tpu.dot_dimension_numbers<[1], [0], [0], [1], [0, 0, 1, 1], [], []>} : vector<288x72xf32>, vector<72x8xf32>, vector<288x8xf32> -> vector<288x8xf32>
    %c0_99 = arith.constant 0 : index
    %c0_100 = arith.constant 0 : index
    %c0_101 = arith.constant 0 : index
    %73 = vector.load %arg4[%c0_99, %c0_100, %c0_101] : memref<2x1x8xf32, #tpu.memory_space<vmem>>, vector<1x1x8xf32>
    %74 = vector.shape_cast %73 : vector<1x1x8xf32> to vector<1x8xf32>
    %75 = vector.broadcast %74 : vector<1x8xf32> to vector<288x8xf32>
    %76 = arith.addf %72, %75 : vector<288x8xf32>
    %cst_102 = arith.constant 0.000000e+00 : f32
    %77 = vector.broadcast %cst_102 : f32 to vector<288x8xf32>
    %78 = arith.maximumf %76, %77 : vector<288x8xf32>
    %79 = vector.broadcast %50 : vector<288x1xf32> to vector<288x8xf32>
    %80 = arith.mulf %78, %79 : vector<288x8xf32>
    %c19_103 = arith.constant 19 : index
    %c0_104 = arith.constant 0 : index
    %81 = vector.load %arg6[%c19_103, %c0_104] : memref<342x8xf32, #tpu.memory_space<vmem>>, vector<288x8xf32>
    tpu.vector_store %arg6[%c19_103, %c0_104], %80 {strides = array<i32>} : memref<342x8xf32, #tpu.memory_space<vmem>>, vector<288x8xf32>,
    %c0_105 = arith.constant 0 : index
    %c0_106 = arith.constant 0 : index
    %82 = vector.load %arg6[%c0_105, %c0_106] : memref<342x8xf32, #tpu.memory_space<vmem>>, vector<288x8xf32>
    %c0_107 = arith.constant 0 : index
    %c0_108 = arith.constant 0 : index
    %83 = vector.load %arg7[%c0_107, %c0_108] : memref<288x72xf32, #tpu.memory_space<vmem>>, vector<288x8xf32>
    tpu.vector_store %arg7[%c0_107, %c0_108], %82 {strides = array<i32>} : memref<288x72xf32, #tpu.memory_space<vmem>>, vector<288x8xf32>,
    %c1_109 = arith.constant 1 : index
    %c0_110 = arith.constant 0 : index
    %84 = vector.load %arg6[%c1_109, %c0_110] : memref<342x8xf32, #tpu.memory_space<vmem>>, vector<288x8xf32>
    %c0_111 = arith.constant 0 : index
    %c8_112 = arith.constant 8 : index
    %85 = vector.load %arg7[%c0_111, %c8_112] : memref<288x72xf32, #tpu.memory_space<vmem>>, vector<288x8xf32>
    tpu.vector_store %arg7[%c0_111, %c8_112], %84 {strides = array<i32>} : memref<288x72xf32, #tpu.memory_space<vmem>>, vector<288x8xf32>,
    %c2_113 = arith.constant 2 : index
    %c0_114 = arith.constant 0 : index
    %86 = vector.load %arg6[%c2_113, %c0_114] : memref<342x8xf32, #tpu.memory_space<vmem>>, vector<288x8xf32>
    %c0_115 = arith.constant 0 : index
    %c16_116 = arith.constant 16 : index
    %87 = vector.load %arg7[%c0_115, %c16_116] : memref<288x72xf32, #tpu.memory_space<vmem>>, vector<288x8xf32>
    tpu.vector_store %arg7[%c0_115, %c16_116], %86 {strides = array<i32>} : memref<288x72xf32, #tpu.memory_space<vmem>>, vector<288x8xf32>,
    %c18_117 = arith.constant 18 : index
    %c0_118 = arith.constant 0 : index
    %88 = vector.load %arg6[%c18_117, %c0_118] : memref<342x8xf32, #tpu.memory_space<vmem>>, vector<288x8xf32>
    %c0_119 = arith.constant 0 : index
    %c24_120 = arith.constant 24 : index
    %89 = vector.load %arg7[%c0_119, %c24_120] : memref<288x72xf32, #tpu.memory_space<vmem>>, vector<288x8xf32>
    tpu.vector_store %arg7[%c0_119, %c24_120], %88 {strides = array<i32>} : memref<288x72xf32, #tpu.memory_space<vmem>>, vector<288x8xf32>,
    %c19_121 = arith.constant 19 : index
    %c0_122 = arith.constant 0 : index
    %90 = vector.load %arg6[%c19_121, %c0_122] : memref<342x8xf32, #tpu.memory_space<vmem>>, vector<288x8xf32>
    %c0_123 = arith.constant 0 : index
    %c32_124 = arith.constant 32 : index
    %91 = vector.load %arg7[%c0_123, %c32_124] : memref<288x72xf32, #tpu.memory_space<vmem>>, vector<288x8xf32>
    tpu.vector_store %arg7[%c0_123, %c32_124], %90 {strides = array<i32>} : memref<288x72xf32, #tpu.memory_space<vmem>>, vector<288x8xf32>,
    %c20_125 = arith.constant 20 : index
    %c0_126 = arith.constant 0 : index
    %92 = vector.load %arg6[%c20_125, %c0_126] : memref<342x8xf32, #tpu.memory_space<vmem>>, vector<288x8xf32>
    %c0_127 = arith.constant 0 : index
    %c40_128 = arith.constant 40 : index
    %93 = vector.load %arg7[%c0_127, %c40_128] : memref<288x72xf32, #tpu.memory_space<vmem>>, vector<288x8xf32>
    tpu.vector_store %arg7[%c0_127, %c40_128], %92 {strides = array<i32>} : memref<288x72xf32, #tpu.memory_space<vmem>>, vector<288x8xf32>,
    %c36_129 = arith.constant 36 : index
    %c0_130 = arith.constant 0 : index
    %94 = vector.load %arg6[%c36_129, %c0_130] : memref<342x8xf32, #tpu.memory_space<vmem>>, vector<288x8xf32>
    %c0_131 = arith.constant 0 : index
    %c48_132 = arith.constant 48 : index
    %95 = vector.load %arg7[%c0_131, %c48_132] : memref<288x72xf32, #tpu.memory_space<vmem>>, vector<288x8xf32>
    tpu.vector_store %arg7[%c0_131, %c48_132], %94 {strides = array<i32>} : memref<288x72xf32, #tpu.memory_space<vmem>>, vector<288x8xf32>,
    %c37_133 = arith.constant 37 : index
    %c0_134 = arith.constant 0 : index
    %96 = vector.load %arg6[%c37_133, %c0_134] : memref<342x8xf32, #tpu.memory_space<vmem>>, vector<288x8xf32>
    %c0_135 = arith.constant 0 : index
    %c56_136 = arith.constant 56 : index
    %97 = vector.load %arg7[%c0_135, %c56_136] : memref<288x72xf32, #tpu.memory_space<vmem>>, vector<288x8xf32>
    tpu.vector_store %arg7[%c0_135, %c56_136], %96 {strides = array<i32>} : memref<288x72xf32, #tpu.memory_space<vmem>>, vector<288x8xf32>,
    %c38_137 = arith.constant 38 : index
    %c0_138 = arith.constant 0 : index
    %98 = vector.load %arg6[%c38_137, %c0_138] : memref<342x8xf32, #tpu.memory_space<vmem>>, vector<288x8xf32>
    %c0_139 = arith.constant 0 : index
    %c64_140 = arith.constant 64 : index
    %99 = vector.load %arg7[%c0_139, %c64_140] : memref<288x72xf32, #tpu.memory_space<vmem>>, vector<288x8xf32>
    tpu.vector_store %arg7[%c0_139, %c64_140], %98 {strides = array<i32>} : memref<288x72xf32, #tpu.memory_space<vmem>>, vector<288x8xf32>,
    %c0_141 = arith.constant 0 : index
    %c0_142 = arith.constant 0 : index
    %100 = vector.load %arg7[%c0_141, %c0_142] : memref<288x72xf32, #tpu.memory_space<vmem>>, vector<288x72xf32>
    %c1_143 = arith.constant 1 : index
    %c0_144 = arith.constant 0 : index
    %c0_145 = arith.constant 0 : index
    %101 = vector.load %arg3[%c1_143, %c0_144, %c0_145] : memref<2x72x8xf32, #tpu.memory_space<vmem>>, vector<1x72x8xf32>
    %102 = vector.shape_cast %101 : vector<1x72x8xf32> to vector<72x8xf32>
    %cst_146 = arith.constant dense<0.000000e+00> : vector<288x8xf32>
    %103 = tpu.matmul %100, %102, %cst_146 {dimension_numbers = #tpu.dot_dimension_numbers<[1], [0], [0], [1], [0, 0, 1, 1], [], []>} : vector<288x72xf32>, vector<72x8xf32>, vector<288x8xf32> -> vector<288x8xf32>
    %c1_147 = arith.constant 1 : index
    %c0_148 = arith.constant 0 : index
    %c0_149 = arith.constant 0 : index
    %104 = vector.load %arg4[%c1_147, %c0_148, %c0_149] : memref<2x1x8xf32, #tpu.memory_space<vmem>>, vector<1x1x8xf32>
    %105 = vector.shape_cast %104 : vector<1x1x8xf32> to vector<1x8xf32>
    %106 = vector.broadcast %105 : vector<1x8xf32> to vector<288x8xf32>
    %107 = arith.addf %103, %106 : vector<288x8xf32>
    %cst_150 = arith.constant 0.000000e+00 : f32
    %108 = vector.broadcast %cst_150 : f32 to vector<288x8xf32>
    %109 = arith.maximumf %107, %108 : vector<288x8xf32>
    %110 = vector.broadcast %50 : vector<288x1xf32> to vector<288x8xf32>
    %111 = arith.mulf %109, %110 : vector<288x8xf32>
    %c19_151 = arith.constant 19 : index
    %c0_152 = arith.constant 0 : index
    %112 = vector.load %arg6[%c19_151, %c0_152] : memref<342x8xf32, #tpu.memory_space<vmem>>, vector<288x8xf32>
    tpu.vector_store %arg6[%c19_151, %c0_152], %111 {strides = array<i32>} : memref<342x8xf32, #tpu.memory_space<vmem>>, vector<288x8xf32>,
    %c19_153 = arith.constant 19 : index
    %c0_154 = arith.constant 0 : index
    %113 = tpu.strided_load %arg6[%c19_153, %c0_154] {strides = array<i32: 2, 1>} : memref<342x8xf32, #tpu.memory_space<vmem>>, vector<8x8xf32>
    %c20_155 = arith.constant 20 : index
    %c0_156 = arith.constant 0 : index
    %114 = tpu.strided_load %arg6[%c20_155, %c0_156] {strides = array<i32: 2, 1>} : memref<342x8xf32, #tpu.memory_space<vmem>>, vector<8x8xf32>
    %115 = arith.maximumf %113, %114 : vector<8x8xf32>
    %c37_157 = arith.constant 37 : index
    %c0_158 = arith.constant 0 : index
    %116 = tpu.strided_load %arg6[%c37_157, %c0_158] {strides = array<i32: 2, 1>} : memref<342x8xf32, #tpu.memory_space<vmem>>, vector<8x8xf32>
    %c38_159 = arith.constant 38 : index
    %c0_160 = arith.constant 0 : index
    %117 = tpu.strided_load %arg6[%c38_159, %c0_160] {strides = array<i32: 2, 1>} : memref<342x8xf32, #tpu.memory_space<vmem>>, vector<8x8xf32>
    %118 = arith.maximumf %116, %117 : vector<8x8xf32>
    %119 = arith.maximumf %115, %118 : vector<8x8xf32>
    %c0_161 = arith.constant 0 : index
    %c0_162 = arith.constant 0 : index
    %c0_163 = arith.constant 0 : index
    %c0_164 = arith.constant 0 : index
    %120 = vector.load %arg5[%c0_161, %c0_162, %c0_163, %c0_164] : memref<1x8x8x8xf32, #tpu.memory_space<vmem>>, vector<1x1x8x8xf32>
    %121 = vector.shape_cast %120 : vector<1x1x8x8xf32> to vector<8x8xf32>
    %122 = vector.shape_cast %119 : vector<8x8xf32> to vector<1x1x8x8xf32>
    tpu.vector_store %arg5[%c0_161, %c0_162, %c0_163, %c0_164], %122 {strides = array<i32>} : memref<1x8x8x8xf32, #tpu.memory_space<vmem>>, vector<1x1x8x8xf32>,
    %c55_165 = arith.constant 55 : index
    %c0_166 = arith.constant 0 : index
    %123 = tpu.strided_load %arg6[%c55_165, %c0_166] {strides = array<i32: 2, 1>} : memref<342x8xf32, #tpu.memory_space<vmem>>, vector<8x8xf32>
    %c56_167 = arith.constant 56 : index
    %c0_168 = arith.constant 0 : index
    %124 = tpu.strided_load %arg6[%c56_167, %c0_168] {strides = array<i32: 2, 1>} : memref<342x8xf32, #tpu.memory_space<vmem>>, vector<8x8xf32>
    %125 = arith.maximumf %123, %124 : vector<8x8xf32>
    %c73_169 = arith.constant 73 : index
    %c0_170 = arith.constant 0 : index
    %126 = tpu.strided_load %arg6[%c73_169, %c0_170] {strides = array<i32: 2, 1>} : memref<342x8xf32, #tpu.memory_space<vmem>>, vector<8x8xf32>
    %c74 = arith.constant 74 : index
    %c0_171 = arith.constant 0 : index
    %127 = tpu.strided_load %arg6[%c74, %c0_171] {strides = array<i32: 2, 1>} : memref<342x8xf32, #tpu.memory_space<vmem>>, vector<8x8xf32>
    %128 = arith.maximumf %126, %127 : vector<8x8xf32>
    %129 = arith.maximumf %125, %128 : vector<8x8xf32>
    %c0_172 = arith.constant 0 : index
    %c1_173 = arith.constant 1 : index
    %c0_174 = arith.constant 0 : index
    %c0_175 = arith.constant 0 : index
    %130 = vector.load %arg5[%c0_172, %c1_173, %c0_174, %c0_175] : memref<1x8x8x8xf32, #tpu.memory_space<vmem>>, vector<1x1x8x8xf32>
    %131 = vector.shape_cast %130 : vector<1x1x8x8xf32> to vector<8x8xf32>
    %132 = vector.shape_cast %129 : vector<8x8xf32> to vector<1x1x8x8xf32>
    tpu.vector_store %arg5[%c0_172, %c1_173, %c0_174, %c0_175], %132 {strides = array<i32>} : memref<1x8x8x8xf32, #tpu.memory_space<vmem>>, vector<1x1x8x8xf32>,
    %c91_176 = arith.constant 91 : index
    %c0_177 = arith.constant 0 : index
    %133 = tpu.strided_load %arg6[%c91_176, %c0_177] {strides = array<i32: 2, 1>} : memref<342x8xf32, #tpu.memory_space<vmem>>, vector<8x8xf32>
    %c92 = arith.constant 92 : index
    %c0_178 = arith.constant 0 : index
    %134 = tpu.strided_load %arg6[%c92, %c0_178] {strides = array<i32: 2, 1>} : memref<342x8xf32, #tpu.memory_space<vmem>>, vector<8x8xf32>
    %135 = arith.maximumf %133, %134 : vector<8x8xf32>
    %c109_179 = arith.constant 109 : index
    %c0_180 = arith.constant 0 : index
    %136 = tpu.strided_load %arg6[%c109_179, %c0_180] {strides = array<i32: 2, 1>} : memref<342x8xf32, #tpu.memory_space<vmem>>, vector<8x8xf32>
    %c110 = arith.constant 110 : index
    %c0_181 = arith.constant 0 : index
    %137 = tpu.strided_load %arg6[%c110, %c0_181] {strides = array<i32: 2, 1>} : memref<342x8xf32, #tpu.memory_space<vmem>>, vector<8x8xf32>
    %138 = arith.maximumf %136, %137 : vector<8x8xf32>
    %139 = arith.maximumf %135, %138 : vector<8x8xf32>
    %c0_182 = arith.constant 0 : index
    %c2_183 = arith.constant 2 : index
    %c0_184 = arith.constant 0 : index
    %c0_185 = arith.constant 0 : index
    %140 = vector.load %arg5[%c0_182, %c2_183, %c0_184, %c0_185] : memref<1x8x8x8xf32, #tpu.memory_space<vmem>>, vector<1x1x8x8xf32>
    %141 = vector.shape_cast %140 : vector<1x1x8x8xf32> to vector<8x8xf32>
    %142 = vector.shape_cast %139 : vector<8x8xf32> to vector<1x1x8x8xf32>
    tpu.vector_store %arg5[%c0_182, %c2_183, %c0_184, %c0_185], %142 {strides = array<i32>} : memref<1x8x8x8xf32, #tpu.memory_space<vmem>>, vector<1x1x8x8xf32>,
    %c127_186 = arith.constant 127 : index
    %c0_187 = arith.constant 0 : index
    %143 = tpu.strided_load %arg6[%c127_186, %c0_187] {strides = array<i32: 2, 1>} : memref<342x8xf32, #tpu.memory_space<vmem>>, vector<8x8xf32>
    %c128 = arith.constant 128 : index
    %c0_188 = arith.constant 0 : index
    %144 = tpu.strided_load %arg6[%c128, %c0_188] {strides = array<i32: 2, 1>} : memref<342x8xf32, #tpu.memory_space<vmem>>, vector<8x8xf32>
    %145 = arith.maximumf %143, %144 : vector<8x8xf32>
    %c145_189 = arith.constant 145 : index
    %c0_190 = arith.constant 0 : index
    %146 = tpu.strided_load %arg6[%c145_189, %c0_190] {strides = array<i32: 2, 1>} : memref<342x8xf32, #tpu.memory_space<vmem>>, vector<8x8xf32>
    %c146 = arith.constant 146 : index
    %c0_191 = arith.constant 0 : index
    %147 = tpu.strided_load %arg6[%c146, %c0_191] {strides = array<i32: 2, 1>} : memref<342x8xf32, #tpu.memory_space<vmem>>, vector<8x8xf32>
    %148 = arith.maximumf %146, %147 : vector<8x8xf32>
    %149 = arith.maximumf %145, %148 : vector<8x8xf32>
    %c0_192 = arith.constant 0 : index
    %c3_193 = arith.constant 3 : index
    %c0_194 = arith.constant 0 : index
    %c0_195 = arith.constant 0 : index
    %150 = vector.load %arg5[%c0_192, %c3_193, %c0_194, %c0_195] : memref<1x8x8x8xf32, #tpu.memory_space<vmem>>, vector<1x1x8x8xf32>
    %151 = vector.shape_cast %150 : vector<1x1x8x8xf32> to vector<8x8xf32>
    %152 = vector.shape_cast %149 : vector<8x8xf32> to vector<1x1x8x8xf32>
    tpu.vector_store %arg5[%c0_192, %c3_193, %c0_194, %c0_195], %152 {strides = array<i32>} : memref<1x8x8x8xf32, #tpu.memory_space<vmem>>, vector<1x1x8x8xf32>,
    %c163_196 = arith.constant 163 : index
    %c0_197 = arith.constant 0 : index
    %153 = tpu.strided_load %arg6[%c163_196, %c0_197] {strides = array<i32: 2, 1>} : memref<342x8xf32, #tpu.memory_space<vmem>>, vector<8x8xf32>
    %c164 = arith.constant 164 : index
    %c0_198 = arith.constant 0 : index
    %154 = tpu.strided_load %arg6[%c164, %c0_198] {strides = array<i32: 2, 1>} : memref<342x8xf32, #tpu.memory_space<vmem>>, vector<8x8xf32>
    %155 = arith.maximumf %153, %154 : vector<8x8xf32>
    %c181_199 = arith.constant 181 : index
    %c0_200 = arith.constant 0 : index
    %156 = tpu.strided_load %arg6[%c181_199, %c0_200] {strides = array<i32: 2, 1>} : memref<342x8xf32, #tpu.memory_space<vmem>>, vector<8x8xf32>
    %c182 = arith.constant 182 : index
    %c0_201 = arith.constant 0 : index
    %157 = tpu.strided_load %arg6[%c182, %c0_201] {strides = array<i32: 2, 1>} : memref<342x8xf32, #tpu.memory_space<vmem>>, vector<8x8xf32>
    %158 = arith.maximumf %156, %157 : vector<8x8xf32>
    %159 = arith.maximumf %155, %158 : vector<8x8xf32>
    %c0_202 = arith.constant 0 : index
    %c4_203 = arith.constant 4 : index
    %c0_204 = arith.constant 0 : index
    %c0_205 = arith.constant 0 : index
    %160 = vector.load %arg5[%c0_202, %c4_203, %c0_204, %c0_205] : memref<1x8x8x8xf32, #tpu.memory_space<vmem>>, vector<1x1x8x8xf32>
    %161 = vector.shape_cast %160 : vector<1x1x8x8xf32> to vector<8x8xf32>
    %162 = vector.shape_cast %159 : vector<8x8xf32> to vector<1x1x8x8xf32>
    tpu.vector_store %arg5[%c0_202, %c4_203, %c0_204, %c0_205], %162 {strides = array<i32>} : memref<1x8x8x8xf32, #tpu.memory_space<vmem>>, vector<1x1x8x8xf32>,
    %c199_206 = arith.constant 199 : index
    %c0_207 = arith.constant 0 : index
    %163 = tpu.strided_load %arg6[%c199_206, %c0_207] {strides = array<i32: 2, 1>} : memref<342x8xf32, #tpu.memory_space<vmem>>, vector<8x8xf32>
    %c200 = arith.constant 200 : index
    %c0_208 = arith.constant 0 : index
    %164 = tpu.strided_load %arg6[%c200, %c0_208] {strides = array<i32: 2, 1>} : memref<342x8xf32, #tpu.memory_space<vmem>>, vector<8x8xf32>
    %165 = arith.maximumf %163, %164 : vector<8x8xf32>
    %c217_209 = arith.constant 217 : index
    %c0_210 = arith.constant 0 : index
    %166 = tpu.strided_load %arg6[%c217_209, %c0_210] {strides = array<i32: 2, 1>} : memref<342x8xf32, #tpu.memory_space<vmem>>, vector<8x8xf32>
    %c218 = arith.constant 218 : index
    %c0_211 = arith.constant 0 : index
    %167 = tpu.strided_load %arg6[%c218, %c0_211] {strides = array<i32: 2, 1>} : memref<342x8xf32, #tpu.memory_space<vmem>>, vector<8x8xf32>
    %168 = arith.maximumf %166, %167 : vector<8x8xf32>
    %169 = arith.maximumf %165, %168 : vector<8x8xf32>
    %c0_212 = arith.constant 0 : index
    %c5_213 = arith.constant 5 : index
    %c0_214 = arith.constant 0 : index
    %c0_215 = arith.constant 0 : index
    %170 = vector.load %arg5[%c0_212, %c5_213, %c0_214, %c0_215] : memref<1x8x8x8xf32, #tpu.memory_space<vmem>>, vector<1x1x8x8xf32>
    %171 = vector.shape_cast %170 : vector<1x1x8x8xf32> to vector<8x8xf32>
    %172 = vector.shape_cast %169 : vector<8x8xf32> to vector<1x1x8x8xf32>
    tpu.vector_store %arg5[%c0_212, %c5_213, %c0_214, %c0_215], %172 {strides = array<i32>} : memref<1x8x8x8xf32, #tpu.memory_space<vmem>>, vector<1x1x8x8xf32>,
    %c235_216 = arith.constant 235 : index
    %c0_217 = arith.constant 0 : index
    %173 = tpu.strided_load %arg6[%c235_216, %c0_217] {strides = array<i32: 2, 1>} : memref<342x8xf32, #tpu.memory_space<vmem>>, vector<8x8xf32>
    %c236 = arith.constant 236 : index
    %c0_218 = arith.constant 0 : index
    %174 = tpu.strided_load %arg6[%c236, %c0_218] {strides = array<i32: 2, 1>} : memref<342x8xf32, #tpu.memory_space<vmem>>, vector<8x8xf32>
    %175 = arith.maximumf %173, %174 : vector<8x8xf32>
    %c253_219 = arith.constant 253 : index
    %c0_220 = arith.constant 0 : index
    %176 = tpu.strided_load %arg6[%c253_219, %c0_220] {strides = array<i32: 2, 1>} : memref<342x8xf32, #tpu.memory_space<vmem>>, vector<8x8xf32>
    %c254 = arith.constant 254 : index
    %c0_221 = arith.constant 0 : index
    %177 = tpu.strided_load %arg6[%c254, %c0_221] {strides = array<i32: 2, 1>} : memref<342x8xf32, #tpu.memory_space<vmem>>, vector<8x8xf32>
    %178 = arith.maximumf %176, %177 : vector<8x8xf32>
    %179 = arith.maximumf %175, %178 : vector<8x8xf32>
    %c0_222 = arith.constant 0 : index
    %c6_223 = arith.constant 6 : index
    %c0_224 = arith.constant 0 : index
    %c0_225 = arith.constant 0 : index
    %180 = vector.load %arg5[%c0_222, %c6_223, %c0_224, %c0_225] : memref<1x8x8x8xf32, #tpu.memory_space<vmem>>, vector<1x1x8x8xf32>
    %181 = vector.shape_cast %180 : vector<1x1x8x8xf32> to vector<8x8xf32>
    %182 = vector.shape_cast %179 : vector<8x8xf32> to vector<1x1x8x8xf32>
    tpu.vector_store %arg5[%c0_222, %c6_223, %c0_224, %c0_225], %182 {strides = array<i32>} : memref<1x8x8x8xf32, #tpu.memory_space<vmem>>, vector<1x1x8x8xf32>,
    %c271_226 = arith.constant 271 : index
    %c0_227 = arith.constant 0 : index
    %183 = tpu.strided_load %arg6[%c271_226, %c0_227] {strides = array<i32: 2, 1>} : memref<342x8xf32, #tpu.memory_space<vmem>>, vector<8x8xf32>
    %c272 = arith.constant 272 : index
    %c0_228 = arith.constant 0 : index
    %184 = tpu.strided_load %arg6[%c272, %c0_228] {strides = array<i32: 2, 1>} : memref<342x8xf32, #tpu.memory_space<vmem>>, vector<8x8xf32>
    %185 = arith.maximumf %183, %184 : vector<8x8xf32>
    %c289_229 = arith.constant 289 : index
    %c0_230 = arith.constant 0 : index
    %186 = tpu.strided_load %arg6[%c289_229, %c0_230] {strides = array<i32: 2, 1>} : memref<342x8xf32, #tpu.memory_space<vmem>>, vector<8x8xf32>
    %c290 = arith.constant 290 : index
    %c0_231 = arith.constant 0 : index
    %187 = tpu.strided_load %arg6[%c290, %c0_231] {strides = array<i32: 2, 1>} : memref<342x8xf32, #tpu.memory_space<vmem>>, vector<8x8xf32>
    %188 = arith.maximumf %186, %187 : vector<8x8xf32>
    %189 = arith.maximumf %185, %188 : vector<8x8xf32>
    %c0_232 = arith.constant 0 : index
    %c7_233 = arith.constant 7 : index
    %c0_234 = arith.constant 0 : index
    %c0_235 = arith.constant 0 : index
    %190 = vector.load %arg5[%c0_232, %c7_233, %c0_234, %c0_235] : memref<1x8x8x8xf32, #tpu.memory_space<vmem>>, vector<1x1x8x8xf32>
    %191 = vector.shape_cast %190 : vector<1x1x8x8xf32> to vector<8x8xf32>
    %192 = vector.shape_cast %189 : vector<8x8xf32> to vector<1x1x8x8xf32>
    tpu.vector_store %arg5[%c0_232, %c7_233, %c0_234, %c0_235], %192 {strides = array<i32>} : memref<1x8x8x8xf32, #tpu.memory_space<vmem>>, vector<1x1x8x8xf32>,
    return
  }
  func.func @transform_0(%arg0: i32) -> (i32, i32, i32, i32) {
    %c0_i32 = arith.constant 0 : i32
    %c0_i32_0 = arith.constant 0 : i32
    %c0_i32_1 = arith.constant 0 : i32
    %c0_i32_2 = arith.constant 0 : i32
    return %arg0, %c0_i32, %c0_i32_0, %c0_i32_1 : i32, i32, i32, i32
  }
  func.func @transform_1(%arg0: i32) -> (i32, i32) {
    %c0_i32 = arith.constant 0 : i32
    %c0_i32_0 = arith.constant 0 : i32
    %c0_i32_1 = arith.constant 0 : i32
    return %c0_i32, %c0_i32_0 : i32, i32
  }
  func.func @transform_2(%arg0: i32) -> (i32, i32, i32) {
    %c0_i32 = arith.constant 0 : i32
    %c0_i32_0 = arith.constant 0 : i32
    %c0_i32_1 = arith.constant 0 : i32
    %c0_i32_2 = arith.constant 0 : i32
    return %c0_i32, %c0_i32_0, %c0_i32_1 : i32, i32, i32
  }
  func.func @transform_3(%arg0: i32) -> (i32, i32, i32) {
    %c0_i32 = arith.constant 0 : i32
    %c0_i32_0 = arith.constant 0 : i32
    %c0_i32_1 = arith.constant 0 : i32
    %c0_i32_2 = arith.constant 0 : i32
    return %c0_i32, %c0_i32_0, %c0_i32_1 : i32, i32, i32
  }
  func.func @transform_4(%arg0: i32) -> (i32, i32, i32, i32) {
    %c0_i32 = arith.constant 0 : i32
    %c0_i32_0 = arith.constant 0 : i32
    %c0_i32_1 = arith.constant 0 : i32
    %c0_i32_2 = arith.constant 0 : i32
    return %arg0, %c0_i32, %c0_i32_0, %c0_i32_1 : i32, i32, i32, i32
  }
}

</mosaic_0001>

<llo_original>
// kernel: conv_block_forward.1
$region0: #{conv_block_forward.1}
  #allocation0 [shape = 'u32[]', space=smem, size = 0x4, offset = 0x4, fixed_abs, tag = 'smem constant byte address 0x4 - core index']
  #allocation1 [shape = 'u32[144,128]{1,0:T(1,128)}', space=vmem, size = 0x12000, scoped, tag = 'internal scratch']
  #allocation2 [shape = 'f32[342,8]{1,0:T(8,128)}', space=vmem, size = 0x2b000, scoped, tag = 'scratch operand']
  #allocation3 [shape = 'f32[288,72]{1,0:T(8,128)}', space=vmem, size = 0x24000, scoped, tag = 'scratch operand']
  %s0 = inlined_call_operand.vmem [shape: f32[2,16,16,8], index: 0, kind: input, shape index: {}]
  %s1 = inlined_call_operand.vmem [shape: f32[288,1], index: 1, kind: input, shape index: {}]
  %s2 = inlined_call_operand.vmem [shape: f32[2,72,8], index: 2, kind: input, shape index: {}]
  %s3 = inlined_call_operand.vmem [shape: f32[2,1,8], index: 3, kind: input, shape index: {}]
  %s4 = inlined_call_operand.vmem [shape: f32[2,8,8,8], index: 4, kind: output, shape index: {}]
  %s5 = sld [smem:[#allocation0]]
  $region49: #{conv_block_forward.1} parent=0
    _
  %s7 = ssub.s32 1, %s5
  %s8 = scalar_select 0, %s7, %s5
  loop: start=0, step=1, limit=4
  $region2: #{conv_block_forward.1} parent=0 // loop_pre_header
    _
  $region3: #{conv_block_forward.1} parent=0 // loop_header
    %s10 = sphi 0, %s14
    %p11 = scmp.ge.s32.totalorder %s10, 4
    %s20 = sphi 0, %s22
    %s23 = sphi 0, %s20
    %s24 = sphi 0, %s23
    %s40 = sphi 0, %s24
    %s44 = sphi 0, %s44
    %s46 = sphi 0, %s44
    %s47 = sphi 0, %s46
    %s61 = sphi 0, %s47
    %s65 = sphi 0, %s65
    %s67 = sphi 0, %s65
    %s68 = sphi 0, %s67
    %s82 = sphi 0, %s68
    %s86 = sphi 0, %s86
    %s88 = sphi 0, %s86
    %s89 = sphi 0, %s88
    %s103 = sphi 0, %s89
    %s109 = sphi 0, %s111
    %s112 = sphi 0, %s109
    %s113 = sphi 0, %s112
    %s129 = sphi 0, %s113
  $region4: #{conv_block_forward.1} parent=0 // loop_header_branch
    %13 = sbr.rel (%p11) target = $region8
  $region5: #{conv_block_forward.1} parent=0 // loop_body
    %s15 = ssub.s32 %s10, 1
    %s16 = ssub.s32 %s10, 2
    %s17 = sadd.s32 %s10, 1
    %s18 = ssub.s32 %s10, %s17
    %p19 = scmp.eq.s32.totalorder %s18, 0
    %s21 = sadd.s32 %s20, 1
    %s22 = scalar_select %p19, %s20, %s21
    %p25 = pneg %p19
    %p26 = scmp.eq.s32.totalorder %s10, 1
    %p27 = por %p25, %p26
    %p28 = scmp.ne.s32.totalorder %s20, %s23
    %p29 = scmp.eq.s32.totalorder %s10, 0
    %p30 = por %p28, %p29
    %p31 = scmp.ne.s32.totalorder %s20, %s23
    %p32 = scmp.eq.s32.totalorder %s15, 1
    %p33 = por %p31, %p32
    %p34 = scmp.ne.s32.totalorder %s23, %s24
    %p35 = scmp.eq.s32.totalorder %s15, 0
    %p36 = por %p34, %p35
    %p37 = scmp.ne.s32.totalorder %s23, %s24
    %p38 = scmp.eq.s32.totalorder %s16, 1
    %p39 = por %p37, %p38
    %p41 = scmp.ne.s32.totalorder %s24, %s40
    %p42 = scmp.eq.s32.totalorder %s16, 0
    %p43 = por %p41, %p42
    %s45 = sadd.s32 %s44, 1
    %p48 = scmp.eq.s32.totalorder %s10, 1
    %p49 = scmp.ne.s32.totalorder %s44, %s46
    %p50 = scmp.eq.s32.totalorder %s10, 0
    %p51 = por %p49, %p50
    %p52 = scmp.ne.s32.totalorder %s44, %s46
    %p53 = scmp.eq.s32.totalorder %s15, 1
    %p54 = por %p52, %p53
    %p55 = scmp.ne.s32.totalorder %s46, %s47
    %p56 = scmp.eq.s32.totalorder %s15, 0
    %p57 = por %p55, %p56
    %p58 = scmp.ne.s32.totalorder %s46, %s47
    %p59 = scmp.eq.s32.totalorder %s16, 1
    %p60 = por %p58, %p59
    %p62 = scmp.ne.s32.totalorder %s47, %s61
    %p63 = scmp.eq.s32.totalorder %s16, 0
    %p64 = por %p62, %p63
    %s66 = sadd.s32 %s65, 1
    %p69 = scmp.eq.s32.totalorder %s10, 1
    %p70 = scmp.ne.s32.totalorder %s65, %s67
    %p71 = scmp.eq.s32.totalorder %s10, 0
    %p72 = por %p70, %p71
    %p73 = scmp.ne.s32.totalorder %s65, %s67
    %p74 = scmp.eq.s32.totalorder %s15, 1
    %p75 = por %p73, %p74
    %p76 = scmp.ne.s32.totalorder %s67, %s68
    %p77 = scmp.eq.s32.totalorder %s15, 0
    %p78 = por %p76, %p77
    %p79 = scmp.ne.s32.totalorder %s67, %s68
    %p80 = scmp.eq.s32.totalorder %s16, 1
    %p81 = por %p79, %p80
    %p83 = scmp.ne.s32.totalorder %s68, %s82
    %p84 = scmp.eq.s32.totalorder %s16, 0
    %p85 = por %p83, %p84
    %s87 = sadd.s32 %s86, 1
    %p90 = scmp.eq.s32.totalorder %s10, 1
    %p91 = scmp.ne.s32.totalorder %s86, %s88
    %p92 = scmp.eq.s32.totalorder %s10, 0
    %p93 = por %p91, %p92
    %p94 = scmp.ne.s32.totalorder %s86, %s88
    %p95 = scmp.eq.s32.totalorder %s15, 1
    %p96 = por %p94, %p95
    %p97 = scmp.ne.s32.totalorder %s88, %s89
    %p98 = scmp.eq.s32.totalorder %s15, 0
    %p99 = por %p97, %p98
    %p100 = scmp.ne.s32.totalorder %s88, %s89
    %p101 = scmp.eq.s32.totalorder %s16, 1
    %p102 = por %p100, %p101
    %p104 = scmp.ne.s32.totalorder %s89, %s103
    %p105 = scmp.eq.s32.totalorder %s16, 0
    %p106 = por %p104, %p105
    %s107 = ssub.s32 %s10, %s17
    %p108 = scmp.eq.s32.totalorder %s107, 0
    %s110 = sadd.s32 %s109, 1
    %s111 = scalar_select %p108, %s109, %s110
    %p114 = pneg %p108
    %p115 = scmp.eq.s32.totalorder %s10, 1
    %p116 = por %p114, %p115
    %p117 = scmp.ne.s32.totalorder %s109, %s112
    %p118 = scmp.eq.s32.totalorder %s10, 0
    %p119 = por %p117, %p118
    %p120 = scmp.ne.s32.totalorder %s109, %s112
    %p121 = scmp.eq.s32.totalorder %s15, 1
    %p122 = por %p120, %p121
    %p123 = scmp.ne.s32.totalorder %s112, %s113
    %p124 = scmp.eq.s32.totalorder %s15, 0
    %p125 = por %p123, %p124
    %p126 = scmp.ne.s32.totalorder %s112, %s113
    %p127 = scmp.eq.s32.totalorder %s16, 1
    %p128 = por %p126, %p127
    %p130 = scmp.ne.s32.totalorder %s113, %s129
    %p131 = scmp.eq.s32.totalorder %s16, 0
    %p132 = por %p130, %p131
    %p133 = scmp.le.s32.totalorder 1, %s10
    %p134 = scmp.lt.s32.totalorder %s10, 3
    %p135 = pnand %p133, %p134
    %p136 = pneg %p135
    // Predicated region
    $region9: #{conv_block_forward.1} parent=5 // pred_check
      _
    $region10: #{conv_block_forward.1} parent=5 // pred_check_branch
      %138 = sbr.rel (%p135) target = $region12
    $region11: #{conv_block_forward.1} parent=5 // pred_region
      %s139 = ssub.s32 %s10, 1
      // Predicated region
      $region13: #{conv_block_forward.1} parent=11 // pred_check
        %p140 = pneg %p57
      $region14: #{conv_block_forward.1} parent=11 // pred_check_branch
        %142 = sbr.rel (%p140) target = $region16
      $region15: #{conv_block_forward.1} parent=11 // pred_region
        _
      $region16: #{conv_block_forward.1} parent=11 // pred_fallthru
        _
      // Predicated region
      $region17: #{conv_block_forward.1} parent=11 // pred_check
        %p143 = pneg %p78
      $region18: #{conv_block_forward.1} parent=11 // pred_check_branch
        %145 = sbr.rel (%p143) target = $region20
      $region19: #{conv_block_forward.1} parent=11 // pred_region
        _
      $region20: #{conv_block_forward.1} parent=11 // pred_fallthru
        _
      // Predicated region
      $region21: #{conv_block_forward.1} parent=11 // pred_check
        %p146 = pneg %p99
      $region22: #{conv_block_forward.1} parent=11 // pred_check_branch
        %148 = sbr.rel (%p146) target = $region24
      $region23: #{conv_block_forward.1} parent=11 // pred_region
        _
      $region24: #{conv_block_forward.1} parent=11 // pred_fallthru
        _
    $region12: #{conv_block_forward.1} parent=5 // pred_fallthru
      _
    %p149 = scmp.lt.s32.totalorder %s10, 2
    // Predicated region
    $region25: #{conv_block_forward.1} parent=5 // pred_check
      %p150 = pneg %p149
    $region26: #{conv_block_forward.1} parent=5 // pred_check_branch
      %152 = sbr.rel (%p150) target = $region28
    $region27: #{conv_block_forward.1} parent=5 // pred_region
      // Predicated region
      $region29: #{conv_block_forward.1} parent=27 // pred_check
        %p153 = pneg %p30
      $region30: #{conv_block_forward.1} parent=27 // pred_check_branch
        %155 = sbr.rel (%p153) target = $region32
      $region31: #{conv_block_forward.1} parent=27 // pred_region
        %p156 = scmp.lt.s32.totalorder %s10, 1
        %s157 = scalar_select %p156, %s10, 1
        %s158 = smul.addr %s157, 32
        %s159 = smul.addr %s158, 8
        %s160 = scalar_lea.vmem %s0, %s159
      $region32: #{conv_block_forward.1} parent=27 // pred_fallthru
        _
    $region28: #{conv_block_forward.1} parent=5 // pred_fallthru
      _
    %p161 = scmp.le.s32.totalorder 1, %s10
    %p162 = scmp.lt.s32.totalorder %s10, 3
    %p163 = pnand %p161, %p162
    %p164 = pneg %p163
    // Predicated region
    $region33: #{conv_block_forward.1} parent=5 // pred_check
      _
    $region34: #{conv_block_forward.1} parent=5 // pred_check_branch
      %166 = sbr.rel (%p163) target = $region36
    $region35: #{conv_block_forward.1} parent=5 // pred_region
      %s167 = ssub.s32 %s10, 1
      %p168 = scmp.lt.s32.totalorder %s15, 1
      %s169 = scalar_select %p168, %s15, 1
      %s170 = smul.addr %s169, 32
      %s171 = smul.addr %s170, 8
      %s172 = scalar_lea.vmem %s0, %s171
      %p173 = pneg %p36
      %p174 = pneg %p33
      %p175 = pneg %p57
      %p176 = pneg %p54
      %p177 = pneg %p78
      %p178 = pneg %p75
      %p179 = pneg %p99
      %p180 = pneg %p96
      %p181 = pneg %p125
      %p182 = pneg %p122
      %p183 = scmp.lt.s32.totalorder %s15, 1
      %s184 = scalar_select %p183, %s15, 1
      %s185 = smul.addr %s184, 8
      %s186 = smul.addr %s185, 8
      %s187 = scalar_lea.vmem %s4, %s186
      %p188 = scmp.lt.s32.totalorder %s15, 1
      %s189 = scalar_select %p188, %s15, 1
      %s190 = smul.addr %s189, 32
      %s191 = smul.addr %s190, 8
      %s192 = scalar_lea.vmem %s0, %s191
      %p193 = scmp.lt.s32.totalorder %s15, 1
      %s194 = scalar_select %p193, %s15, 1
      %s195 = smul.addr %s194, 8
      %s196 = smul.addr %s195, 8
      %s197 = scalar_lea.vmem %s4, %s196
      %vm198 = vcmask 64512
      %199 = vst.msk [vmem:[#allocation2] sm:$0xff] %vm198, 0.0
      %200 = vst.msk [vmem:[#allocation2 + $0x8] sm:$0xff] %vm198, 0.0
      %201 = vst.msk [vmem:[#allocation2 + $0x10] sm:$0xff] %vm198, 0.0
      %202 = vst.msk [vmem:[#allocation2 + $0x18] sm:$0xff] %vm198, 0.0
      %203 = vst.msk [vmem:[#allocation2 + $0x20] sm:$0xff] %vm198, 0.0
      %204 = vst.msk [vmem:[#allocation2 + $0x28] sm:$0xff] %vm198, 0.0
      %205 = vst.msk [vmem:[#allocation2 + $0x30] sm:$0xff] %vm198, 0.0
      %206 = vst.msk [vmem:[#allocation2 + $0x38] sm:$0xff] %vm198, 0.0
      %207 = vst.msk [vmem:[#allocation2 + $0x40] sm:$0xff] %vm198, 0.0
      %208 = vst.msk [vmem:[#allocation2 + $0x48] sm:$0xff] %vm198, 0.0
      %209 = vst.msk [vmem:[#allocation2 + $0x50] sm:$0xff] %vm198, 0.0
      %210 = vst.msk [vmem:[#allocation2 + $0x58] sm:$0xff] %vm198, 0.0
      %211 = vst.msk [vmem:[#allocation2 + $0x60] sm:$0xff] %vm198, 0.0
      %212 = vst.msk [vmem:[#allocation2 + $0x68] sm:$0xff] %vm198, 0.0
      %213 = vst.msk [vmem:[#allocation2 + $0x70] sm:$0xff] %vm198, 0.0
      %214 = vst.msk [vmem:[#allocation2 + $0x78] sm:$0xff] %vm198, 0.0
      %215 = vst.msk [vmem:[#allocation2 + $0x80] sm:$0xff] %vm198, 0.0
      %216 = vst.msk [vmem:[#allocation2 + $0x88] sm:$0xff] %vm198, 0.0
      %217 = vst.msk [vmem:[#allocation2 + $0x90] sm:$0xff] %vm198, 0.0
      %218 = vst.msk [vmem:[#allocation2 + $0x98] sm:$0xff] %vm198, 0.0
      %219 = vst.msk [vmem:[#allocation2 + $0xa0] sm:$0xff] %vm198, 0.0
      %220 = vst.msk [vmem:[#allocation2 + $0xa8] sm:$0xff] %vm198, 0.0
      %221 = vst.msk [vmem:[#allocation2 + $0xb0] sm:$0xff] %vm198, 0.0
      %222 = vst.msk [vmem:[#allocation2 + $0xb8] sm:$0xff] %vm198, 0.0
      %223 = vst.msk [vmem:[#allocation2 + $0xc0] sm:$0xff] %vm198, 0.0
      %224 = vst.msk [vmem:[#allocation2 + $0xc8] sm:$0xff] %vm198, 0.0
      %225 = vst.msk [vmem:[#allocation2 + $0xd0] sm:$0xff] %vm198, 0.0
      %226 = vst.msk [vmem:[#allocation2 + $0xd8] sm:$0xff] %vm198, 0.0
      %227 = vst.msk [vmem:[#allocation2 + $0xe0] sm:$0xff] %vm198, 0.0
      %228 = vst.msk [vmem:[#allocation2 + $0xe8] sm:$0xff] %vm198, 0.0
      %229 = vst.msk [vmem:[#allocation2 + $0xf0] sm:$0xff] %vm198, 0.0
      %230 = vst.msk [vmem:[#allocation2 + $0xf8] sm:$0xff] %vm198, 0.0
      %231 = vst.msk [vmem:[#allocation2 + $0x100] sm:$0xff] %vm198, 0.0
      %232 = vst.msk [vmem:[#allocation2 + $0x108] sm:$0xff] %vm198, 0.0
      %233 = vst.msk [vmem:[#allocation2 + $0x110] sm:$0xff] %vm198, 0.0
      %234 = vst.msk [vmem:[#allocation2 + $0x118] sm:$0xff] %vm198, 0.0
      %235 = vst.msk [vmem:[#allocation2 + $0x120] sm:$0xff] %vm198, 0.0
      %236 = vst.msk [vmem:[#allocation2 + $0x128] sm:$0xff] %vm198, 0.0
      %237 = vst.msk [vmem:[#allocation2 + $0x130] sm:$0xff] %vm198, 0.0
      %238 = vst.msk [vmem:[#allocation2 + $0x138] sm:$0xff] %vm198, 0.0
      %239 = vst.msk [vmem:[#allocation2 + $0x140] sm:$0xff] %vm198, 0.0
      %240 = vst.msk [vmem:[#allocation2 + $0x148] sm:$0xff] %vm198, 0.0
      %vm241 = vcmask 62464
      %242 = vst.msk [vmem:[#allocation2 + $0x150] sm:$0x3f] %vm241, 0.0
      %v243 = vld [vmem:[%s192] sm:$0xff]
      %v244 = vld [vmem:[%s192 + $0x8] sm:$0xff]
      %245 = vst.msk [vmem:[#allocation2 + $0x13] sm:$0xff] %vm198, %v243
      %246 = vst.msk [vmem:[#allocation2 + $0x1b] sm:$0xff] %vm198, %v244
      %s247 = scalar_lea.vmem %s192, 16
      %v248 = vld [vmem:[%s247] sm:$0xff]
      %v249 = vld [vmem:[%s247 + $0x8] sm:$0xff]
      %250 = vst.msk [vmem:[#allocation2 + $0x25] sm:$0xff] %vm198, %v248
      %251 = vst.msk [vmem:[#allocation2 + $0x2d] sm:$0xff] %vm198, %v249
      %s252 = scalar_lea.vmem %s192, 32
      %v253 = vld [vmem:[%s252] sm:$0xff]
      %v254 = vld [vmem:[%s252 + $0x8] sm:$0xff]
      %255 = vst.msk [vmem:[#allocation2 + $0x37] sm:$0xff] %vm198, %v253
      %256 = vst.msk [vmem:[#allocation2 + $0x3f] sm:$0xff] %vm198, %v254
      %s257 = scalar_lea.vmem %s192, 48
      %v258 = vld [vmem:[%s257] sm:$0xff]
      %v259 = vld [vmem:[%s257 + $0x8] sm:$0xff]
      %260 = vst.msk [vmem:[#allocation2 + $0x49] sm:$0xff] %vm198, %v258
      %261 = vst.msk [vmem:[#allocation2 + $0x51] sm:$0xff] %vm198, %v259
      %s262 = scalar_lea.vmem %s192, 64
      %v263 = vld [vmem:[%s262] sm:$0xff]
      %v264 = vld [vmem:[%s262 + $0x8] sm:$0xff]
      %265 = vst.msk [vmem:[#allocation2 + $0x5b] sm:$0xff] %vm198, %v263
      %266 = vst.msk [vmem:[#allocation2 + $0x63] sm:$0xff] %vm198, %v264
      %s267 = scalar_lea.vmem %s192, 80
      %v268 = vld [vmem:[%s267] sm:$0xff]
      %v269 = vld [vmem:[%s267 + $0x8] sm:$0xff]
      %270 = vst.msk [vmem:[#allocation2 + $0x6d] sm:$0xff] %vm198, %v268
      %271 = vst.msk [vmem:[#allocation2 + $0x75] sm:$0xff] %vm198, %v269
      %s272 = scalar_lea.vmem %s192, 96
      %v273 = vld [vmem:[%s272] sm:$0xff]
      %v274 = vld [vmem:[%s272 + $0x8] sm:$0xff]
      %275 = vst.msk [vmem:[#allocation2 + $0x7f] sm:$0xff] %vm198, %v273
      %276 = vst.msk [vmem:[#allocation2 + $0x87] sm:$0xff] %vm198, %v274
      %s277 = scalar_lea.vmem %s192, 112
      %v278 = vld [vmem:[%s277] sm:$0xff]
      %v279 = vld [vmem:[%s277 + $0x8] sm:$0xff]
      %280 = vst.msk [vmem:[#allocation2 + $0x91] sm:$0xff] %vm198, %v278
      %281 = vst.msk [vmem:[#allocation2 + $0x99] sm:$0xff] %vm198, %v279
      %s282 = scalar_lea.vmem %s192, 128
      %v283 = vld [vmem:[%s282] sm:$0xff]
      %v284 = vld [vmem:[%s282 + $0x8] sm:$0xff]
      %285 = vst.msk [vmem:[#allocation2 + $0xa3] sm:$0xff] %vm198, %v283
      %286 = vst.msk [vmem:[#allocation2 + $0xab] sm:$0xff] %vm198, %v284
      %s287 = scalar_lea.vmem %s192, 144
      %v288 = vld [vmem:[%s287] sm:$0xff]
      %v289 = vld [vmem:[%s287 + $0x8] sm:$0xff]
      %290 = vst.msk [vmem:[#allocation2 + $0xb5] sm:$0xff] %vm198, %v288
      %291 = vst.msk [vmem:[#allocation2 + $0xbd] sm:$0xff] %vm198, %v289
      %s292 = scalar_lea.vmem %s192, 160
      %v293 = vld [vmem:[%s292] sm:$0xff]
      %v294 = vld [vmem:[%s292 + $0x8] sm:$0xff]
      %295 = vst.msk [vmem:[#allocation2 + $0xc7] sm:$0xff] %vm198, %v293
      %296 = vst.msk [vmem:[#allocation2 + $0xcf] sm:$0xff] %vm198, %v294
      %s297 = scalar_lea.vmem %s192, 176
      %v298 = vld [vmem:[%s297] sm:$0xff]
      %v299 = vld [vmem:[%s297 + $0x8] sm:$0xff]
      %300 = vst.msk [vmem:[#allocation2 + $0xd9] sm:$0xff] %vm198, %v298
      %301 = vst.msk [vmem:[#allocation2 + $0xe1] sm:$0xff] %vm198, %v299
      %s302 = scalar_lea.vmem %s192, 192
      %v303 = vld [vmem:[%s302] sm:$0xff]
      %v304 = vld [vmem:[%s302 + $0x8] sm:$0xff]
      %305 = vst.msk [vmem:[#allocation2 + $0xeb] sm:$0xff] %vm198, %v303
      %306 = vst.msk [vmem:[#allocation2 + $0xf3] sm:$0xff] %vm198, %v304
      %s307 = scalar_lea.vmem %s192, 208
      %v308 = vld [vmem:[%s307] sm:$0xff]
      %v309 = vld [vmem:[%s307 + $0x8] sm:$0xff]
      %310 = vst.msk [vmem:[#allocation2 + $0xfd] sm:$0xff] %vm198, %v308
      %311 = vst.msk [vmem:[#allocation2 + $0x105] sm:$0xff] %vm198, %v309
      %s312 = scalar_lea.vmem %s192, 224
      %v313 = vld [vmem:[%s312] sm:$0xff]
      %v314 = vld [vmem:[%s312 + $0x8] sm:$0xff]
      %315 = vst.msk [vmem:[#allocation2 + $0x10f] sm:$0xff] %vm198, %v313
      %316 = vst.msk [vmem:[#allocation2 + $0x117] sm:$0xff] %vm198, %v314
      %s317 = scalar_lea.vmem %s192, 240
      %v318 = vld [vmem:[%s317] sm:$0xff]
      %v319 = vld [vmem:[%s317 + $0x8] sm:$0xff]
      %320 = vst.msk [vmem:[#allocation2 + $0x121] sm:$0xff] %vm198, %v318
      %321 = vst.msk [vmem:[#allocation2 + $0x129] sm:$0xff] %vm198, %v319
      %v322 = vld [vmem:[%s1] sm:$0xff]
      %v323 = vld [vmem:[%s1 + $0x8] sm:$0xff]
      %v324 = vld [vmem:[%s1 + $0x10] sm:$0xff]
      %v325 = vld [vmem:[%s1 + $0x18] sm:$0xff]
      %v326 = vld [vmem:[%s1 + $0x20] sm:$0xff]
      %v327 = vld [vmem:[%s1 + $0x28] sm:$0xff]
      %v328 = vld [vmem:[%s1 + $0x30] sm:$0xff]
      %v329 = vld [vmem:[%s1 + $0x38] sm:$0xff]
      %v330 = vld [vmem:[%s1 + $0x40] sm:$0xff]
      %v331 = vld [vmem:[%s1 + $0x48] sm:$0xff]
      %v332 = vld [vmem:[%s1 + $0x50] sm:$0xff]
      %v333 = vld [vmem:[%s1 + $0x58] sm:$0xff]
      %v334 = vld [vmem:[%s1 + $0x60] sm:$0xff]
      %v335 = vld [vmem:[%s1 + $0x68] sm:$0xff]
      %v336 = vld [vmem:[%s1 + $0x70] sm:$0xff]
      %v337 = vld [vmem:[%s1 + $0x78] sm:$0xff]
      %v338 = vld [vmem:[%s1 + $0x80] sm:$0xff]
      %v339 = vld [vmem:[%s1 + $0x88] sm:$0xff]
      %v340 = vld [vmem:[%s1 + $0x90] sm:$0xff]
      %v341 = vld [vmem:[%s1 + $0x98] sm:$0xff]
      %v342 = vld [vmem:[%s1 + $0xa0] sm:$0xff]
      %v343 = vld [vmem:[%s1 + $0xa8] sm:$0xff]
      %v344 = vld [vmem:[%s1 + $0xb0] sm:$0xff]
      %v345 = vld [vmem:[%s1 + $0xb8] sm:$0xff]
      %v346 = vld [vmem:[%s1 + $0xc0] sm:$0xff]
      %v347 = vld [vmem:[%s1 + $0xc8] sm:$0xff]
      %v348 = vld [vmem:[%s1 + $0xd0] sm:$0xff]
      %v349 = vld [vmem:[%s1 + $0xd8] sm:$0xff]
      %v350 = vld [vmem:[%s1 + $0xe0] sm:$0xff]
      %v351 = vld [vmem:[%s1 + $0xe8] sm:$0xff]
      %v352 = vld [vmem:[%s1 + $0xf0] sm:$0xff]
      %v353 = vld [vmem:[%s1 + $0xf8] sm:$0xff]
      %v354 = vld [vmem:[%s1 + $0x100] sm:$0xff]
      %v355 = vld [vmem:[%s1 + $0x108] sm:$0xff]
      %v356 = vld [vmem:[%s1 + $0x110] sm:$0xff]
      %v357 = vld [vmem:[%s1 + $0x118] sm:$0xff]
      %v358 = vld [vmem:[#allocation2] sm:$0xff]
      %v359 = vld [vmem:[#allocation2 + $0x8] sm:$0xff]
      %v360 = vld [vmem:[#allocation2 + $0x10] sm:$0xff]
      %v361 = vld [vmem:[#allocation2 + $0x18] sm:$0xff]
      %v362 = vld [vmem:[#allocation2 + $0x20] sm:$0xff]
      %v363 = vld [vmem:[#allocation2 + $0x28] sm:$0xff]
      %v364 = vld [vmem:[#allocation2 + $0x30] sm:$0xff]
      %v365 = vld [vmem:[#allocation2 + $0x38] sm:$0xff]
      %v366 = vld [vmem:[#allocation2 + $0x40] sm:$0xff]
      %v367 = vld [vmem:[#allocation2 + $0x48] sm:$0xff]
      %v368 = vld [vmem:[#allocation2 + $0x50] sm:$0xff]
      %v369 = vld [vmem:[#allocation2 + $0x58] sm:$0xff]
      %v370 = vld [vmem:[#allocation2 + $0x60] sm:$0xff]
      %v371 = vld [vmem:[#allocation2 + $0x68] sm:$0xff]
      %v372 = vld [vmem:[#allocation2 + $0x70] sm:$0xff]
      %v373 = vld [vmem:[#allocation2 + $0x78] sm:$0xff]
      %v374 = vld [vmem:[#allocation2 + $0x80] sm:$0xff]
      %v375 = vld [vmem:[#allocation2 + $0x88] sm:$0xff]
      %v376 = vld [vmem:[#allocation2 + $0x90] sm:$0xff]
      %v377 = vld [vmem:[#allocation2 + $0x98] sm:$0xff]
      %v378 = vld [vmem:[#allocation2 + $0xa0] sm:$0xff]
      %v379 = vld [vmem:[#allocation2 + $0xa8] sm:$0xff]
      %v380 = vld [vmem:[#allocation2 + $0xb0] sm:$0xff]
      %v381 = vld [vmem:[#allocation2 + $0xb8] sm:$0xff]
      %v382 = vld [vmem:[#allocation2 + $0xc0] sm:$0xff]
      %v383 = vld [vmem:[#allocation2 + $0xc8] sm:$0xff]
      %v384 = vld [vmem:[#allocation2 + $0xd0] sm:$0xff]
      %v385 = vld [vmem:[#allocation2 + $0xd8] sm:$0xff]
      %v386 = vld [vmem:[#allocation2 + $0xe0] sm:$0xff]
      %v387 = vld [vmem:[#allocation2 + $0xe8] sm:$0xff]
      %v388 = vld [vmem:[#allocation2 + $0xf0] sm:$0xff]
      %v389 = vld [vmem:[#allocation2 + $0xf8] sm:$0xff]
      %v390 = vld [vmem:[#allocation2 + $0x100] sm:$0xff]
      %v391 = vld [vmem:[#allocation2 + $0x108] sm:$0xff]
      %v392 = vld [vmem:[#allocation2 + $0x110] sm:$0xff]
      %v393 = vld [vmem:[#allocation2 + $0x118] sm:$0xff]
      %394 = vst.msk [vmem:[#allocation3] sm:$0xff] %vm198, %v358
      %395 = vst.msk [vmem:[#allocation3 + $0x8] sm:$0xff] %vm198, %v359
      %396 = vst.msk [vmem:[#allocation3 + $0x10] sm:$0xff] %vm198, %v360
      %397 = vst.msk [vmem:[#allocation3 + $0x18] sm:$0xff] %vm198, %v361
      %398 = vst.msk [vmem:[#allocation3 + $0x20] sm:$0xff] %vm198, %v362
      %399 = vst.msk [vmem:[#allocation3 + $0x28] sm:$0xff] %vm198, %v363
      %400 = vst.msk [vmem:[#allocation3 + $0x30] sm:$0xff] %vm198, %v364
      %401 = vst.msk [vmem:[#allocation3 + $0x38] sm:$0xff] %vm198, %v365
      %402 = vst.msk [vmem:[#allocation3 + $0x40] sm:$0xff] %vm198, %v366
      %403 = vst.msk [vmem:[#allocation3 + $0x48] sm:$0xff] %vm198, %v367
      %404 = vst.msk [vmem:[#allocation3 + $0x50] sm:$0xff] %vm198, %v368
      %405 = vst.msk [vmem:[#allocation3 + $0x58] sm:$0xff] %vm198, %v369
      %406 = vst.msk [vmem:[#allocation3 + $0x60] sm:$0xff] %vm198, %v370
      %407 = vst.msk [vmem:[#allocation3 + $0x68] sm:$0xff] %vm198, %v371
      %408 = vst.msk [vmem:[#allocation3 + $0x70] sm:$0xff] %vm198, %v372
      %409 = vst.msk [vmem:[#allocation3 + $0x78] sm:$0xff] %vm198, %v373
      %410 = vst.msk [vmem:[#allocation3 + $0x80] sm:$0xff] %vm198, %v374
      %411 = vst.msk [vmem:[#allocation3 + $0x88] sm:$0xff] %vm198, %v375
      %412 = vst.msk [vmem:[#allocation3 + $0x90] sm:$0xff] %vm198, %v376
      %413 = vst.msk [vmem:[#allocation3 + $0x98] sm:$0xff] %vm198, %v377
      %414 = vst.msk [vmem:[#allocation3 + $0xa0] sm:$0xff] %vm198, %v378
      %415 = vst.msk [vmem:[#allocation3 + $0xa8] sm:$0xff] %vm198, %v379
      %416 = vst.msk [vmem:[#allocation3 + $0xb0] sm:$0xff] %vm198, %v380
      %417 = vst.msk [vmem:[#allocation3 + $0xb8] sm:$0xff] %vm198, %v381
      %418 = vst.msk [vmem:[#allocation3 + $0xc0] sm:$0xff] %vm198, %v382
      %419 = vst.msk [vmem:[#allocation3 + $0xc8] sm:$0xff] %vm198, %v383
      %420 = vst.msk [vmem:[#allocation3 + $0xd0] sm:$0xff] %vm198, %v384
      %421 = vst.msk [vmem:[#allocation3 + $0xd8] sm:$0xff] %vm198, %v385
      %422 = vst.msk [vmem:[#allocation3 + $0xe0] sm:$0xff] %vm198, %v386
      %423 = vst.msk [vmem:[#allocation3 + $0xe8] sm:$0xff] %vm198, %v387
      %424 = vst.msk [vmem:[#allocation3 + $0xf0] sm:$0xff] %vm198, %v388
      %425 = vst.msk [vmem:[#allocation3 + $0xf8] sm:$0xff] %vm198, %v389
      %426 = vst.msk [vmem:[#allocation3 + $0x100] sm:$0xff] %vm198, %v390
      %427 = vst.msk [vmem:[#allocation3 + $0x108] sm:$0xff] %vm198, %v391
      %428 = vst.msk [vmem:[#allocation3 + $0x110] sm:$0xff] %vm198, %v392
      %429 = vst.msk [vmem:[#allocation3 + $0x118] sm:$0xff] %vm198, %v393
      %v430 = vld [vmem:[#allocation2 + $0x1] sm:$0xff]
      %v431 = vld [vmem:[#allocation2 + $0x9] sm:$0xff]
      %v432 = vld [vmem:[#allocation2 + $0x11] sm:$0xff]
      %v433 = vld [vmem:[#allocation2 + $0x19] sm:$0xff]
      %v434 = vld [vmem:[#allocation2 + $0x21] sm:$0xff]
      %v435 = vld [vmem:[#allocation2 + $0x29] sm:$0xff]
      %v436 = vld [vmem:[#allocation2 + $0x31] sm:$0xff]
      %v437 = vld [vmem:[#allocation2 + $0x39] sm:$0xff]
      %v438 = vld [vmem:[#allocation2 + $0x41] sm:$0xff]
      %v439 = vld [vmem:[#allocation2 + $0x49] sm:$0xff]
      %v440 = vld [vmem:[#allocation2 + $0x51] sm:$0xff]
      %v441 = vld [vmem:[#allocation2 + $0x59] sm:$0xff]
      %v442 = vld [vmem:[#allocation2 + $0x61] sm:$0xff]
      %v443 = vld [vmem:[#allocation2 + $0x69] sm:$0xff]
      %v444 = vld [vmem:[#allocation2 + $0x71] sm:$0xff]
      %v445 = vld [vmem:[#allocation2 + $0x79] sm:$0xff]
      %v446 = vld [vmem:[#allocation2 + $0x81] sm:$0xff]
      %v447 = vld [vmem:[#allocation2 + $0x89] sm:$0xff]
      %v448 = vld [vmem:[#allocation2 + $0x91] sm:$0xff]
      %v449 = vld [vmem:[#allocation2 + $0x99] sm:$0xff]
      %v450 = vld [vmem:[#allocation2 + $0xa1] sm:$0xff]
      %v451 = vld [vmem:[#allocation2 + $0xa9] sm:$0xff]
      %v452 = vld [vmem:[#allocation2 + $0xb1] sm:$0xff]
      %v453 = vld [vmem:[#allocation2 + $0xb9] sm:$0xff]
      %v454 = vld [vmem:[#allocation2 + $0xc1] sm:$0xff]
      %v455 = vld [vmem:[#allocation2 + $0xc9] sm:$0xff]
      %v456 = vld [vmem:[#allocation2 + $0xd1] sm:$0xff]
      %v457 = vld [vmem:[#allocation2 + $0xd9] sm:$0xff]
      %v458 = vld [vmem:[#allocation2 + $0xe1] sm:$0xff]
      %v459 = vld [vmem:[#allocation2 + $0xe9] sm:$0xff]
      %v460 = vld [vmem:[#allocation2 + $0xf1] sm:$0xff]
      %v461 = vld [vmem:[#allocation2 + $0xf9] sm:$0xff]
      %v462 = vld [vmem:[#allocation2 + $0x101] sm:$0xff]
      %v463 = vld [vmem:[#allocation2 + $0x109] sm:$0xff]
      %v464 = vld [vmem:[#allocation2 + $0x111] sm:$0xff]
      %v465 = vld [vmem:[#allocation2 + $0x119] sm:$0xff]
      %502 = vrot.lane.b32.xlu0 %v430, 8
      %v503 = vpop.permute.xlu0 %502
      %504 = vrot.lane.b32.xlu0 %v431, 8
      %v505 = vpop.permute.xlu0 %504
      %506 = vrot.lane.b32.xlu0 %v432, 8
      %v507 = vpop.permute.xlu0 %506
      %508 = vrot.lane.b32.xlu0 %v433, 8
      %v509 = vpop.permute.xlu0 %508
      %510 = vrot.lane.b32.xlu0 %v434, 8
      %v511 = vpop.permute.xlu0 %510
      %512 = vrot.lane.b32.xlu0 %v435, 8
      %v513 = vpop.permute.xlu0 %512
      %514 = vrot.lane.b32.xlu0 %v436, 8
      %v515 = vpop.permute.xlu0 %514
      %516 = vrot.lane.b32.xlu0 %v437, 8
      %v517 = vpop.permute.xlu0 %516
      %518 = vrot.lane.b32.xlu0 %v438, 8
      %v519 = vpop.permute.xlu0 %518
      %520 = vrot.lane.b32.xlu0 %v439, 8
      %v521 = vpop.permute.xlu0 %520
      %522 = vrot.lane.b32.xlu0 %v440, 8
      %v523 = vpop.permute.xlu0 %522
      %524 = vrot.lane.b32.xlu0 %v441, 8
      %v525 = vpop.permute.xlu0 %524
      %526 = vrot.lane.b32.xlu0 %v442, 8
      %v527 = vpop.permute.xlu0 %526
      %528 = vrot.lane.b32.xlu0 %v443, 8
      %v529 = vpop.permute.xlu0 %528
      %530 = vrot.lane.b32.xlu0 %v444, 8
      %v531 = vpop.permute.xlu0 %530
      %532 = vrot.lane.b32.xlu0 %v445, 8
      %v533 = vpop.permute.xlu0 %532
      %534 = vrot.lane.b32.xlu0 %v446, 8
      %v535 = vpop.permute.xlu0 %534
      %536 = vrot.lane.b32.xlu0 %v447, 8
      %v537 = vpop.permute.xlu0 %536
      %538 = vrot.lane.b32.xlu0 %v448, 8
      %v539 = vpop.permute.xlu0 %538
      %540 = vrot.lane.b32.xlu0 %v449, 8
      %v541 = vpop.permute.xlu0 %540
      %542 = vrot.lane.b32.xlu0 %v450, 8
      %v543 = vpop.permute.xlu0 %542
      %544 = vrot.lane.b32.xlu0 %v451, 8
      %v545 = vpop.permute.xlu0 %544
      %546 = vrot.lane.b32.xlu0 %v452, 8
      %v547 = vpop.permute.xlu0 %546
      %548 = vrot.lane.b32.xlu0 %v453, 8
      %v549 = vpop.permute.xlu0 %548
      %550 = vrot.lane.b32.xlu0 %v454, 8
      %v551 = vpop.permute.xlu0 %550
      %552 = vrot.lane.b32.xlu0 %v455, 8
      %v553 = vpop.permute.xlu0 %552
      %554 = vrot.lane.b32.xlu0 %v456, 8
      %v555 = vpop.permute.xlu0 %554
      %556 = vrot.lane.b32.xlu0 %v457, 8
      %v557 = vpop.permute.xlu0 %556
      %558 = vrot.lane.b32.xlu0 %v458, 8
      %v559 = vpop.permute.xlu0 %558
      %560 = vrot.lane.b32.xlu0 %v459, 8
      %v561 = vpop.permute.xlu0 %560
      %562 = vrot.lane.b32.xlu0 %v460, 8
      %v563 = vpop.permute.xlu0 %562
      %564 = vrot.lane.b32.xlu0 %v461, 8
      %v565 = vpop.permute.xlu0 %564
      %566 = vrot.lane.b32.xlu0 %v462, 8
      %v567 = vpop.permute.xlu0 %566
      %568 = vrot.lane.b32.xlu0 %v463, 8
      %v569 = vpop.permute.xlu0 %568
      %570 = vrot.lane.b32.xlu0 %v464, 8
      %v571 = vpop.permute.xlu0 %570
      %572 = vrot.lane.b32.xlu0 %v465, 8
      %v573 = vpop.permute.xlu0 %572
      %vm610 = vcmask 130112
      %611 = vst.msk [vmem:[#allocation3] sm:$0xff] %vm610, %v503
      %612 = vst.msk [vmem:[#allocation3 + $0x8] sm:$0xff] %vm610, %v505
      %613 = vst.msk [vmem:[#allocation3 + $0x10] sm:$0xff] %vm610, %v507
      %614 = vst.msk [vmem:[#allocation3 + $0x18] sm:$0xff] %vm610, %v509
      %615 = vst.msk [vmem:[#allocation3 + $0x20] sm:$0xff] %vm610, %v511
      %616 = vst.msk [vmem:[#allocation3 + $0x28] sm:$0xff] %vm610, %v513
      %617 = vst.msk [vmem:[#allocation3 + $0x30] sm:$0xff] %vm610, %v515
      %618 = vst.msk [vmem:[#allocation3 + $0x38] sm:$0xff] %vm610, %v517
      %619 = vst.msk [vmem:[#allocation3 + $0x40] sm:$0xff] %vm610, %v519
      %620 = vst.msk [vmem:[#allocation3 + $0x48] sm:$0xff] %vm610, %v521
      %621 = vst.msk [vmem:[#allocation3 + $0x50] sm:$0xff] %vm610, %v523
      %622 = vst.msk [vmem:[#allocation3 + $0x58] sm:$0xff] %vm610, %v525
      %623 = vst.msk [vmem:[#allocation3 + $0x60] sm:$0xff] %vm610, %v527
      %624 = vst.msk [vmem:[#allocation3 + $0x68] sm:$0xff] %vm610, %v529
      %625 = vst.msk [vmem:[#allocation3 + $0x70] sm:$0xff] %vm610, %v531
      %626 = vst.msk [vmem:[#allocation3 + $0x78] sm:$0xff] %vm610, %v533
      %627 = vst.msk [vmem:[#allocation3 + $0x80] sm:$0xff] %vm610, %v535
      %628 = vst.msk [vmem:[#allocation3 + $0x88] sm:$0xff] %vm610, %v537
      %629 = vst.msk [vmem:[#allocation3 + $0x90] sm:$0xff] %vm610, %v539
      %630 = vst.msk [vmem:[#allocation3 + $0x98] sm:$0xff] %vm610, %v541
      %631 = vst.msk [vmem:[#allocation3 + $0xa0] sm:$0xff] %vm610, %v543
      %632 = vst.msk [vmem:[#allocation3 + $0xa8] sm:$0xff] %vm610, %v545
      %633 = vst.msk [vmem:[#allocation3 + $0xb0] sm:$0xff] %vm610, %v547
      %634 = vst.msk [vmem:[#allocation3 + $0xb8] sm:$0xff] %vm610, %v549
      %635 = vst.msk [vmem:[#allocation3 + $0xc0] sm:$0xff] %vm610, %v551
      %636 = vst.msk [vmem:[#allocation3 + $0xc8] sm:$0xff] %vm610, %v553
      %637 = vst.msk [vmem:[#allocation3 + $0xd0] sm:$0xff] %vm610, %v555
      %638 = vst.msk [vmem:[#allocation3 + $0xd8] sm:$0xff] %vm610, %v557
      %639 = vst.msk [vmem:[#allocation3 + $0xe0] sm:$0xff] %vm610, %v559
      %640 = vst.msk [vmem:[#allocation3 + $0xe8] sm:$0xff] %vm610, %v561
      %641 = vst.msk [vmem:[#allocation3 + $0xf0] sm:$0xff] %vm610, %v563
      %642 = vst.msk [vmem:[#allocation3 + $0xf8] sm:$0xff] %vm610, %v565
      %643 = vst.msk [vmem:[#allocation3 + $0x100] sm:$0xff] %vm610, %v567
      %644 = vst.msk [vmem:[#allocation3 + $0x108] sm:$0xff] %vm610, %v569
      %645 = vst.msk [vmem:[#allocation3 + $0x110] sm:$0xff] %vm610, %v571
      %646 = vst.msk [vmem:[#allocation3 + $0x118] sm:$0xff] %vm610, %v573
      %v647 = vld [vmem:[#allocation2 + $0x2] sm:$0xff]
      %v648 = vld [vmem:[#allocation2 + $0xa] sm:$0xff]
      %v649 = vld [vmem:[#allocation2 + $0x12] sm:$0xff]
      %v650 = vld [vmem:[#allocation2 + $0x1a] sm:$0xff]
      %v651 = vld [vmem:[#allocation2 + $0x22] sm:$0xff]
      %v652 = vld [vmem:[#allocation2 + $0x2a] sm:$0xff]
      %v653 = vld [vmem:[#allocation2 + $0x32] sm:$0xff]
      %v654 = vld [vmem:[#allocation2 + $0x3a] sm:$0xff]
      %v655 = vld [vmem:[#allocation2 + $0x42] sm:$0xff]
      %v656 = vld [vmem:[#allocation2 + $0x4a] sm:$0xff]
      %v657 = vld [vmem:[#allocation2 + $0x52] sm:$0xff]
      %v658 = vld [vmem:[#allocation2 + $0x5a] sm:$0xff]
      %v659 = vld [vmem:[#allocation2 + $0x62] sm:$0xff]
      %v660 = vld [vmem:[#allocation2 + $0x6a] sm:$0xff]
      %v661 = vld [vmem:[#allocation2 + $0x72] sm:$0xff]
      %v662 = vld [vmem:[#allocation2 + $0x7a] sm:$0xff]
      %v663 = vld [vmem:[#allocation2 + $0x82] sm:$0xff]
      %v664 = vld [vmem:[#allocation2 + $0x8a] sm:$0xff]
      %v665 = vld [vmem:[#allocation2 + $0x92] sm:$0xff]
      %v666 = vld [vmem:[#allocation2 + $0x9a] sm:$0xff]
      %v667 = vld [vmem:[#allocation2 + $0xa2] sm:$0xff]
      %v668 = vld [vmem:[#allocation2 + $0xaa] sm:$0xff]
      %v669 = vld [vmem:[#allocation2 + $0xb2] sm:$0xff]
      %v670 = vld [vmem:[#allocation2 + $0xba] sm:$0xff]
      %v671 = vld [vmem:[#allocation2 + $0xc2] sm:$0xff]
      %v672 = vld [vmem:[#allocation2 + $0xca] sm:$0xff]
      %v673 = vld [vmem:[#allocation2 + $0xd2] sm:$0xff]
      %v674 = vld [vmem:[#allocation2 + $0xda] sm:$0xff]
      %v675 = vld [vmem:[#allocation2 + $0xe2] sm:$0xff]
      %v676 = vld [vmem:[#allocation2 + $0xea] sm:$0xff]
      %v677 = vld [vmem:[#allocation2 + $0xf2] sm:$0xff]
      %v678 = vld [vmem:[#allocation2 + $0xfa] sm:$0xff]
      %v679 = vld [vmem:[#allocation2 + $0x102] sm:$0xff]
      %v680 = vld [vmem:[#allocation2 + $0x10a] sm:$0xff]
      %v681 = vld [vmem:[#allocation2 + $0x112] sm:$0xff]
      %v682 = vld [vmem:[#allocation2 + $0x11a] sm:$0xff]
      %719 = vrot.lane.b32.xlu0 %v647, 16
      %v720 = vpop.permute.xlu0 %719
      %721 = vrot.lane.b32.xlu0 %v648, 16
      %v722 = vpop.permute.xlu0 %721
      %723 = vrot.lane.b32.xlu0 %v649, 16
      %v724 = vpop.permute.xlu0 %723
      %725 = vrot.lane.b32.xlu0 %v650, 16
      %v726 = vpop.permute.xlu0 %725
      %727 = vrot.lane.b32.xlu0 %v651, 16
      %v728 = vpop.permute.xlu0 %727
      %729 = vrot.lane.b32.xlu0 %v652, 16
      %v730 = vpop.permute.xlu0 %729
      %731 = vrot.lane.b32.xlu0 %v653, 16
      %v732 = vpop.permute.xlu0 %731
      %733 = vrot.lane.b32.xlu0 %v654, 16
      %v734 = vpop.permute.xlu0 %733
      %735 = vrot.lane.b32.xlu0 %v655, 16
      %v736 = vpop.permute.xlu0 %735
      %737 = vrot.lane.b32.xlu0 %v656, 16
      %v738 = vpop.permute.xlu0 %737
      %739 = vrot.lane.b32.xlu0 %v657, 16
      %v740 = vpop.permute.xlu0 %739
      %741 = vrot.lane.b32.xlu0 %v658, 16
      %v742 = vpop.permute.xlu0 %741
      %743 = vrot.lane.b32.xlu0 %v659, 16
      %v744 = vpop.permute.xlu0 %743
      %745 = vrot.lane.b32.xlu0 %v660, 16
      %v746 = vpop.permute.xlu0 %745
      %747 = vrot.lane.b32.xlu0 %v661, 16
      %v748 = vpop.permute.xlu0 %747
      %749 = vrot.lane.b32.xlu0 %v662, 16
      %v750 = vpop.permute.xlu0 %749
      %751 = vrot.lane.b32.xlu0 %v663, 16
      %v752 = vpop.permute.xlu0 %751
      %753 = vrot.lane.b32.xlu0 %v664, 16
      %v754 = vpop.permute.xlu0 %753
      %755 = vrot.lane.b32.xlu0 %v665, 16
      %v756 = vpop.permute.xlu0 %755
      %757 = vrot.lane.b32.xlu0 %v666, 16
      %v758 = vpop.permute.xlu0 %757
      %759 = vrot.lane.b32.xlu0 %v667, 16
      %v760 = vpop.permute.xlu0 %759
      %761 = vrot.lane.b32.xlu0 %v668, 16
      %v762 = vpop.permute.xlu0 %761
      %763 = vrot.lane.b32.xlu0 %v669, 16
      %v764 = vpop.permute.xlu0 %763
      %765 = vrot.lane.b32.xlu0 %v670, 16
      %v766 = vpop.permute.xlu0 %765
      %767 = vrot.lane.b32.xlu0 %v671, 16
      %v768 = vpop.permute.xlu0 %767
      %769 = vrot.lane.b32.xlu0 %v672, 16
      %v770 = vpop.permute.xlu0 %769
      %771 = vrot.lane.b32.xlu0 %v673, 16
      %v772 = vpop.permute.xlu0 %771
      %773 = vrot.lane.b32.xlu0 %v674, 16
      %v774 = vpop.permute.xlu0 %773
      %775 = vrot.lane.b32.xlu0 %v675, 16
      %v776 = vpop.permute.xlu0 %775
      %777 = vrot.lane.b32.xlu0 %v676, 16
      %v778 = vpop.permute.xlu0 %777
      %779 = vrot.lane.b32.xlu0 %v677, 16
      %v780 = vpop.permute.xlu0 %779
      %781 = vrot.lane.b32.xlu0 %v678, 16
      %v782 = vpop.permute.xlu0 %781
      %783 = vrot.lane.b32.xlu0 %v679, 16
      %v784 = vpop.permute.xlu0 %783
      %785 = vrot.lane.b32.xlu0 %v680, 16
      %v786 = vpop.permute.xlu0 %785
      %787 = vrot.lane.b32.xlu0 %v681, 16
      %v788 = vpop.permute.xlu0 %787
      %789 = vrot.lane.b32.xlu0 %v682, 16
      %v790 = vpop.permute.xlu0 %789
      %vm827 = vcmask 195712
      %828 = vst.msk [vmem:[#allocation3] sm:$0xff] %vm827, %v720
      %829 = vst.msk [vmem:[#allocation3 + $0x8] sm:$0xff] %vm827, %v722
      %830 = vst.msk [vmem:[#allocation3 + $0x10] sm:$0xff] %vm827, %v724
      %831 = vst.msk [vmem:[#allocation3 + $0x18] sm:$0xff] %vm827, %v726
      %832 = vst.msk [vmem:[#allocation3 + $0x20] sm:$0xff] %vm827, %v728
      %833 = vst.msk [vmem:[#allocation3 + $0x28] sm:$0xff] %vm827, %v730
      %834 = vst.msk [vmem:[#allocation3 + $0x30] sm:$0xff] %vm827, %v732
      %835 = vst.msk [vmem:[#allocation3 + $0x38] sm:$0xff] %vm827, %v734
      %836 = vst.msk [vmem:[#allocation3 + $0x40] sm:$0xff] %vm827, %v736
      %837 = vst.msk [vmem:[#allocation3 + $0x48] sm:$0xff] %vm827, %v738
      %838 = vst.msk [vmem:[#allocation3 + $0x50] sm:$0xff] %vm827, %v740
      %839 = vst.msk [vmem:[#allocation3 + $0x58] sm:$0xff] %vm827, %v742
      %840 = vst.msk [vmem:[#allocation3 + $0x60] sm:$0xff] %vm827, %v744
      %841 = vst.msk [vmem:[#allocation3 + $0x68] sm:$0xff] %vm827, %v746
      %842 = vst.msk [vmem:[#allocation3 + $0x70] sm:$0xff] %vm827, %v748
      %843 = vst.msk [vmem:[#allocation3 + $0x78] sm:$0xff] %vm827, %v750
      %844 = vst.msk [vmem:[#allocation3 + $0x80] sm:$0xff] %vm827, %v752
      %845 = vst.msk [vmem:[#allocation3 + $0x88] sm:$0xff] %vm827, %v754
      %846 = vst.msk [vmem:[#allocation3 + $0x90] sm:$0xff] %vm827, %v756
      %847 = vst.msk [vmem:[#allocation3 + $0x98] sm:$0xff] %vm827, %v758
      %848 = vst.msk [vmem:[#allocation3 + $0xa0] sm:$0xff] %vm827, %v760
      %849 = vst.msk [vmem:[#allocation3 + $0xa8] sm:$0xff] %vm827, %v762
      %850 = vst.msk [vmem:[#allocation3 + $0xb0] sm:$0xff] %vm827, %v764
      %851 = vst.msk [vmem:[#allocation3 + $0xb8] sm:$0xff] %vm827, %v766
      %852 = vst.msk [vmem:[#allocation3 + $0xc0] sm:$0xff] %vm827, %v768
      %853 = vst.msk [vmem:[#allocation3 + $0xc8] sm:$0xff] %vm827, %v770
      %854 = vst.msk [vmem:[#allocation3 + $0xd0] sm:$0xff] %vm827, %v772
      %855 = vst.msk [vmem:[#allocation3 + $0xd8] sm:$0xff] %vm827, %v774
      %856 = vst.msk [vmem:[#allocation3 + $0xe0] sm:$0xff] %vm827, %v776
      %857 = vst.msk [vmem:[#allocation3 + $0xe8] sm:$0xff] %vm827, %v778
      %858 = vst.msk [vmem:[#allocation3 + $0xf0] sm:$0xff] %vm827, %v780
      %859 = vst.msk [vmem:[#allocation3 + $0xf8] sm:$0xff] %vm827, %v782
      %860 = vst.msk [vmem:[#allocation3 + $0x100] sm:$0xff] %vm827, %v784
      %861 = vst.msk [vmem:[#allocation3 + $0x108] sm:$0xff] %vm827, %v786
      %862 = vst.msk [vmem:[#allocation3 + $0x110] sm:$0xff] %vm827, %v788
      %863 = vst.msk [vmem:[#allocation3 + $0x118] sm:$0xff] %vm827, %v790
      %v864 = vld [vmem:[#allocation2 + $0x12] sm:$0xff]
      %v865 = vld [vmem:[#allocation2 + $0x1a] sm:$0xff]
      %v866 = vld [vmem:[#allocation2 + $0x22] sm:$0xff]
      %v867 = vld [vmem:[#allocation2 + $0x2a] sm:$0xff]
      %v868 = vld [vmem:[#allocation2 + $0x32] sm:$0xff]
      %v869 = vld [vmem:[#allocation2 + $0x3a] sm:$0xff]
      %v870 = vld [vmem:[#allocation2 + $0x42] sm:$0xff]
      %v871 = vld [vmem:[#allocation2 + $0x4a] sm:$0xff]
      %v872 = vld [vmem:[#allocation2 + $0x52] sm:$0xff]
      %v873 = vld [vmem:[#allocation2 + $0x5a] sm:$0xff]
      %v874 = vld [vmem:[#allocation2 + $0x62] sm:$0xff]
      %v875 = vld [vmem:[#allocation2 + $0x6a] sm:$0xff]
      %v876 = vld [vmem:[#allocation2 + $0x72] sm:$0xff]
      %v877 = vld [vmem:[#allocation2 + $0x7a] sm:$0xff]
      %v878 = vld [vmem:[#allocation2 + $0x82] sm:$0xff]
      %v879 = vld [vmem:[#allocation2 + $0x8a] sm:$0xff]
      %v880 = vld [vmem:[#allocation2 + $0x92] sm:$0xff]
      %v881 = vld [vmem:[#allocation2 + $0x9a] sm:$0xff]
      %v882 = vld [vmem:[#allocation2 + $0xa2] sm:$0xff]
      %v883 = vld [vmem:[#allocation2 + $0xaa] sm:$0xff]
      %v884 = vld [vmem:[#allocation2 + $0xb2] sm:$0xff]
      %v885 = vld [vmem:[#allocation2 + $0xba] sm:$0xff]
      %v886 = vld [vmem:[#allocation2 + $0xc2] sm:$0xff]
      %v887 = vld [vmem:[#allocation2 + $0xca] sm:$0xff]
      %v888 = vld [vmem:[#allocation2 + $0xd2] sm:$0xff]
      %v889 = vld [vmem:[#allocation2 + $0xda] sm:$0xff]
      %v890 = vld [vmem:[#allocation2 + $0xe2] sm:$0xff]
      %v891 = vld [vmem:[#allocation2 + $0xea] sm:$0xff]
      %v892 = vld [vmem:[#allocation2 + $0xf2] sm:$0xff]
      %v893 = vld [vmem:[#allocation2 + $0xfa] sm:$0xff]
      %v894 = vld [vmem:[#allocation2 + $0x102] sm:$0xff]
      %v895 = vld [vmem:[#allocation2 + $0x10a] sm:$0xff]
      %v896 = vld [vmem:[#allocation2 + $0x112] sm:$0xff]
      %v897 = vld [vmem:[#allocation2 + $0x11a] sm:$0xff]
      %v898 = vld [vmem:[#allocation2 + $0x122] sm:$0xff]
      %v899 = vld [vmem:[#allocation2 + $0x12a] sm:$0xff]
      %936 = vrot.lane.b32.xlu0 %v864, 24
      %v937 = vpop.permute.xlu0 %936
      %938 = vrot.lane.b32.xlu0 %v865, 24
      %v939 = vpop.permute.xlu0 %938
      %940 = vrot.lane.b32.xlu0 %v866, 24
      %v941 = vpop.permute.xlu0 %940
      %942 = vrot.lane.b32.xlu0 %v867, 24
      %v943 = vpop.permute.xlu0 %942
      %944 = vrot.lane.b32.xlu0 %v868, 24
      %v945 = vpop.permute.xlu0 %944
      %946 = vrot.lane.b32.xlu0 %v869, 24
      %v947 = vpop.permute.xlu0 %946
      %948 = vrot.lane.b32.xlu0 %v870, 24
      %v949 = vpop.permute.xlu0 %948
      %950 = vrot.lane.b32.xlu0 %v871, 24
      %v951 = vpop.permute.xlu0 %950
      %952 = vrot.lane.b32.xlu0 %v872, 24
      %v953 = vpop.permute.xlu0 %952
      %954 = vrot.lane.b32.xlu0 %v873, 24
      %v955 = vpop.permute.xlu0 %954
      %956 = vrot.lane.b32.xlu0 %v874, 24
      %v957 = vpop.permute.xlu0 %956
      %958 = vrot.lane.b32.xlu0 %v875, 24
      %v959 = vpop.permute.xlu0 %958
      %960 = vrot.lane.b32.xlu0 %v876, 24
      %v961 = vpop.permute.xlu0 %960
      %962 = vrot.lane.b32.xlu0 %v877, 24
      %v963 = vpop.permute.xlu0 %962
      %964 = vrot.lane.b32.xlu0 %v878, 24
      %v965 = vpop.permute.xlu0 %964
      %966 = vrot.lane.b32.xlu0 %v879, 24
      %v967 = vpop.permute.xlu0 %966
      %968 = vrot.lane.b32.xlu0 %v880, 24
      %v969 = vpop.permute.xlu0 %968
      %970 = vrot.lane.b32.xlu0 %v881, 24
      %v971 = vpop.permute.xlu0 %970
      %972 = vrot.lane.b32.xlu0 %v882, 24
      %v973 = vpop.permute.xlu0 %972
      %974 = vrot.lane.b32.xlu0 %v883, 24
      %v975 = vpop.permute.xlu0 %974
      %976 = vrot.lane.b32.xlu0 %v884, 24
      %v977 = vpop.permute.xlu0 %976
      %978 = vrot.lane.b32.xlu0 %v885, 24
      %v979 = vpop.permute.xlu0 %978
      %980 = vrot.lane.b32.xlu0 %v886, 24
      %v981 = vpop.permute.xlu0 %980
      %982 = vrot.lane.b32.xlu0 %v887, 24
      %v983 = vpop.permute.xlu0 %982
      %984 = vrot.lane.b32.xlu0 %v888, 24
      %v985 = vpop.permute.xlu0 %984
      %986 = vrot.lane.b32.xlu0 %v889, 24
      %v987 = vpop.permute.xlu0 %986
      %988 = vrot.lane.b32.xlu0 %v890, 24
      %v989 = vpop.permute.xlu0 %988
      %990 = vrot.lane.b32.xlu0 %v891, 24
      %v991 = vpop.permute.xlu0 %990
      %992 = vrot.lane.b32.xlu0 %v892, 24
      %v993 = vpop.permute.xlu0 %992
      %994 = vrot.lane.b32.xlu0 %v893, 24
      %v995 = vpop.permute.xlu0 %994
      %996 = vrot.lane.b32.xlu0 %v894, 24
      %v997 = vpop.permute.xlu0 %996
      %998 = vrot.lane.b32.xlu0 %v895, 24
      %v999 = vpop.permute.xlu0 %998
      %1000 = vrot.lane.b32.xlu0 %v896, 24
      %v1001 = vpop.permute.xlu0 %1000
      %1002 = vrot.lane.b32.xlu0 %v897, 24
      %v1003 = vpop.permute.xlu0 %1002
      %1004 = vrot.lane.b32.xlu0 %v898, 24
      %v1005 = vpop.permute.xlu0 %1004
      %1006 = vrot.lane.b32.xlu0 %v899, 24
      %v1007 = vpop.permute.xlu0 %1006
      %vm1044 = vcmask 261312
      %1045 = vst.msk [vmem:[#allocation3] sm:$0xff] %vm1044, %v937
      %1046 = vst.msk [vmem:[#allocation3 + $0x8] sm:$0xff] %vm1044, %v939
      %1047 = vst.msk [vmem:[#allocation3 + $0x10] sm:$0xff] %vm1044, %v941
      %1048 = vst.msk [vmem:[#allocation3 + $0x18] sm:$0xff] %vm1044, %v943
      %1049 = vst.msk [vmem:[#allocation3 + $0x20] sm:$0xff] %vm1044, %v945
      %1050 = vst.msk [vmem:[#allocation3 + $0x28] sm:$0xff] %vm1044, %v947
      %1051 = vst.msk [vmem:[#allocation3 + $0x30] sm:$0xff] %vm1044, %v949
      %1052 = vst.msk [vmem:[#allocation3 + $0x38] sm:$0xff] %vm1044, %v951
      %1053 = vst.msk [vmem:[#allocation3 + $0x40] sm:$0xff] %vm1044, %v953
      %1054 = vst.msk [vmem:[#allocation3 + $0x48] sm:$0xff] %vm1044, %v955
      %1055 = vst.msk [vmem:[#allocation3 + $0x50] sm:$0xff] %vm1044, %v957
      %1056 = vst.msk [vmem:[#allocation3 + $0x58] sm:$0xff] %vm1044, %v959
      %1057 = vst.msk [vmem:[#allocation3 + $0x60] sm:$0xff] %vm1044, %v961
      %1058 = vst.msk [vmem:[#allocation3 + $0x68] sm:$0xff] %vm1044, %v963
      %1059 = vst.msk [vmem:[#allocation3 + $0x70] sm:$0xff] %vm1044, %v965
      %1060 = vst.msk [vmem:[#allocation3 + $0x78] sm:$0xff] %vm1044, %v967
      %1061 = vst.msk [vmem:[#allocation3 + $0x80] sm:$0xff] %vm1044, %v969
      %1062 = vst.msk [vmem:[#allocation3 + $0x88] sm:$0xff] %vm1044, %v971
      %1063 = vst.msk [vmem:[#allocation3 + $0x90] sm:$0xff] %vm1044, %v973
      %1064 = vst.msk [vmem:[#allocation3 + $0x98] sm:$0xff] %vm1044, %v975
      %1065 = vst.msk [vmem:[#allocation3 + $0xa0] sm:$0xff] %vm1044, %v977
      %1066 = vst.msk [vmem:[#allocation3 + $0xa8] sm:$0xff] %vm1044, %v979
      %1067 = vst.msk [vmem:[#allocation3 + $0xb0] sm:$0xff] %vm1044, %v981
      %1068 = vst.msk [vmem:[#allocation3 + $0xb8] sm:$0xff] %vm1044, %v983
      %1069 = vst.msk [vmem:[#allocation3 + $0xc0] sm:$0xff] %vm1044, %v985
      %1070 = vst.msk [vmem:[#allocation3 + $0xc8] sm:$0xff] %vm1044, %v987
      %1071 = vst.msk [vmem:[#allocation3 + $0xd0] sm:$0xff] %vm1044, %v989
      %1072 = vst.msk [vmem:[#allocation3 + $0xd8] sm:$0xff] %vm1044, %v991
      %1073 = vst.msk [vmem:[#allocation3 + $0xe0] sm:$0xff] %vm1044, %v993
      %1074 = vst.msk [vmem:[#allocation3 + $0xe8] sm:$0xff] %vm1044, %v995
      %1075 = vst.msk [vmem:[#allocation3 + $0xf0] sm:$0xff] %vm1044, %v997
      %1076 = vst.msk [vmem:[#allocation3 + $0xf8] sm:$0xff] %vm1044, %v999
      %1077 = vst.msk [vmem:[#allocation3 + $0x100] sm:$0xff] %vm1044, %v1001
      %1078 = vst.msk [vmem:[#allocation3 + $0x108] sm:$0xff] %vm1044, %v1003
      %1079 = vst.msk [vmem:[#allocation3 + $0x110] sm:$0xff] %vm1044, %v1005
      %1080 = vst.msk [vmem:[#allocation3 + $0x118] sm:$0xff] %vm1044, %v1007
      %v1081 = vld [vmem:[#allocation2 + $0x13] sm:$0xff]
      %v1082 = vld [vmem:[#allocation2 + $0x1b] sm:$0xff]
      %v1083 = vld [vmem:[#allocation2 + $0x23] sm:$0xff]
      %v1084 = vld [vmem:[#allocation2 + $0x2b] sm:$0xff]
      %v1085 = vld [vmem:[#allocation2 + $0x33] sm:$0xff]
      %v1086 = vld [vmem:[#allocation2 + $0x3b] sm:$0xff]
      %v1087 = vld [vmem:[#allocation2 + $0x43] sm:$0xff]
      %v1088 = vld [vmem:[#allocation2 + $0x4b] sm:$0xff]
      %v1089 = vld [vmem:[#allocation2 + $0x53] sm:$0xff]
      %v1090 = vld [vmem:[#allocation2 + $0x5b] sm:$0xff]
      %v1091 = vld [vmem:[#allocation2 + $0x63] sm:$0xff]
      %v1092 = vld [vmem:[#allocation2 + $0x6b] sm:$0xff]
      %v1093 = vld [vmem:[#allocation2 + $0x73] sm:$0xff]
      %v1094 = vld [vmem:[#allocation2 + $0x7b] sm:$0xff]
      %v1095 = vld [vmem:[#allocation2 + $0x83] sm:$0xff]
      %v1096 = vld [vmem:[#allocation2 + $0x8b] sm:$0xff]
      %v1097 = vld [vmem:[#allocation2 + $0x93] sm:$0xff]
      %v1098 = vld [vmem:[#allocation2 + $0x9b] sm:$0xff]
      %v1099 = vld [vmem:[#allocation2 + $0xa3] sm:$0xff]
      %v1100 = vld [vmem:[#allocation2 + $0xab] sm:$0xff]
      %v1101 = vld [vmem:[#allocation2 + $0xb3] sm:$0xff]
      %v1102 = vld [vmem:[#allocation2 + $0xbb] sm:$0xff]
      %v1103 = vld [vmem:[#allocation2 + $0xc3] sm:$0xff]
      %v1104 = vld [vmem:[#allocation2 + $0xcb] sm:$0xff]
      %v1105 = vld [vmem:[#allocation2 + $0xd3] sm:$0xff]
      %v1106 = vld [vmem:[#allocation2 + $0xdb] sm:$0xff]
      %v1107 = vld [vmem:[#allocation2 + $0xe3] sm:$0xff]
      %v1108 = vld [vmem:[#allocation2 + $0xeb] sm:$0xff]
      %v1109 = vld [vmem:[#allocation2 + $0xf3] sm:$0xff]
      %v1110 = vld [vmem:[#allocation2 + $0xfb] sm:$0xff]
      %v1111 = vld [vmem:[#allocation2 + $0x103] sm:$0xff]
      %v1112 = vld [vmem:[#allocation2 + $0x10b] sm:$0xff]
      %v1113 = vld [vmem:[#allocation2 + $0x113] sm:$0xff]
      %v1114 = vld [vmem:[#allocation2 + $0x11b] sm:$0xff]
      %v1115 = vld [vmem:[#allocation2 + $0x123] sm:$0xff]
      %v1116 = vld [vmem:[#allocation2 + $0x12b] sm:$0xff]
      %1153 = vrot.lane.b32.xlu0 %v1081, 32
      %v1154 = vpop.permute.xlu0 %1153
      %1155 = vrot.lane.b32.xlu0 %v1082, 32
      %v1156 = vpop.permute.xlu0 %1155
      %1157 = vrot.lane.b32.xlu0 %v1083, 32
      %v1158 = vpop.permute.xlu0 %1157
      %1159 = vrot.lane.b32.xlu0 %v1084, 32
      %v1160 = vpop.permute.xlu0 %1159
      %1161 = vrot.lane.b32.xlu0 %v1085, 32
      %v1162 = vpop.permute.xlu0 %1161
      %1163 = vrot.lane.b32.xlu0 %v1086, 32
      %v1164 = vpop.permute.xlu0 %1163
      %1165 = vrot.lane.b32.xlu0 %v1087, 32
      %v1166 = vpop.permute.xlu0 %1165
      %1167 = vrot.lane.b32.xlu0 %v1088, 32
      %v1168 = vpop.permute.xlu0 %1167
      %1169 = vrot.lane.b32.xlu0 %v1089, 32
      %v1170 = vpop.permute.xlu0 %1169
      %1171 = vrot.lane.b32.xlu0 %v1090, 32
      %v1172 = vpop.permute.xlu0 %1171
      %1173 = vrot.lane.b32.xlu0 %v1091, 32
      %v1174 = vpop.permute.xlu0 %1173
      %1175 = vrot.lane.b32.xlu0 %v1092, 32
      %v1176 = vpop.permute.xlu0 %1175
      %1177 = vrot.lane.b32.xlu0 %v1093, 32
      %v1178 = vpop.permute.xlu0 %1177
      %1179 = vrot.lane.b32.xlu0 %v1094, 32
      %v1180 = vpop.permute.xlu0 %1179
      %1181 = vrot.lane.b32.xlu0 %v1095, 32
      %v1182 = vpop.permute.xlu0 %1181
      %1183 = vrot.lane.b32.xlu0 %v1096, 32
      %v1184 = vpop.permute.xlu0 %1183
      %1185 = vrot.lane.b32.xlu0 %v1097, 32
      %v1186 = vpop.permute.xlu0 %1185
      %1187 = vrot.lane.b32.xlu0 %v1098, 32
      %v1188 = vpop.permute.xlu0 %1187
      %1189 = vrot.lane.b32.xlu0 %v1099, 32
      %v1190 = vpop.permute.xlu0 %1189
      %1191 = vrot.lane.b32.xlu0 %v1100, 32
      %v1192 = vpop.permute.xlu0 %1191
      %1193 = vrot.lane.b32.xlu0 %v1101, 32
      %v1194 = vpop.permute.xlu0 %1193
      %1195 = vrot.lane.b32.xlu0 %v1102, 32
      %v1196 = vpop.permute.xlu0 %1195
      %1197 = vrot.lane.b32.xlu0 %v1103, 32
      %v1198 = vpop.permute.xlu0 %1197
      %1199 = vrot.lane.b32.xlu0 %v1104, 32
      %v1200 = vpop.permute.xlu0 %1199
      %1201 = vrot.lane.b32.xlu0 %v1105, 32
      %v1202 = vpop.permute.xlu0 %1201
      %1203 = vrot.lane.b32.xlu0 %v1106, 32
      %v1204 = vpop.permute.xlu0 %1203
      %1205 = vrot.lane.b32.xlu0 %v1107, 32
      %v1206 = vpop.permute.xlu0 %1205
      %1207 = vrot.lane.b32.xlu0 %v1108, 32
      %v1208 = vpop.permute.xlu0 %1207
      %1209 = vrot.lane.b32.xlu0 %v1109, 32
      %v1210 = vpop.permute.xlu0 %1209
      %1211 = vrot.lane.b32.xlu0 %v1110, 32
      %v1212 = vpop.permute.xlu0 %1211
      %1213 = vrot.lane.b32.xlu0 %v1111, 32
      %v1214 = vpop.permute.xlu0 %1213
      %1215 = vrot.lane.b32.xlu0 %v1112, 32
      %v1216 = vpop.permute.xlu0 %1215
      %1217 = vrot.lane.b32.xlu0 %v1113, 32
      %v1218 = vpop.permute.xlu0 %1217
      %1219 = vrot.lane.b32.xlu0 %v1114, 32
      %v1220 = vpop.permute.xlu0 %1219
      %1221 = vrot.lane.b32.xlu0 %v1115, 32
      %v1222 = vpop.permute.xlu0 %1221
      %1223 = vrot.lane.b32.xlu0 %v1116, 32
      %v1224 = vpop.permute.xlu0 %1223
      %vm1261 = vcmask 326912
      %1262 = vst.msk [vmem:[#allocation3] sm:$0xff] %vm1261, %v1154
      %1263 = vst.msk [vmem:[#allocation3 + $0x8] sm:$0xff] %vm1261, %v1156
      %1264 = vst.msk [vmem:[#allocation3 + $0x10] sm:$0xff] %vm1261, %v1158
      %1265 = vst.msk [vmem:[#allocation3 + $0x18] sm:$0xff] %vm1261, %v1160
      %1266 = vst.msk [vmem:[#allocation3 + $0x20] sm:$0xff] %vm1261, %v1162
      %1267 = vst.msk [vmem:[#allocation3 + $0x28] sm:$0xff] %vm1261, %v1164
      %1268 = vst.msk [vmem:[#allocation3 + $0x30] sm:$0xff] %vm1261, %v1166
      %1269 = vst.msk [vmem:[#allocation3 + $0x38] sm:$0xff] %vm1261, %v1168
      %1270 = vst.msk [vmem:[#allocation3 + $0x40] sm:$0xff] %vm1261, %v1170
      %1271 = vst.msk [vmem:[#allocation3 + $0x48] sm:$0xff] %vm1261, %v1172
      %1272 = vst.msk [vmem:[#allocation3 + $0x50] sm:$0xff] %vm1261, %v1174
      %1273 = vst.msk [vmem:[#allocation3 + $0x58] sm:$0xff] %vm1261, %v1176
      %1274 = vst.msk [vmem:[#allocation3 + $0x60] sm:$0xff] %vm1261, %v1178
      %1275 = vst.msk [vmem:[#allocation3 + $0x68] sm:$0xff] %vm1261, %v1180
      %1276 = vst.msk [vmem:[#allocation3 + $0x70] sm:$0xff] %vm1261, %v1182
      %1277 = vst.msk [vmem:[#allocation3 + $0x78] sm:$0xff] %vm1261, %v1184
      %1278 = vst.msk [vmem:[#allocation3 + $0x80] sm:$0xff] %vm1261, %v1186
      %1279 = vst.msk [vmem:[#allocation3 + $0x88] sm:$0xff] %vm1261, %v1188
      %1280 = vst.msk [vmem:[#allocation3 + $0x90] sm:$0xff] %vm1261, %v1190
      %1281 = vst.msk [vmem:[#allocation3 + $0x98] sm:$0xff] %vm1261, %v1192
      %1282 = vst.msk [vmem:[#allocation3 + $0xa0] sm:$0xff] %vm1261, %v1194
      %1283 = vst.msk [vmem:[#allocation3 + $0xa8] sm:$0xff] %vm1261, %v1196
      %1284 = vst.msk [vmem:[#allocation3 + $0xb0] sm:$0xff] %vm1261, %v1198
      %1285 = vst.msk [vmem:[#allocation3 + $0xb8] sm:$0xff] %vm1261, %v1200
      %1286 = vst.msk [vmem:[#allocation3 + $0xc0] sm:$0xff] %vm1261, %v1202
      %1287 = vst.msk [vmem:[#allocation3 + $0xc8] sm:$0xff] %vm1261, %v1204
      %1288 = vst.msk [vmem:[#allocation3 + $0xd0] sm:$0xff] %vm1261, %v1206
      %1289 = vst.msk [vmem:[#allocation3 + $0xd8] sm:$0xff] %vm1261, %v1208
      %1290 = vst.msk [vmem:[#allocation3 + $0xe0] sm:$0xff] %vm1261, %v1210
      %1291 = vst.msk [vmem:[#allocation3 + $0xe8] sm:$0xff] %vm1261, %v1212
      %1292 = vst.msk [vmem:[#allocation3 + $0xf0] sm:$0xff] %vm1261, %v1214
      %1293 = vst.msk [vmem:[#allocation3 + $0xf8] sm:$0xff] %vm1261, %v1216
      %1294 = vst.msk [vmem:[#allocation3 + $0x100] sm:$0xff] %vm1261, %v1218
      %1295 = vst.msk [vmem:[#allocation3 + $0x108] sm:$0xff] %vm1261, %v1220
      %1296 = vst.msk [vmem:[#allocation3 + $0x110] sm:$0xff] %vm1261, %v1222
      %1297 = vst.msk [vmem:[#allocation3 + $0x118] sm:$0xff] %vm1261, %v1224
      %v1298 = vld [vmem:[#allocation2 + $0x14] sm:$0xff]
      %v1299 = vld [vmem:[#allocation2 + $0x1c] sm:$0xff]
      %v1300 = vld [vmem:[#allocation2 + $0x24] sm:$0xff]
      %v1301 = vld [vmem:[#allocation2 + $0x2c] sm:$0xff]
      %v1302 = vld [vmem:[#allocation2 + $0x34] sm:$0xff]
      %v1303 = vld [vmem:[#allocation2 + $0x3c] sm:$0xff]
      %v1304 = vld [vmem:[#allocation2 + $0x44] sm:$0xff]
      %v1305 = vld [vmem:[#allocation2 + $0x4c] sm:$0xff]
      %v1306 = vld [vmem:[#allocation2 + $0x54] sm:$0xff]
      %v1307 = vld [vmem:[#allocation2 + $0x5c] sm:$0xff]
      %v1308 = vld [vmem:[#allocation2 + $0x64] sm:$0xff]
      %v1309 = vld [vmem:[#allocation2 + $0x6c] sm:$0xff]
      %v1310 = vld [vmem:[#allocation2 + $0x74] sm:$0xff]
      %v1311 = vld [vmem:[#allocation2 + $0x7c] sm:$0xff]
      %v1312 = vld [vmem:[#allocation2 + $0x84] sm:$0xff]
      %v1313 = vld [vmem:[#allocation2 + $0x8c] sm:$0xff]
      %v1314 = vld [vmem:[#allocation2 + $0x94] sm:$0xff]
      %v1315 = vld [vmem:[#allocation2 + $0x9c] sm:$0xff]
      %v1316 = vld [vmem:[#allocation2 + $0xa4] sm:$0xff]
      %v1317 = vld [vmem:[#allocation2 + $0xac] sm:$0xff]
      %v1318 = vld [vmem:[#allocation2 + $0xb4] sm:$0xff]
      %v1319 = vld [vmem:[#allocation2 + $0xbc] sm:$0xff]
      %v1320 = vld [vmem:[#allocation2 + $0xc4] sm:$0xff]
      %v1321 = vld [vmem:[#allocation2 + $0xcc] sm:$0xff]
      %v1322 = vld [vmem:[#allocation2 + $0xd4] sm:$0xff]
      %v1323 = vld [vmem:[#allocation2 + $0xdc] sm:$0xff]
      %v1324 = vld [vmem:[#allocation2 + $0xe4] sm:$0xff]
      %v1325 = vld [vmem:[#allocation2 + $0xec] sm:$0xff]
      %v1326 = vld [vmem:[#allocation2 + $0xf4] sm:$0xff]
      %v1327 = vld [vmem:[#allocation2 + $0xfc] sm:$0xff]
      %v1328 = vld [vmem:[#allocation2 + $0x104] sm:$0xff]
      %v1329 = vld [vmem:[#allocation2 + $0x10c] sm:$0xff]
      %v1330 = vld [vmem:[#allocation2 + $0x114] sm:$0xff]
      %v1331 = vld [vmem:[#allocation2 + $0x11c] sm:$0xff]
      %v1332 = vld [vmem:[#allocation2 + $0x124] sm:$0xff]
      %v1333 = vld [vmem:[#allocation2 + $0x12c] sm:$0xff]
      %1370 = vrot.lane.b32.xlu0 %v1298, 40
      %v1371 = vpop.permute.xlu0 %1370
      %1372 = vrot.lane.b32.xlu0 %v1299, 40
      %v1373 = vpop.permute.xlu0 %1372
      %1374 = vrot.lane.b32.xlu0 %v1300, 40
      %v1375 = vpop.permute.xlu0 %1374
      %1376 = vrot.lane.b32.xlu0 %v1301, 40
      %v1377 = vpop.permute.xlu0 %1376
      %1378 = vrot.lane.b32.xlu0 %v1302, 40
      %v1379 = vpop.permute.xlu0 %1378
      %1380 = vrot.lane.b32.xlu0 %v1303, 40
      %v1381 = vpop.permute.xlu0 %1380
      %1382 = vrot.lane.b32.xlu0 %v1304, 40
      %v1383 = vpop.permute.xlu0 %1382
      %1384 = vrot.lane.b32.xlu0 %v1305, 40
      %v1385 = vpop.permute.xlu0 %1384
      %1386 = vrot.lane.b32.xlu0 %v1306, 40
      %v1387 = vpop.permute.xlu0 %1386
      %1388 = vrot.lane.b32.xlu0 %v1307, 40
      %v1389 = vpop.permute.xlu0 %1388
      %1390 = vrot.lane.b32.xlu0 %v1308, 40
      %v1391 = vpop.permute.xlu0 %1390
      %1392 = vrot.lane.b32.xlu0 %v1309, 40
      %v1393 = vpop.permute.xlu0 %1392
      %1394 = vrot.lane.b32.xlu0 %v1310, 40
      %v1395 = vpop.permute.xlu0 %1394
      %1396 = vrot.lane.b32.xlu0 %v1311, 40
      %v1397 = vpop.permute.xlu0 %1396
      %1398 = vrot.lane.b32.xlu0 %v1312, 40
      %v1399 = vpop.permute.xlu0 %1398
      %1400 = vrot.lane.b32.xlu0 %v1313, 40
      %v1401 = vpop.permute.xlu0 %1400
      %1402 = vrot.lane.b32.xlu0 %v1314, 40
      %v1403 = vpop.permute.xlu0 %1402
      %1404 = vrot.lane.b32.xlu0 %v1315, 40
      %v1405 = vpop.permute.xlu0 %1404
      %1406 = vrot.lane.b32.xlu0 %v1316, 40
      %v1407 = vpop.permute.xlu0 %1406
      %1408 = vrot.lane.b32.xlu0 %v1317, 40
      %v1409 = vpop.permute.xlu0 %1408
      %1410 = vrot.lane.b32.xlu0 %v1318, 40
      %v1411 = vpop.permute.xlu0 %1410
      %1412 = vrot.lane.b32.xlu0 %v1319, 40
      %v1413 = vpop.permute.xlu0 %1412
      %1414 = vrot.lane.b32.xlu0 %v1320, 40
      %v1415 = vpop.permute.xlu0 %1414
      %1416 = vrot.lane.b32.xlu0 %v1321, 40
      %v1417 = vpop.permute.xlu0 %1416
      %1418 = vrot.lane.b32.xlu0 %v1322, 40
      %v1419 = vpop.permute.xlu0 %1418
      %1420 = vrot.lane.b32.xlu0 %v1323, 40
      %v1421 = vpop.permute.xlu0 %1420
      %1422 = vrot.lane.b32.xlu0 %v1324, 40
      %v1423 = vpop.permute.xlu0 %1422
      %1424 = vrot.lane.b32.xlu0 %v1325, 40
      %v1425 = vpop.permute.xlu0 %1424
      %1426 = vrot.lane.b32.xlu0 %v1326, 40
      %v1427 = vpop.permute.xlu0 %1426
      %1428 = vrot.lane.b32.xlu0 %v1327, 40
      %v1429 = vpop.permute.xlu0 %1428
      %1430 = vrot.lane.b32.xlu0 %v1328, 40
      %v1431 = vpop.permute.xlu0 %1430
      %1432 = vrot.lane.b32.xlu0 %v1329, 40
      %v1433 = vpop.permute.xlu0 %1432
      %1434 = vrot.lane.b32.xlu0 %v1330, 40
      %v1435 = vpop.permute.xlu0 %1434
      %1436 = vrot.lane.b32.xlu0 %v1331, 40
      %v1437 = vpop.permute.xlu0 %1436
      %1438 = vrot.lane.b32.xlu0 %v1332, 40
      %v1439 = vpop.permute.xlu0 %1438
      %1440 = vrot.lane.b32.xlu0 %v1333, 40
      %v1441 = vpop.permute.xlu0 %1440
      %vm1478 = vcmask 392512
      %1479 = vst.msk [vmem:[#allocation3] sm:$0xff] %vm1478, %v1371
      %1480 = vst.msk [vmem:[#allocation3 + $0x8] sm:$0xff] %vm1478, %v1373
      %1481 = vst.msk [vmem:[#allocation3 + $0x10] sm:$0xff] %vm1478, %v1375
      %1482 = vst.msk [vmem:[#allocation3 + $0x18] sm:$0xff] %vm1478, %v1377
      %1483 = vst.msk [vmem:[#allocation3 + $0x20] sm:$0xff] %vm1478, %v1379
      %1484 = vst.msk [vmem:[#allocation3 + $0x28] sm:$0xff] %vm1478, %v1381
      %1485 = vst.msk [vmem:[#allocation3 + $0x30] sm:$0xff] %vm1478, %v1383
      %1486 = vst.msk [vmem:[#allocation3 + $0x38] sm:$0xff] %vm1478, %v1385
      %1487 = vst.msk [vmem:[#allocation3 + $0x40] sm:$0xff] %vm1478, %v1387
      %1488 = vst.msk [vmem:[#allocation3 + $0x48] sm:$0xff] %vm1478, %v1389
      %1489 = vst.msk [vmem:[#allocation3 + $0x50] sm:$0xff] %vm1478, %v1391
      %1490 = vst.msk [vmem:[#allocation3 + $0x58] sm:$0xff] %vm1478, %v1393
      %1491 = vst.msk [vmem:[#allocation3 + $0x60] sm:$0xff] %vm1478, %v1395
      %1492 = vst.msk [vmem:[#allocation3 + $0x68] sm:$0xff] %vm1478, %v1397
      %1493 = vst.msk [vmem:[#allocation3 + $0x70] sm:$0xff] %vm1478, %v1399
      %1494 = vst.msk [vmem:[#allocation3 + $0x78] sm:$0xff] %vm1478, %v1401
      %1495 = vst.msk [vmem:[#allocation3 + $0x80] sm:$0xff] %vm1478, %v1403
      %1496 = vst.msk [vmem:[#allocation3 + $0x88] sm:$0xff] %vm1478, %v1405
      %1497 = vst.msk [vmem:[#allocation3 + $0x90] sm:$0xff] %vm1478, %v1407
      %1498 = vst.msk [vmem:[#allocation3 + $0x98] sm:$0xff] %vm1478, %v1409
      %1499 = vst.msk [vmem:[#allocation3 + $0xa0] sm:$0xff] %vm1478, %v1411
      %1500 = vst.msk [vmem:[#allocation3 + $0xa8] sm:$0xff] %vm1478, %v1413
      %1501 = vst.msk [vmem:[#allocation3 + $0xb0] sm:$0xff] %vm1478, %v1415
      %1502 = vst.msk [vmem:[#allocation3 + $0xb8] sm:$0xff] %vm1478, %v1417
      %1503 = vst.msk [vmem:[#allocation3 + $0xc0] sm:$0xff] %vm1478, %v1419
      %1504 = vst.msk [vmem:[#allocation3 + $0xc8] sm:$0xff] %vm1478, %v1421
      %1505 = vst.msk [vmem:[#allocation3 + $0xd0] sm:$0xff] %vm1478, %v1423
      %1506 = vst.msk [vmem:[#allocation3 + $0xd8] sm:$0xff] %vm1478, %v1425
      %1507 = vst.msk [vmem:[#allocation3 + $0xe0] sm:$0xff] %vm1478, %v1427
      %1508 = vst.msk [vmem:[#allocation3 + $0xe8] sm:$0xff] %vm1478, %v1429
      %1509 = vst.msk [vmem:[#allocation3 + $0xf0] sm:$0xff] %vm1478, %v1431
      %1510 = vst.msk [vmem:[#allocation3 + $0xf8] sm:$0xff] %vm1478, %v1433
      %1511 = vst.msk [vmem:[#allocation3 + $0x100] sm:$0xff] %vm1478, %v1435
      %1512 = vst.msk [vmem:[#allocation3 + $0x108] sm:$0xff] %vm1478, %v1437
      %1513 = vst.msk [vmem:[#allocation3 + $0x110] sm:$0xff] %vm1478, %v1439
      %1514 = vst.msk [vmem:[#allocation3 + $0x118] sm:$0xff] %vm1478, %v1441
      %v1515 = vld [vmem:[#allocation2 + $0x24] sm:$0xff]
      %v1516 = vld [vmem:[#allocation2 + $0x2c] sm:$0xff]
      %v1517 = vld [vmem:[#allocation2 + $0x34] sm:$0xff]
      %v1518 = vld [vmem:[#allocation2 + $0x3c] sm:$0xff]
      %v1519 = vld [vmem:[#allocation2 + $0x44] sm:$0xff]
      %v1520 = vld [vmem:[#allocation2 + $0x4c] sm:$0xff]
      %v1521 = vld [vmem:[#allocation2 + $0x54] sm:$0xff]
      %v1522 = vld [vmem:[#allocation2 + $0x5c] sm:$0xff]
      %v1523 = vld [vmem:[#allocation2 + $0x64] sm:$0xff]
      %v1524 = vld [vmem:[#allocation2 + $0x6c] sm:$0xff]
      %v1525 = vld [vmem:[#allocation2 + $0x74] sm:$0xff]
      %v1526 = vld [vmem:[#allocation2 + $0x7c] sm:$0xff]
      %v1527 = vld [vmem:[#allocation2 + $0x84] sm:$0xff]
      %v1528 = vld [vmem:[#allocation2 + $0x8c] sm:$0xff]
      %v1529 = vld [vmem:[#allocation2 + $0x94] sm:$0xff]
      %v1530 = vld [vmem:[#allocation2 + $0x9c] sm:$0xff]
      %v1531 = vld [vmem:[#allocation2 + $0xa4] sm:$0xff]
      %v1532 = vld [vmem:[#allocation2 + $0xac] sm:$0xff]
      %v1533 = vld [vmem:[#allocation2 + $0xb4] sm:$0xff]
      %v1534 = vld [vmem:[#allocation2 + $0xbc] sm:$0xff]
      %v1535 = vld [vmem:[#allocation2 + $0xc4] sm:$0xff]
      %v1536 = vld [vmem:[#allocation2 + $0xcc] sm:$0xff]
      %v1537 = vld [vmem:[#allocation2 + $0xd4] sm:$0xff]
      %v1538 = vld [vmem:[#allocation2 + $0xdc] sm:$0xff]
      %v1539 = vld [vmem:[#allocation2 + $0xe4] sm:$0xff]
      %v1540 = vld [vmem:[#allocation2 + $0xec] sm:$0xff]
      %v1541 = vld [vmem:[#allocation2 + $0xf4] sm:$0xff]
      %v1542 = vld [vmem:[#allocation2 + $0xfc] sm:$0xff]
      %v1543 = vld [vmem:[#allocation2 + $0x104] sm:$0xff]
      %v1544 = vld [vmem:[#allocation2 + $0x10c] sm:$0xff]
      %v1545 = vld [vmem:[#allocation2 + $0x114] sm:$0xff]
      %v1546 = vld [vmem:[#allocation2 + $0x11c] sm:$0xff]
      %v1547 = vld [vmem:[#allocation2 + $0x124] sm:$0xff]
      %v1548 = vld [vmem:[#allocation2 + $0x12c] sm:$0xff]
      %v1549 = vld [vmem:[#allocation2 + $0x134] sm:$0xff]
      %v1550 = vld [vmem:[#allocation2 + $0x13c] sm:$0xff]
      %1587 = vrot.lane.b32.xlu0 %v1515, 48
      %v1588 = vpop.permute.xlu0 %1587
      %1589 = vrot.lane.b32.xlu0 %v1516, 48
      %v1590 = vpop.permute.xlu0 %1589
      %1591 = vrot.lane.b32.xlu0 %v1517, 48
      %v1592 = vpop.permute.xlu0 %1591
      %1593 = vrot.lane.b32.xlu0 %v1518, 48
      %v1594 = vpop.permute.xlu0 %1593
      %1595 = vrot.lane.b32.xlu0 %v1519, 48
      %v1596 = vpop.permute.xlu0 %1595
      %1597 = vrot.lane.b32.xlu0 %v1520, 48
      %v1598 = vpop.permute.xlu0 %1597
      %1599 = vrot.lane.b32.xlu0 %v1521, 48
      %v1600 = vpop.permute.xlu0 %1599
      %1601 = vrot.lane.b32.xlu0 %v1522, 48
      %v1602 = vpop.permute.xlu0 %1601
      %1603 = vrot.lane.b32.xlu0 %v1523, 48
      %v1604 = vpop.permute.xlu0 %1603
      %1605 = vrot.lane.b32.xlu0 %v1524, 48
      %v1606 = vpop.permute.xlu0 %1605
      %1607 = vrot.lane.b32.xlu0 %v1525, 48
      %v1608 = vpop.permute.xlu0 %1607
      %1609 = vrot.lane.b32.xlu0 %v1526, 48
      %v1610 = vpop.permute.xlu0 %1609
      %1611 = vrot.lane.b32.xlu0 %v1527, 48
      %v1612 = vpop.permute.xlu0 %1611
      %1613 = vrot.lane.b32.xlu0 %v1528, 48
      %v1614 = vpop.permute.xlu0 %1613
      %1615 = vrot.lane.b32.xlu0 %v1529, 48
      %v1616 = vpop.permute.xlu0 %1615
      %1617 = vrot.lane.b32.xlu0 %v1530, 48
      %v1618 = vpop.permute.xlu0 %1617
      %1619 = vrot.lane.b32.xlu0 %v1531, 48
      %v1620 = vpop.permute.xlu0 %1619
      %1621 = vrot.lane.b32.xlu0 %v1532, 48
      %v1622 = vpop.permute.xlu0 %1621
      %1623 = vrot.lane.b32.xlu0 %v1533, 48
      %v1624 = vpop.permute.xlu0 %1623
      %1625 = vrot.lane.b32.xlu0 %v1534, 48
      %v1626 = vpop.permute.xlu0 %1625
      %1627 = vrot.lane.b32.xlu0 %v1535, 48
      %v1628 = vpop.permute.xlu0 %1627
      %1629 = vrot.lane.b32.xlu0 %v1536, 48
      %v1630 = vpop.permute.xlu0 %1629
      %1631 = vrot.lane.b32.xlu0 %v1537, 48
      %v1632 = vpop.permute.xlu0 %1631
      %1633 = vrot.lane.b32.xlu0 %v1538, 48
      %v1634 = vpop.permute.xlu0 %1633
      %1635 = vrot.lane.b32.xlu0 %v1539, 48
      %v1636 = vpop.permute.xlu0 %1635
      %1637 = vrot.lane.b32.xlu0 %v1540, 48
      %v1638 = vpop.permute.xlu0 %1637
      %1639 = vrot.lane.b32.xlu0 %v1541, 48
      %v1640 = vpop.permute.xlu0 %1639
      %1641 = vrot.lane.b32.xlu0 %v1542, 48
      %v1642 = vpop.permute.xlu0 %1641
      %1643 = vrot.lane.b32.xlu0 %v1543, 48
      %v1644 = vpop.permute.xlu0 %1643
      %1645 = vrot.lane.b32.xlu0 %v1544, 48
      %v1646 = vpop.permute.xlu0 %1645
      %1647 = vrot.lane.b32.xlu0 %v1545, 48
      %v1648 = vpop.permute.xlu0 %1647
      %1649 = vrot.lane.b32.xlu0 %v1546, 48
      %v1650 = vpop.permute.xlu0 %1649
      %1651 = vrot.lane.b32.xlu0 %v1547, 48
      %v1652 = vpop.permute.xlu0 %1651
      %1653 = vrot.lane.b32.xlu0 %v1548, 48
      %v1654 = vpop.permute.xlu0 %1653
      %1655 = vrot.lane.b32.xlu0 %v1549, 48
      %v1656 = vpop.permute.xlu0 %1655
      %1657 = vrot.lane.b32.xlu0 %v1550, 48
      %v1658 = vpop.permute.xlu0 %1657
      %vm1695 = vcmask 458112
      %1696 = vst.msk [vmem:[#allocation3] sm:$0xff] %vm1695, %v1588
      %1697 = vst.msk [vmem:[#allocation3 + $0x8] sm:$0xff] %vm1695, %v1590
      %1698 = vst.msk [vmem:[#allocation3 + $0x10] sm:$0xff] %vm1695, %v1592
      %1699 = vst.msk [vmem:[#allocation3 + $0x18] sm:$0xff] %vm1695, %v1594
      %1700 = vst.msk [vmem:[#allocation3 + $0x20] sm:$0xff] %vm1695, %v1596
      %1701 = vst.msk [vmem:[#allocation3 + $0x28] sm:$0xff] %vm1695, %v1598
      %1702 = vst.msk [vmem:[#allocation3 + $0x30] sm:$0xff] %vm1695, %v1600
      %1703 = vst.msk [vmem:[#allocation3 + $0x38] sm:$0xff] %vm1695, %v1602
      %1704 = vst.msk [vmem:[#allocation3 + $0x40] sm:$0xff] %vm1695, %v1604
      %1705 = vst.msk [vmem:[#allocation3 + $0x48] sm:$0xff] %vm1695, %v1606
      %1706 = vst.msk [vmem:[#allocation3 + $0x50] sm:$0xff] %vm1695, %v1608
      %1707 = vst.msk [vmem:[#allocation3 + $0x58] sm:$0xff] %vm1695, %v1610
      %1708 = vst.msk [vmem:[#allocation3 + $0x60] sm:$0xff] %vm1695, %v1612
      %1709 = vst.msk [vmem:[#allocation3 + $0x68] sm:$0xff] %vm1695, %v1614
      %1710 = vst.msk [vmem:[#allocation3 + $0x70] sm:$0xff] %vm1695, %v1616
      %1711 = vst.msk [vmem:[#allocation3 + $0x78] sm:$0xff] %vm1695, %v1618
      %1712 = vst.msk [vmem:[#allocation3 + $0x80] sm:$0xff] %vm1695, %v1620
      %1713 = vst.msk [vmem:[#allocation3 + $0x88] sm:$0xff] %vm1695, %v1622
      %1714 = vst.msk [vmem:[#allocation3 + $0x90] sm:$0xff] %vm1695, %v1624
      %1715 = vst.msk [vmem:[#allocation3 + $0x98] sm:$0xff] %vm1695, %v1626
      %1716 = vst.msk [vmem:[#allocation3 + $0xa0] sm:$0xff] %vm1695, %v1628
      %1717 = vst.msk [vmem:[#allocation3 + $0xa8] sm:$0xff] %vm1695, %v1630
      %1718 = vst.msk [vmem:[#allocation3 + $0xb0] sm:$0xff] %vm1695, %v1632
      %1719 = vst.msk [vmem:[#allocation3 + $0xb8] sm:$0xff] %vm1695, %v1634
      %1720 = vst.msk [vmem:[#allocation3 + $0xc0] sm:$0xff] %vm1695, %v1636
      %1721 = vst.msk [vmem:[#allocation3 + $0xc8] sm:$0xff] %vm1695, %v1638
      %1722 = vst.msk [vmem:[#allocation3 + $0xd0] sm:$0xff] %vm1695, %v1640
      %1723 = vst.msk [vmem:[#allocation3 + $0xd8] sm:$0xff] %vm1695, %v1642
      %1724 = vst.msk [vmem:[#allocation3 + $0xe0] sm:$0xff] %vm1695, %v1644
      %1725 = vst.msk [vmem:[#allocation3 + $0xe8] sm:$0xff] %vm1695, %v1646
      %1726 = vst.msk [vmem:[#allocation3 + $0xf0] sm:$0xff] %vm1695, %v1648
      %1727 = vst.msk [vmem:[#allocation3 + $0xf8] sm:$0xff] %vm1695, %v1650
      %1728 = vst.msk [vmem:[#allocation3 + $0x100] sm:$0xff] %vm1695, %v1652
      %1729 = vst.msk [vmem:[#allocation3 + $0x108] sm:$0xff] %vm1695, %v1654
      %1730 = vst.msk [vmem:[#allocation3 + $0x110] sm:$0xff] %vm1695, %v1656
      %1731 = vst.msk [vmem:[#allocation3 + $0x118] sm:$0xff] %vm1695, %v1658
      %v1732 = vld [vmem:[#allocation2 + $0x25] sm:$0xff]
      %v1733 = vld [vmem:[#allocation2 + $0x2d] sm:$0xff]
      %v1734 = vld [vmem:[#allocation2 + $0x35] sm:$0xff]
      %v1735 = vld [vmem:[#allocation2 + $0x3d] sm:$0xff]
      %v1736 = vld [vmem:[#allocation2 + $0x45] sm:$0xff]
      %v1737 = vld [vmem:[#allocation2 + $0x4d] sm:$0xff]
      %v1738 = vld [vmem:[#allocation2 + $0x55] sm:$0xff]
      %v1739 = vld [vmem:[#allocation2 + $0x5d] sm:$0xff]
      %v1740 = vld [vmem:[#allocation2 + $0x65] sm:$0xff]
      %v1741 = vld [vmem:[#allocation2 + $0x6d] sm:$0xff]
      %v1742 = vld [vmem:[#allocation2 + $0x75] sm:$0xff]
      %v1743 = vld [vmem:[#allocation2 + $0x7d] sm:$0xff]
      %v1744 = vld [vmem:[#allocation2 + $0x85] sm:$0xff]
      %v1745 = vld [vmem:[#allocation2 + $0x8d] sm:$0xff]
      %v1746 = vld [vmem:[#allocation2 + $0x95] sm:$0xff]
      %v1747 = vld [vmem:[#allocation2 + $0x9d] sm:$0xff]
      %v1748 = vld [vmem:[#allocation2 + $0xa5] sm:$0xff]
      %v1749 = vld [vmem:[#allocation2 + $0xad] sm:$0xff]
      %v1750 = vld [vmem:[#allocation2 + $0xb5] sm:$0xff]
      %v1751 = vld [vmem:[#allocation2 + $0xbd] sm:$0xff]
      %v1752 = vld [vmem:[#allocation2 + $0xc5] sm:$0xff]
      %v1753 = vld [vmem:[#allocation2 + $0xcd] sm:$0xff]
      %v1754 = vld [vmem:[#allocation2 + $0xd5] sm:$0xff]
      %v1755 = vld [vmem:[#allocation2 + $0xdd] sm:$0xff]
      %v1756 = vld [vmem:[#allocation2 + $0xe5] sm:$0xff]
      %v1757 = vld [vmem:[#allocation2 + $0xed] sm:$0xff]
      %v1758 = vld [vmem:[#allocation2 + $0xf5] sm:$0xff]
      %v1759 = vld [vmem:[#allocation2 + $0xfd] sm:$0xff]
      %v1760 = vld [vmem:[#allocation2 + $0x105] sm:$0xff]
      %v1761 = vld [vmem:[#allocation2 + $0x10d] sm:$0xff]
      %v1762 = vld [vmem:[#allocation2 + $0x115] sm:$0xff]
      %v1763 = vld [vmem:[#allocation2 + $0x11d] sm:$0xff]
      %v1764 = vld [vmem:[#allocation2 + $0x125] sm:$0xff]
      %v1765 = vld [vmem:[#allocation2 + $0x12d] sm:$0xff]
      %v1766 = vld [vmem:[#allocation2 + $0x135] sm:$0xff]
      %v1767 = vld [vmem:[#allocation2 + $0x13d] sm:$0xff]
      %1804 = vrot.lane.b32.xlu0 %v1732, 56
      %v1805 = vpop.permute.xlu0 %1804
      %1806 = vrot.lane.b32.xlu0 %v1733, 56
      %v1807 = vpop.permute.xlu0 %1806
      %1808 = vrot.lane.b32.xlu0 %v1734, 56
      %v1809 = vpop.permute.xlu0 %1808
      %1810 = vrot.lane.b32.xlu0 %v1735, 56
      %v1811 = vpop.permute.xlu0 %1810
      %1812 = vrot.lane.b32.xlu0 %v1736, 56
      %v1813 = vpop.permute.xlu0 %1812
      %1814 = vrot.lane.b32.xlu0 %v1737, 56
      %v1815 = vpop.permute.xlu0 %1814
      %1816 = vrot.lane.b32.xlu0 %v1738, 56
      %v1817 = vpop.permute.xlu0 %1816
      %1818 = vrot.lane.b32.xlu0 %v1739, 56
      %v1819 = vpop.permute.xlu0 %1818
      %1820 = vrot.lane.b32.xlu0 %v1740, 56
      %v1821 = vpop.permute.xlu0 %1820
      %1822 = vrot.lane.b32.xlu0 %v1741, 56
      %v1823 = vpop.permute.xlu0 %1822
      %1824 = vrot.lane.b32.xlu0 %v1742, 56
      %v1825 = vpop.permute.xlu0 %1824
      %1826 = vrot.lane.b32.xlu0 %v1743, 56
      %v1827 = vpop.permute.xlu0 %1826
      %1828 = vrot.lane.b32.xlu0 %v1744, 56
      %v1829 = vpop.permute.xlu0 %1828
      %1830 = vrot.lane.b32.xlu0 %v1745, 56
      %v1831 = vpop.permute.xlu0 %1830
      %1832 = vrot.lane.b32.xlu0 %v1746, 56
      %v1833 = vpop.permute.xlu0 %1832
      %1834 = vrot.lane.b32.xlu0 %v1747, 56
      %v1835 = vpop.permute.xlu0 %1834
      %1836 = vrot.lane.b32.xlu0 %v1748, 56
      %v1837 = vpop.permute.xlu0 %1836
      %1838 = vrot.lane.b32.xlu0 %v1749, 56
      %v1839 = vpop.permute.xlu0 %1838
      %1840 = vrot.lane.b32.xlu0 %v1750, 56
      %v1841 = vpop.permute.xlu0 %1840
      %1842 = vrot.lane.b32.xlu0 %v1751, 56
      %v1843 = vpop.permute.xlu0 %1842
      %1844 = vrot.lane.b32.xlu0 %v1752, 56
      %v1845 = vpop.permute.xlu0 %1844
      %1846 = vrot.lane.b32.xlu0 %v1753, 56
      %v1847 = vpop.permute.xlu0 %1846
      %1848 = vrot.lane.b32.xlu0 %v1754, 56
      %v1849 = vpop.permute.xlu0 %1848
      %1850 = vrot.lane.b32.xlu0 %v1755, 56
      %v1851 = vpop.permute.xlu0 %1850
      %1852 = vrot.lane.b32.xlu0 %v1756, 56
      %v1853 = vpop.permute.xlu0 %1852
      %1854 = vrot.lane.b32.xlu0 %v1757, 56
      %v1855 = vpop.permute.xlu0 %1854
      %1856 = vrot.lane.b32.xlu0 %v1758, 56
      %v1857 = vpop.permute.xlu0 %1856
      %1858 = vrot.lane.b32.xlu0 %v1759, 56
      %v1859 = vpop.permute.xlu0 %1858
      %1860 = vrot.lane.b32.xlu0 %v1760, 56
      %v1861 = vpop.permute.xlu0 %1860
      %1862 = vrot.lane.b32.xlu0 %v1761, 56
      %v1863 = vpop.permute.xlu0 %1862
      %1864 = vrot.lane.b32.xlu0 %v1762, 56
      %v1865 = vpop.permute.xlu0 %1864
      %1866 = vrot.lane.b32.xlu0 %v1763, 56
      %v1867 = vpop.permute.xlu0 %1866
      %1868 = vrot.lane.b32.xlu0 %v1764, 56
      %v1869 = vpop.permute.xlu0 %1868
      %1870 = vrot.lane.b32.xlu0 %v1765, 56
      %v1871 = vpop.permute.xlu0 %1870
      %1872 = vrot.lane.b32.xlu0 %v1766, 56
      %v1873 = vpop.permute.xlu0 %1872
      %1874 = vrot.lane.b32.xlu0 %v1767, 56
      %v1875 = vpop.permute.xlu0 %1874
      %vm1912 = vcmask 523712
      %1913 = vst.msk [vmem:[#allocation3] sm:$0xff] %vm1912, %v1805
      %1914 = vst.msk [vmem:[#allocation3 + $0x8] sm:$0xff] %vm1912, %v1807
      %1915 = vst.msk [vmem:[#allocation3 + $0x10] sm:$0xff] %vm1912, %v1809
      %1916 = vst.msk [vmem:[#allocation3 + $0x18] sm:$0xff] %vm1912, %v1811
      %1917 = vst.msk [vmem:[#allocation3 + $0x20] sm:$0xff] %vm1912, %v1813
      %1918 = vst.msk [vmem:[#allocation3 + $0x28] sm:$0xff] %vm1912, %v1815
      %1919 = vst.msk [vmem:[#allocation3 + $0x30] sm:$0xff] %vm1912, %v1817
      %1920 = vst.msk [vmem:[#allocation3 + $0x38] sm:$0xff] %vm1912, %v1819
      %1921 = vst.msk [vmem:[#allocation3 + $0x40] sm:$0xff] %vm1912, %v1821
      %1922 = vst.msk [vmem:[#allocation3 + $0x48] sm:$0xff] %vm1912, %v1823
      %1923 = vst.msk [vmem:[#allocation3 + $0x50] sm:$0xff] %vm1912, %v1825
      %1924 = vst.msk [vmem:[#allocation3 + $0x58] sm:$0xff] %vm1912, %v1827
      %1925 = vst.msk [vmem:[#allocation3 + $0x60] sm:$0xff] %vm1912, %v1829
      %1926 = vst.msk [vmem:[#allocation3 + $0x68] sm:$0xff] %vm1912, %v1831
      %1927 = vst.msk [vmem:[#allocation3 + $0x70] sm:$0xff] %vm1912, %v1833
      %1928 = vst.msk [vmem:[#allocation3 + $0x78] sm:$0xff] %vm1912, %v1835
      %1929 = vst.msk [vmem:[#allocation3 + $0x80] sm:$0xff] %vm1912, %v1837
      %1930 = vst.msk [vmem:[#allocation3 + $0x88] sm:$0xff] %vm1912, %v1839
      %1931 = vst.msk [vmem:[#allocation3 + $0x90] sm:$0xff] %vm1912, %v1841
      %1932 = vst.msk [vmem:[#allocation3 + $0x98] sm:$0xff] %vm1912, %v1843
      %1933 = vst.msk [vmem:[#allocation3 + $0xa0] sm:$0xff] %vm1912, %v1845
      %1934 = vst.msk [vmem:[#allocation3 + $0xa8] sm:$0xff] %vm1912, %v1847
      %1935 = vst.msk [vmem:[#allocation3 + $0xb0] sm:$0xff] %vm1912, %v1849
      %1936 = vst.msk [vmem:[#allocation3 + $0xb8] sm:$0xff] %vm1912, %v1851
      %1937 = vst.msk [vmem:[#allocation3 + $0xc0] sm:$0xff] %vm1912, %v1853
      %1938 = vst.msk [vmem:[#allocation3 + $0xc8] sm:$0xff] %vm1912, %v1855
      %1939 = vst.msk [vmem:[#allocation3 + $0xd0] sm:$0xff] %vm1912, %v1857
      %1940 = vst.msk [vmem:[#allocation3 + $0xd8] sm:$0xff] %vm1912, %v1859
      %1941 = vst.msk [vmem:[#allocation3 + $0xe0] sm:$0xff] %vm1912, %v1861
      %1942 = vst.msk [vmem:[#allocation3 + $0xe8] sm:$0xff] %vm1912, %v1863
      %1943 = vst.msk [vmem:[#allocation3 + $0xf0] sm:$0xff] %vm1912, %v1865
      %1944 = vst.msk [vmem:[#allocation3 + $0xf8] sm:$0xff] %vm1912, %v1867
      %1945 = vst.msk [vmem:[#allocation3 + $0x100] sm:$0xff] %vm1912, %v1869
      %1946 = vst.msk [vmem:[#allocation3 + $0x108] sm:$0xff] %vm1912, %v1871
      %1947 = vst.msk [vmem:[#allocation3 + $0x110] sm:$0xff] %vm1912, %v1873
      %1948 = vst.msk [vmem:[#allocation3 + $0x118] sm:$0xff] %vm1912, %v1875
      %v1949 = vld [vmem:[#allocation2 + $0x26] sm:$0xff]
      %v1950 = vld [vmem:[#allocation2 + $0x2e] sm:$0xff]
      %v1951 = vld [vmem:[#allocation2 + $0x36] sm:$0xff]
      %v1952 = vld [vmem:[#allocation2 + $0x3e] sm:$0xff]
      %v1953 = vld [vmem:[#allocation2 + $0x46] sm:$0xff]
      %v1954 = vld [vmem:[#allocation2 + $0x4e] sm:$0xff]
      %v1955 = vld [vmem:[#allocation2 + $0x56] sm:$0xff]
      %v1956 = vld [vmem:[#allocation2 + $0x5e] sm:$0xff]
      %v1957 = vld [vmem:[#allocation2 + $0x66] sm:$0xff]
      %v1958 = vld [vmem:[#allocation2 + $0x6e] sm:$0xff]
      %v1959 = vld [vmem:[#allocation2 + $0x76] sm:$0xff]
      %v1960 = vld [vmem:[#allocation2 + $0x7e] sm:$0xff]
      %v1961 = vld [vmem:[#allocation2 + $0x86] sm:$0xff]
      %v1962 = vld [vmem:[#allocation2 + $0x8e] sm:$0xff]
      %v1963 = vld [vmem:[#allocation2 + $0x96] sm:$0xff]
      %v1964 = vld [vmem:[#allocation2 + $0x9e] sm:$0xff]
      %v1965 = vld [vmem:[#allocation2 + $0xa6] sm:$0xff]
      %v1966 = vld [vmem:[#allocation2 + $0xae] sm:$0xff]
      %v1967 = vld [vmem:[#allocation2 + $0xb6] sm:$0xff]
      %v1968 = vld [vmem:[#allocation2 + $0xbe] sm:$0xff]
      %v1969 = vld [vmem:[#allocation2 + $0xc6] sm:$0xff]
      %v1970 = vld [vmem:[#allocation2 + $0xce] sm:$0xff]
      %v1971 = vld [vmem:[#allocation2 + $0xd6] sm:$0xff]
      %v1972 = vld [vmem:[#allocation2 + $0xde] sm:$0xff]
      %v1973 = vld [vmem:[#allocation2 + $0xe6] sm:$0xff]
      %v1974 = vld [vmem:[#allocation2 + $0xee] sm:$0xff]
      %v1975 = vld [vmem:[#allocation2 + $0xf6] sm:$0xff]
      %v1976 = vld [vmem:[#allocation2 + $0xfe] sm:$0xff]
      %v1977 = vld [vmem:[#allocation2 + $0x106] sm:$0xff]
      %v1978 = vld [vmem:[#allocation2 + $0x10e] sm:$0xff]
      %v1979 = vld [vmem:[#allocation2 + $0x116] sm:$0xff]
      %v1980 = vld [vmem:[#allocation2 + $0x11e] sm:$0xff]
      %v1981 = vld [vmem:[#allocation2 + $0x126] sm:$0xff]
      %v1982 = vld [vmem:[#allocation2 + $0x12e] sm:$0xff]
      %v1983 = vld [vmem:[#allocation2 + $0x136] sm:$0xff]
      %v1984 = vld [vmem:[#allocation2 + $0x13e] sm:$0xff]
      %2021 = vrot.lane.b32.xlu0 %v1949, 64
      %v2022 = vpop.permute.xlu0 %2021
      %2023 = vrot.lane.b32.xlu0 %v1950, 64
      %v2024 = vpop.permute.xlu0 %2023
      %2025 = vrot.lane.b32.xlu0 %v1951, 64
      %v2026 = vpop.permute.xlu0 %2025
      %2027 = vrot.lane.b32.xlu0 %v1952, 64
      %v2028 = vpop.permute.xlu0 %2027
      %2029 = vrot.lane.b32.xlu0 %v1953, 64
      %v2030 = vpop.permute.xlu0 %2029
      %2031 = vrot.lane.b32.xlu0 %v1954, 64
      %v2032 = vpop.permute.xlu0 %2031
      %2033 = vrot.lane.b32.xlu0 %v1955, 64
      %v2034 = vpop.permute.xlu0 %2033
      %2035 = vrot.lane.b32.xlu0 %v1956, 64
      %v2036 = vpop.permute.xlu0 %2035
      %2037 = vrot.lane.b32.xlu0 %v1957, 64
      %v2038 = vpop.permute.xlu0 %2037
      %2039 = vrot.lane.b32.xlu0 %v1958, 64
      %v2040 = vpop.permute.xlu0 %2039
      %2041 = vrot.lane.b32.xlu0 %v1959, 64
      %v2042 = vpop.permute.xlu0 %2041
      %2043 = vrot.lane.b32.xlu0 %v1960, 64
      %v2044 = vpop.permute.xlu0 %2043
      %2045 = vrot.lane.b32.xlu0 %v1961, 64
      %v2046 = vpop.permute.xlu0 %2045
      %2047 = vrot.lane.b32.xlu0 %v1962, 64
      %v2048 = vpop.permute.xlu0 %2047
      %2049 = vrot.lane.b32.xlu0 %v1963, 64
      %v2050 = vpop.permute.xlu0 %2049
      %2051 = vrot.lane.b32.xlu0 %v1964, 64
      %v2052 = vpop.permute.xlu0 %2051
      %2053 = vrot.lane.b32.xlu0 %v1965, 64
      %v2054 = vpop.permute.xlu0 %2053
      %2055 = vrot.lane.b32.xlu0 %v1966, 64
      %v2056 = vpop.permute.xlu0 %2055
      %2057 = vrot.lane.b32.xlu0 %v1967, 64
      %v2058 = vpop.permute.xlu0 %2057
      %2059 = vrot.lane.b32.xlu0 %v1968, 64
      %v2060 = vpop.permute.xlu0 %2059
      %2061 = vrot.lane.b32.xlu0 %v1969, 64
      %v2062 = vpop.permute.xlu0 %2061
      %2063 = vrot.lane.b32.xlu0 %v1970, 64
      %v2064 = vpop.permute.xlu0 %2063
      %2065 = vrot.lane.b32.xlu0 %v1971, 64
      %v2066 = vpop.permute.xlu0 %2065
      %2067 = vrot.lane.b32.xlu0 %v1972, 64
      %v2068 = vpop.permute.xlu0 %2067
      %2069 = vrot.lane.b32.xlu0 %v1973, 64
      %v2070 = vpop.permute.xlu0 %2069
      %2071 = vrot.lane.b32.xlu0 %v1974, 64
      %v2072 = vpop.permute.xlu0 %2071
      %2073 = vrot.lane.b32.xlu0 %v1975, 64
      %v2074 = vpop.permute.xlu0 %2073
      %2075 = vrot.lane.b32.xlu0 %v1976, 64
      %v2076 = vpop.permute.xlu0 %2075
      %2077 = vrot.lane.b32.xlu0 %v1977, 64
      %v2078 = vpop.permute.xlu0 %2077
      %2079 = vrot.lane.b32.xlu0 %v1978, 64
      %v2080 = vpop.permute.xlu0 %2079
      %2081 = vrot.lane.b32.xlu0 %v1979, 64
      %v2082 = vpop.permute.xlu0 %2081
      %2083 = vrot.lane.b32.xlu0 %v1980, 64
      %v2084 = vpop.permute.xlu0 %2083
      %2085 = vrot.lane.b32.xlu0 %v1981, 64
      %v2086 = vpop.permute.xlu0 %2085
      %2087 = vrot.lane.b32.xlu0 %v1982, 64
      %v2088 = vpop.permute.xlu0 %2087
      %2089 = vrot.lane.b32.xlu0 %v1983, 64
      %v2090 = vpop.permute.xlu0 %2089
      %2091 = vrot.lane.b32.xlu0 %v1984, 64
      %v2092 = vpop.permute.xlu0 %2091
      %vm2129 = vcmask 589312
      %2130 = vst.msk [vmem:[#allocation3] sm:$0xff] %vm2129, %v2022
      %2131 = vst.msk [vmem:[#allocation3 + $0x8] sm:$0xff] %vm2129, %v2024
      %2132 = vst.msk [vmem:[#allocation3 + $0x10] sm:$0xff] %vm2129, %v2026
      %2133 = vst.msk [vmem:[#allocation3 + $0x18] sm:$0xff] %vm2129, %v2028
      %2134 = vst.msk [vmem:[#allocation3 + $0x20] sm:$0xff] %vm2129, %v2030
      %2135 = vst.msk [vmem:[#allocation3 + $0x28] sm:$0xff] %vm2129, %v2032
      %2136 = vst.msk [vmem:[#allocation3 + $0x30] sm:$0xff] %vm2129, %v2034
      %2137 = vst.msk [vmem:[#allocation3 + $0x38] sm:$0xff] %vm2129, %v2036
      %2138 = vst.msk [vmem:[#allocation3 + $0x40] sm:$0xff] %vm2129, %v2038
      %2139 = vst.msk [vmem:[#allocation3 + $0x48] sm:$0xff] %vm2129, %v2040
      %2140 = vst.msk [vmem:[#allocation3 + $0x50] sm:$0xff] %vm2129, %v2042
      %2141 = vst.msk [vmem:[#allocation3 + $0x58] sm:$0xff] %vm2129, %v2044
      %2142 = vst.msk [vmem:[#allocation3 + $0x60] sm:$0xff] %vm2129, %v2046
      %2143 = vst.msk [vmem:[#allocation3 + $0x68] sm:$0xff] %vm2129, %v2048
      %2144 = vst.msk [vmem:[#allocation3 + $0x70] sm:$0xff] %vm2129, %v2050
      %2145 = vst.msk [vmem:[#allocation3 + $0x78] sm:$0xff] %vm2129, %v2052
      %2146 = vst.msk [vmem:[#allocation3 + $0x80] sm:$0xff] %vm2129, %v2054
      %2147 = vst.msk [vmem:[#allocation3 + $0x88] sm:$0xff] %vm2129, %v2056
      %2148 = vst.msk [vmem:[#allocation3 + $0x90] sm:$0xff] %vm2129, %v2058
      %2149 = vst.msk [vmem:[#allocation3 + $0x98] sm:$0xff] %vm2129, %v2060
      %2150 = vst.msk [vmem:[#allocation3 + $0xa0] sm:$0xff] %vm2129, %v2062
      %2151 = vst.msk [vmem:[#allocation3 + $0xa8] sm:$0xff] %vm2129, %v2064
      %2152 = vst.msk [vmem:[#allocation3 + $0xb0] sm:$0xff] %vm2129, %v2066
      %2153 = vst.msk [vmem:[#allocation3 + $0xb8] sm:$0xff] %vm2129, %v2068
      %2154 = vst.msk [vmem:[#allocation3 + $0xc0] sm:$0xff] %vm2129, %v2070
      %2155 = vst.msk [vmem:[#allocation3 + $0xc8] sm:$0xff] %vm2129, %v2072
      %2156 = vst.msk [vmem:[#allocation3 + $0xd0] sm:$0xff] %vm2129, %v2074
      %2157 = vst.msk [vmem:[#allocation3 + $0xd8] sm:$0xff] %vm2129, %v2076
      %2158 = vst.msk [vmem:[#allocation3 + $0xe0] sm:$0xff] %vm2129, %v2078
      %2159 = vst.msk [vmem:[#allocation3 + $0xe8] sm:$0xff] %vm2129, %v2080
      %2160 = vst.msk [vmem:[#allocation3 + $0xf0] sm:$0xff] %vm2129, %v2082
      %2161 = vst.msk [vmem:[#allocation3 + $0xf8] sm:$0xff] %vm2129, %v2084
      %2162 = vst.msk [vmem:[#allocation3 + $0x100] sm:$0xff] %vm2129, %v2086
      %2163 = vst.msk [vmem:[#allocation3 + $0x108] sm:$0xff] %vm2129, %v2088
      %2164 = vst.msk [vmem:[#allocation3 + $0x110] sm:$0xff] %vm2129, %v2090
      %2165 = vst.msk [vmem:[#allocation3 + $0x118] sm:$0xff] %vm2129, %v2092
      %v2166 = vld [vmem:[#allocation3] sm:$0xff]
      %v2167 = vld [vmem:[#allocation3 + $0x8] sm:$0xff]
      %v2168 = vld [vmem:[#allocation3 + $0x10] sm:$0xff]
      %v2169 = vld [vmem:[#allocation3 + $0x18] sm:$0xff]
      %v2170 = vld [vmem:[#allocation3 + $0x20] sm:$0xff]
      %v2171 = vld [vmem:[#allocation3 + $0x28] sm:$0xff]
      %v2172 = vld [vmem:[#allocation3 + $0x30] sm:$0xff]
      %v2173 = vld [vmem:[#allocation3 + $0x38] sm:$0xff]
      %v2174 = vld [vmem:[#allocation3 + $0x40] sm:$0xff]
      %v2175 = vld [vmem:[#allocation3 + $0x48] sm:$0xff]
      %v2176 = vld [vmem:[#allocation3 + $0x50] sm:$0xff]
      %v2177 = vld [vmem:[#allocation3 + $0x58] sm:$0xff]
      %v2178 = vld [vmem:[#allocation3 + $0x60] sm:$0xff]
      %v2179 = vld [vmem:[#allocation3 + $0x68] sm:$0xff]
      %v2180 = vld [vmem:[#allocation3 + $0x70] sm:$0xff]
      %v2181 = vld [vmem:[#allocation3 + $0x78] sm:$0xff]
      %v2182 = vld [vmem:[#allocation3 + $0x80] sm:$0xff]
      %v2183 = vld [vmem:[#allocation3 + $0x88] sm:$0xff]
      %v2184 = vld [vmem:[#allocation3 + $0x90] sm:$0xff]
      %v2185 = vld [vmem:[#allocation3 + $0x98] sm:$0xff]
      %v2186 = vld [vmem:[#allocation3 + $0xa0] sm:$0xff]
      %v2187 = vld [vmem:[#allocation3 + $0xa8] sm:$0xff]
      %v2188 = vld [vmem:[#allocation3 + $0xb0] sm:$0xff]
      %v2189 = vld [vmem:[#allocation3 + $0xb8] sm:$0xff]
      %v2190 = vld [vmem:[#allocation3 + $0xc0] sm:$0xff]
      %v2191 = vld [vmem:[#allocation3 + $0xc8] sm:$0xff]
      %v2192 = vld [vmem:[#allocation3 + $0xd0] sm:$0xff]
      %v2193 = vld [vmem:[#allocation3 + $0xd8] sm:$0xff]
      %v2194 = vld [vmem:[#allocation3 + $0xe0] sm:$0xff]
      %v2195 = vld [vmem:[#allocation3 + $0xe8] sm:$0xff]
      %v2196 = vld [vmem:[#allocation3 + $0xf0] sm:$0xff]
      %v2197 = vld [vmem:[#allocation3 + $0xf8] sm:$0xff]
      %v2198 = vld [vmem:[#allocation3 + $0x100] sm:$0xff]
      %v2199 = vld [vmem:[#allocation3 + $0x108] sm:$0xff]
      %v2200 = vld [vmem:[#allocation3 + $0x110] sm:$0xff]
      %v2201 = vld [vmem:[#allocation3 + $0x118] sm:$0xff]
      %v2202 = vld [vmem:[%s2] sm:$0xff]
      %v2203 = vld [vmem:[%s2 + $0x8] sm:$0xff]
      %v2204 = vld [vmem:[%s2 + $0x10] sm:$0xff]
      %v2205 = vld [vmem:[%s2 + $0x18] sm:$0xff]
      %v2206 = vld [vmem:[%s2 + $0x20] sm:$0xff]
      %v2207 = vld [vmem:[%s2 + $0x28] sm:$0xff]
      %v2208 = vld [vmem:[%s2 + $0x30] sm:$0xff]
      %v2209 = vld [vmem:[%s2 + $0x38] sm:$0xff]
      %v2210 = vld [vmem:[%s2 + $0x40] sm:$0xff]
      %v2211 = vld [vmem:[%s3] sm:$0x1]
      %v2213 = vlaneseq
      %v2214 = vshrl.u32 %v2213, 7
      %v2215 = vsub.s32 0, %v2214
      %v2216 = vrot.slane %v2211, %v2215
      %vm2218 = vcmask 588800
      %v2220 = vsel %vm2218, %v2166, 0
      %v2223 = vsel %vm2218, %v2167, 0
      %v2226 = vsel %vm2218, %v2168, 0
      %v2229 = vsel %vm2218, %v2169, 0
      %v2232 = vsel %vm2218, %v2170, 0
      %v2235 = vsel %vm2218, %v2171, 0
      %v2238 = vsel %vm2218, %v2172, 0
      %v2241 = vsel %vm2218, %v2173, 0
      %v2244 = vsel %vm2218, %v2174, 0
      %v2247 = vsel %vm2218, %v2175, 0
      %v2250 = vsel %vm2218, %v2176, 0
      %v2253 = vsel %vm2218, %v2177, 0
      %v2256 = vsel %vm2218, %v2178, 0
      %v2259 = vsel %vm2218, %v2179, 0
      %v2262 = vsel %vm2218, %v2180, 0
      %v2265 = vsel %vm2218, %v2181, 0
      %v2268 = vsel %vm2218, %v2182, 0
      %v2271 = vsel %vm2218, %v2183, 0
      %v2274 = vsel %vm2218, %v2184, 0
      %v2277 = vsel %vm2218, %v2185, 0
      %v2280 = vsel %vm2218, %v2186, 0
      %v2283 = vsel %vm2218, %v2187, 0
      %v2286 = vsel %vm2218, %v2188, 0
      %v2289 = vsel %vm2218, %v2189, 0
      %v2292 = vsel %vm2218, %v2190, 0
      %v2295 = vsel %vm2218, %v2191, 0
      %v2298 = vsel %vm2218, %v2192, 0
      %v2301 = vsel %vm2218, %v2193, 0
      %v2304 = vsel %vm2218, %v2194, 0
      %v2307 = vsel %vm2218, %v2195, 0
      %v2310 = vsel %vm2218, %v2196, 0
      %v2313 = vsel %vm2218, %v2197, 0
      %v2316 = vsel %vm2218, %v2198, 0
      %v2319 = vsel %vm2218, %v2199, 0
      %v2322 = vsel %vm2218, %v2200, 0
      %v2325 = vsel %vm2218, %v2201, 0
      %2327 = vmatprep.subr.mxu0 0.0
      %2328 = vmatpush1.msra.mxu0 %v2202
      %2329 = vmatprep.subr.mxu0 0.0
      %2330 = vmatpush1.msra.mxu0 %v2203
      %2331 = vmatprep.subr.mxu0 0.0
      %2332 = vmatpush1.msra.mxu0 %v2204
      %2333 = vmatprep.subr.mxu0 0.0
      %2334 = vmatpush1.msra.mxu0 %v2205
      %2335 = vmatprep.subr.mxu0 0.0
      %2336 = vmatpush1.msra.mxu0 %v2206
      %2337 = vmatprep.subr.mxu0 0.0
      %2338 = vmatpush1.msra.mxu0 %v2207
      %2339 = vmatprep.subr.mxu0 0.0
      %2340 = vmatpush1.msra.mxu0 %v2208
      %2341 = vmatprep.subr.mxu0 0.0
      %2342 = vmatpush1.msra.mxu0 %v2209
      %2343 = vmatprep.subr.mxu0 0.0
      %2344 = vmatpush1.msra.mxu0 %v2210
      %2345 = vmatprep.subr.mxu0 0.0
      %2346 = vmatpush1.msra.mxu0 0.0
      %2347 = vmatprep.subr.mxu0 0.0
      %2348 = vmatpush1.msra.mxu0 0.0
      %2349 = vmatprep.subr.mxu0 0.0
      %2350 = vmatpush1.msra.mxu0 0.0
      %2351 = vmatprep.subr.mxu0 0.0
      %2352 = vmatpush1.msra.mxu0 0.0
      %2353 = vmatprep.subr.mxu0 0.0
      %2354 = vmatpush1.msra.mxu0 0.0
      %2355 = vmatprep.subr.mxu0 0.0
      %2356 = vmatpush1.msra.mxu0 0.0
      %2357 = vmatprep.subr.mxu0 0.0
      %2358 = vmatpush1.msra.mxu0 0.0
      %2359 = vmatprep.subr.mxu0 0.0
      %2360 = vmatpush1.msra.mxu0 0.0
      %2361 = vmatprep.subr.mxu0 0.0
      %2362 = vmatpush1.msra.mxu0 0.0
      %2363 = vmatprep.subr.mxu0 0.0
      %2364 = vmatpush1.msra.mxu0 0.0
      %2365 = vmatprep.subr.mxu0 0.0
      %2366 = vmatpush1.msra.mxu0 0.0
      %2367 = vmatprep.subr.mxu0 0.0
      %2368 = vmatpush1.msra.mxu0 0.0
      %2369 = vmatprep.subr.mxu0 0.0
      %2370 = vmatpush1.msra.mxu0 0.0
      %2371 = vmatprep.subr.mxu0 0.0
      %2372 = vmatpush1.msra.mxu0 0.0
      %2373 = vmatprep.subr.mxu0 0.0
      %2374 = vmatpush1.msra.mxu0 0.0
      %2375 = vmatprep.subr.mxu0 0.0
      %2376 = vmatpush1.msra.mxu0 0.0
      %2377 = vmatprep.subr.mxu0 0.0
      %2378 = vmatpush1.msra.mxu0 0.0
      %2379 = vmatprep.subr.mxu0 0.0
      %2380 = vmatpush1.msra.mxu0 0.0
      %2381 = vmatprep.subr.mxu0 0.0
      %2382 = vmatpush1.msra.mxu0 0.0
      %2383 = vmatprep.subr.mxu0 0.0
      %2384 = vmatpush1.msra.mxu0 0.0
      %2385 = vmatprep.subr.mxu0 0.0
      %2386 = vmatpush1.msra.mxu0 0.0
      %2387 = vmatprep.subr.mxu0 0.0
      %2388 = vmatpush1.msra.mxu0 0.0
      %2389 = vmatprep.subr.mxu0 0.0
      %2390 = vmatpush1.msra.mxu0 0.0
      %2391 = vmatprep.mubr.f32.mxu0 0.0
      %2392 = vmatmul.mubr.f32.gmra.mrb[0].mxu0 %v2220
      %v2393 = vpop.f32.mrb[0].mxu0
      %v2394 = vadd.f32 %v2216, %v2393
      %v2395 = vpop.f32.mrb[0].mxu0
      %2396 = vmatprep.mubr.f32.mxu0 0.0
      %2397 = vmatmul.mubr.f32.gmra.mrb[0].mxu0 %v2223
      %v2398 = vpop.f32.mrb[0].mxu0
      %v2399 = vadd.f32 %v2216, %v2398
      %v2400 = vpop.f32.mrb[0].mxu0
      %2401 = vmatprep.mubr.f32.mxu0 0.0
      %2402 = vmatmul.mubr.f32.gmra.mrb[0].mxu0 %v2226
      %v2403 = vpop.f32.mrb[0].mxu0
      %v2404 = vadd.f32 %v2216, %v2403
      %v2405 = vpop.f32.mrb[0].mxu0
      %2406 = vmatprep.mubr.f32.mxu0 0.0
      %2407 = vmatmul.mubr.f32.gmra.mrb[0].mxu0 %v2229
      %v2408 = vpop.f32.mrb[0].mxu0
      %v2409 = vadd.f32 %v2216, %v2408
      %v2410 = vpop.f32.mrb[0].mxu0
      %2411 = vmatprep.mubr.f32.mxu0 0.0
      %2412 = vmatmul.mubr.f32.gmra.mrb[0].mxu0 %v2232
      %v2413 = vpop.f32.mrb[0].mxu0
      %v2414 = vadd.f32 %v2216, %v2413
      %v2415 = vpop.f32.mrb[0].mxu0
      %2416 = vmatprep.mubr.f32.mxu0 0.0
      %2417 = vmatmul.mubr.f32.gmra.mrb[0].mxu0 %v2235
      %v2418 = vpop.f32.mrb[0].mxu0
      %v2419 = vadd.f32 %v2216, %v2418
      %v2420 = vpop.f32.mrb[0].mxu0
      %2421 = vmatprep.mubr.f32.mxu0 0.0
      %2422 = vmatmul.mubr.f32.gmra.mrb[0].mxu0 %v2238
      %v2423 = vpop.f32.mrb[0].mxu0
      %v2424 = vadd.f32 %v2216, %v2423
      %v2425 = vpop.f32.mrb[0].mxu0
      %2426 = vmatprep.mubr.f32.mxu0 0.0
      %2427 = vmatmul.mubr.f32.gmra.mrb[0].mxu0 %v2241
      %v2428 = vpop.f32.mrb[0].mxu0
      %v2429 = vadd.f32 %v2216, %v2428
      %v2430 = vpop.f32.mrb[0].mxu0
      %2431 = vmatprep.mubr.f32.mxu0 0.0
      %2432 = vmatmul.mubr.f32.gmra.mrb[0].mxu0 %v2244
      %v2433 = vpop.f32.mrb[0].mxu0
      %v2434 = vadd.f32 %v2216, %v2433
      %v2435 = vpop.f32.mrb[0].mxu0
      %2436 = vmatprep.mubr.f32.mxu0 0.0
      %2437 = vmatmul.mubr.f32.gmra.mrb[0].mxu0 %v2247
      %v2438 = vpop.f32.mrb[0].mxu0
      %v2439 = vadd.f32 %v2216, %v2438
      %v2440 = vpop.f32.mrb[0].mxu0
      %2441 = vmatprep.mubr.f32.mxu0 0.0
      %2442 = vmatmul.mubr.f32.gmra.mrb[0].mxu0 %v2250
      %v2443 = vpop.f32.mrb[0].mxu0
      %v2444 = vadd.f32 %v2216, %v2443
      %v2445 = vpop.f32.mrb[0].mxu0
      %2446 = vmatprep.mubr.f32.mxu0 0.0
      %2447 = vmatmul.mubr.f32.gmra.mrb[0].mxu0 %v2253
      %v2448 = vpop.f32.mrb[0].mxu0
      %v2449 = vadd.f32 %v2216, %v2448
      %v2450 = vpop.f32.mrb[0].mxu0
      %2451 = vmatprep.mubr.f32.mxu0 0.0
      %2452 = vmatmul.mubr.f32.gmra.mrb[0].mxu0 %v2256
      %v2453 = vpop.f32.mrb[0].mxu0
      %v2454 = vadd.f32 %v2216, %v2453
      %v2455 = vpop.f32.mrb[0].mxu0
      %2456 = vmatprep.mubr.f32.mxu0 0.0
      %2457 = vmatmul.mubr.f32.gmra.mrb[0].mxu0 %v2259
      %v2458 = vpop.f32.mrb[0].mxu0
      %v2459 = vadd.f32 %v2216, %v2458
      %v2460 = vpop.f32.mrb[0].mxu0
      %2461 = vmatprep.mubr.f32.mxu0 0.0
      %2462 = vmatmul.mubr.f32.gmra.mrb[0].mxu0 %v2262
      %v2463 = vpop.f32.mrb[0].mxu0
      %v2464 = vadd.f32 %v2216, %v2463
      %v2465 = vpop.f32.mrb[0].mxu0
      %2466 = vmatprep.mubr.f32.mxu0 0.0
      %2467 = vmatmul.mubr.f32.gmra.mrb[0].mxu0 %v2265
      %v2468 = vpop.f32.mrb[0].mxu0
      %v2469 = vadd.f32 %v2216, %v2468
      %v2470 = vpop.f32.mrb[0].mxu0
      %2471 = vmatprep.mubr.f32.mxu0 0.0
      %2472 = vmatmul.mubr.f32.gmra.mrb[0].mxu0 %v2268
      %v2473 = vpop.f32.mrb[0].mxu0
      %v2474 = vadd.f32 %v2216, %v2473
      %v2475 = vpop.f32.mrb[0].mxu0
      %2476 = vmatprep.mubr.f32.mxu0 0.0
      %2477 = vmatmul.mubr.f32.gmra.mrb[0].mxu0 %v2271
      %v2478 = vpop.f32.mrb[0].mxu0
      %v2479 = vadd.f32 %v2216, %v2478
      %v2480 = vpop.f32.mrb[0].mxu0
      %2481 = vmatprep.mubr.f32.mxu0 0.0
      %2482 = vmatmul.mubr.f32.gmra.mrb[0].mxu0 %v2274
      %v2483 = vpop.f32.mrb[0].mxu0
      %v2484 = vadd.f32 %v2216, %v2483
      %v2485 = vpop.f32.mrb[0].mxu0
      %2486 = vmatprep.mubr.f32.mxu0 0.0
      %2487 = vmatmul.mubr.f32.gmra.mrb[0].mxu0 %v2277
      %v2488 = vpop.f32.mrb[0].mxu0
      %v2489 = vadd.f32 %v2216, %v2488
      %v2490 = vpop.f32.mrb[0].mxu0
      %2491 = vmatprep.mubr.f32.mxu0 0.0
      %2492 = vmatmul.mubr.f32.gmra.mrb[0].mxu0 %v2280
      %v2493 = vpop.f32.mrb[0].mxu0
      %v2494 = vadd.f32 %v2216, %v2493
      %v2495 = vpop.f32.mrb[0].mxu0
      %2496 = vmatprep.mubr.f32.mxu0 0.0
      %2497 = vmatmul.mubr.f32.gmra.mrb[0].mxu0 %v2283
      %v2498 = vpop.f32.mrb[0].mxu0
      %v2499 = vadd.f32 %v2216, %v2498
      %v2500 = vpop.f32.mrb[0].mxu0
      %2501 = vmatprep.mubr.f32.mxu0 0.0
      %2502 = vmatmul.mubr.f32.gmra.mrb[0].mxu0 %v2286
      %v2503 = vpop.f32.mrb[0].mxu0
      %v2504 = vadd.f32 %v2216, %v2503
      %v2505 = vpop.f32.mrb[0].mxu0
      %2506 = vmatprep.mubr.f32.mxu0 0.0
      %2507 = vmatmul.mubr.f32.gmra.mrb[0].mxu0 %v2289
      %v2508 = vpop.f32.mrb[0].mxu0
      %v2509 = vadd.f32 %v2216, %v2508
      %v2510 = vpop.f32.mrb[0].mxu0
      %2511 = vmatprep.mubr.f32.mxu0 0.0
      %2512 = vmatmul.mubr.f32.gmra.mrb[0].mxu0 %v2292
      %v2513 = vpop.f32.mrb[0].mxu0
      %v2514 = vadd.f32 %v2216, %v2513
      %v2515 = vpop.f32.mrb[0].mxu0
      %2516 = vmatprep.mubr.f32.mxu0 0.0
      %2517 = vmatmul.mubr.f32.gmra.mrb[0].mxu0 %v2295
      %v2518 = vpop.f32.mrb[0].mxu0
      %v2519 = vadd.f32 %v2216, %v2518
      %v2520 = vpop.f32.mrb[0].mxu0
      %2521 = vmatprep.mubr.f32.mxu0 0.0
      %2522 = vmatmul.mubr.f32.gmra.mrb[0].mxu0 %v2298
      %v2523 = vpop.f32.mrb[0].mxu0
      %v2524 = vadd.f32 %v2216, %v2523
      %v2525 = vpop.f32.mrb[0].mxu0
      %2526 = vmatprep.mubr.f32.mxu0 0.0
      %2527 = vmatmul.mubr.f32.gmra.mrb[0].mxu0 %v2301
      %v2528 = vpop.f32.mrb[0].mxu0
      %v2529 = vadd.f32 %v2216, %v2528
      %v2530 = vpop.f32.mrb[0].mxu0
      %2531 = vmatprep.mubr.f32.mxu0 0.0
      %2532 = vmatmul.mubr.f32.gmra.mrb[0].mxu0 %v2304
      %v2533 = vpop.f32.mrb[0].mxu0
      %v2534 = vadd.f32 %v2216, %v2533
      %v2535 = vpop.f32.mrb[0].mxu0
      %2536 = vmatprep.mubr.f32.mxu0 0.0
      %2537 = vmatmul.mubr.f32.gmra.mrb[0].mxu0 %v2307
      %v2538 = vpop.f32.mrb[0].mxu0
      %v2539 = vadd.f32 %v2216, %v2538
      %v2540 = vpop.f32.mrb[0].mxu0
      %2541 = vmatprep.mubr.f32.mxu0 0.0
      %2542 = vmatmul.mubr.f32.gmra.mrb[0].mxu0 %v2310
      %v2543 = vpop.f32.mrb[0].mxu0
      %v2544 = vadd.f32 %v2216, %v2543
      %v2545 = vpop.f32.mrb[0].mxu0
      %2546 = vmatprep.mubr.f32.mxu0 0.0
      %2547 = vmatmul.mubr.f32.gmra.mrb[0].mxu0 %v2313
      %v2548 = vpop.f32.mrb[0].mxu0
      %v2549 = vadd.f32 %v2216, %v2548
      %v2550 = vpop.f32.mrb[0].mxu0
      %2551 = vmatprep.mubr.f32.mxu0 0.0
      %2552 = vmatmul.mubr.f32.gmra.mrb[0].mxu0 %v2316
      %v2553 = vpop.f32.mrb[0].mxu0
      %v2554 = vadd.f32 %v2216, %v2553
      %v2555 = vpop.f32.mrb[0].mxu0
      %2556 = vmatprep.mubr.f32.mxu0 0.0
      %2557 = vmatmul.mubr.f32.gmra.mrb[0].mxu0 %v2319
      %v2558 = vpop.f32.mrb[0].mxu0
      %v2559 = vadd.f32 %v2216, %v2558
      %v2560 = vpop.f32.mrb[0].mxu0
      %2561 = vmatprep.mubr.f32.mxu0 0.0
      %2562 = vmatmul.mubr.f32.gmra.mrb[0].mxu0 %v2322
      %v2563 = vpop.f32.mrb[0].mxu0
      %v2564 = vadd.f32 %v2216, %v2563
      %v2565 = vpop.f32.mrb[0].mxu0
      %2566 = vmatprep.mubr.f32.mxu0 0.0
      %2567 = vmatmul.mubr.f32.gmra.mrb[0].mxu0 %v2325
      %v2568 = vpop.f32.mrb[0].mxu0
      %v2569 = vadd.f32 %v2216, %v2568
      %v2570 = vpop.f32.mrb[0].mxu0
      %2571 = vdwg.mxu0
      %v2572 = vmax.f32 %v2394, 0.0
      %v2573 = vmax.f32 %v2399, 0.0
      %v2574 = vmax.f32 %v2404, 0.0
      %v2575 = vmax.f32 %v2409, 0.0
      %v2576 = vmax.f32 %v2414, 0.0
      %v2577 = vmax.f32 %v2419, 0.0
      %v2578 = vmax.f32 %v2424, 0.0
      %v2579 = vmax.f32 %v2429, 0.0
      %v2580 = vmax.f32 %v2434, 0.0
      %v2581 = vmax.f32 %v2439, 0.0
      %v2582 = vmax.f32 %v2444, 0.0
      %v2583 = vmax.f32 %v2449, 0.0
      %v2584 = vmax.f32 %v2454, 0.0
      %v2585 = vmax.f32 %v2459, 0.0
      %v2586 = vmax.f32 %v2464, 0.0
      %v2587 = vmax.f32 %v2469, 0.0
      %v2588 = vmax.f32 %v2474, 0.0
      %v2589 = vmax.f32 %v2479, 0.0
      %v2590 = vmax.f32 %v2484, 0.0
      %v2591 = vmax.f32 %v2489, 0.0
      %v2592 = vmax.f32 %v2494, 0.0
      %v2593 = vmax.f32 %v2499, 0.0
      %v2594 = vmax.f32 %v2504, 0.0
      %v2595 = vmax.f32 %v2509, 0.0
      %v2596 = vmax.f32 %v2514, 0.0
      %v2597 = vmax.f32 %v2519, 0.0
      %v2598 = vmax.f32 %v2524, 0.0
      %v2599 = vmax.f32 %v2529, 0.0
      %v2600 = vmax.f32 %v2534, 0.0
      %v2601 = vmax.f32 %v2539, 0.0
      %v2602 = vmax.f32 %v2544, 0.0
      %v2603 = vmax.f32 %v2549, 0.0
      %v2604 = vmax.f32 %v2554, 0.0
      %v2605 = vmax.f32 %v2559, 0.0
      %v2606 = vmax.f32 %v2564, 0.0
      %v2607 = vmax.f32 %v2569, 0.0
      %2609 = vset.pattern.permute.xlu0 0
      %2610 = vperm.xlu0 %2609, %v322
      %v2611 = vpop.permute.xlu0 %2610
      %2614 = vset.pattern.permute.xlu0 0
      %2615 = vperm.xlu0 %2614, %v323
      %v2616 = vpop.permute.xlu0 %2615
      %2619 = vset.pattern.permute.xlu0 0
      %2620 = vperm.xlu0 %2619, %v324
      %v2621 = vpop.permute.xlu0 %2620
      %2624 = vset.pattern.permute.xlu0 0
      %2625 = vperm.xlu0 %2624, %v325
      %v2626 = vpop.permute.xlu0 %2625
      %2629 = vset.pattern.permute.xlu0 0
      %2630 = vperm.xlu0 %2629, %v326
      %v2631 = vpop.permute.xlu0 %2630
      %2634 = vset.pattern.permute.xlu0 0
      %2635 = vperm.xlu0 %2634, %v327
      %v2636 = vpop.permute.xlu0 %2635
      %2639 = vset.pattern.permute.xlu0 0
      %2640 = vperm.xlu0 %2639, %v328
      %v2641 = vpop.permute.xlu0 %2640
      %2644 = vset.pattern.permute.xlu0 0
      %2645 = vperm.xlu0 %2644, %v329
      %v2646 = vpop.permute.xlu0 %2645
      %2649 = vset.pattern.permute.xlu0 0
      %2650 = vperm.xlu0 %2649, %v330
      %v2651 = vpop.permute.xlu0 %2650
      %2654 = vset.pattern.permute.xlu0 0
      %2655 = vperm.xlu0 %2654, %v331
      %v2656 = vpop.permute.xlu0 %2655
      %2659 = vset.pattern.permute.xlu0 0
      %2660 = vperm.xlu0 %2659, %v332
      %v2661 = vpop.permute.xlu0 %2660
      %2664 = vset.pattern.permute.xlu0 0
      %2665 = vperm.xlu0 %2664, %v333
      %v2666 = vpop.permute.xlu0 %2665
      %2669 = vset.pattern.permute.xlu0 0
      %2670 = vperm.xlu0 %2669, %v334
      %v2671 = vpop.permute.xlu0 %2670
      %2674 = vset.pattern.permute.xlu0 0
      %2675 = vperm.xlu0 %2674, %v335
      %v2676 = vpop.permute.xlu0 %2675
      %2679 = vset.pattern.permute.xlu0 0
      %2680 = vperm.xlu0 %2679, %v336
      %v2681 = vpop.permute.xlu0 %2680
      %2684 = vset.pattern.permute.xlu0 0
      %2685 = vperm.xlu0 %2684, %v337
      %v2686 = vpop.permute.xlu0 %2685
      %2689 = vset.pattern.permute.xlu0 0
      %2690 = vperm.xlu0 %2689, %v338
      %v2691 = vpop.permute.xlu0 %2690
      %2694 = vset.pattern.permute.xlu0 0
      %2695 = vperm.xlu0 %2694, %v339
      %v2696 = vpop.permute.xlu0 %2695
      %2699 = vset.pattern.permute.xlu0 0
      %2700 = vperm.xlu0 %2699, %v340
      %v2701 = vpop.permute.xlu0 %2700
      %2704 = vset.pattern.permute.xlu0 0
      %2705 = vperm.xlu0 %2704, %v341
      %v2706 = vpop.permute.xlu0 %2705
      %2709 = vset.pattern.permute.xlu0 0
      %2710 = vperm.xlu0 %2709, %v342
      %v2711 = vpop.permute.xlu0 %2710
      %2714 = vset.pattern.permute.xlu0 0
      %2715 = vperm.xlu0 %2714, %v343
      %v2716 = vpop.permute.xlu0 %2715
      %2719 = vset.pattern.permute.xlu0 0
      %2720 = vperm.xlu0 %2719, %v344
      %v2721 = vpop.permute.xlu0 %2720
      %2724 = vset.pattern.permute.xlu0 0
      %2725 = vperm.xlu0 %2724, %v345
      %v2726 = vpop.permute.xlu0 %2725
      %2729 = vset.pattern.permute.xlu0 0
      %2730 = vperm.xlu0 %2729, %v346
      %v2731 = vpop.permute.xlu0 %2730
      %2734 = vset.pattern.permute.xlu0 0
      %2735 = vperm.xlu0 %2734, %v347
      %v2736 = vpop.permute.xlu0 %2735
      %2739 = vset.pattern.permute.xlu0 0
      %2740 = vperm.xlu0 %2739, %v348
      %v2741 = vpop.permute.xlu0 %2740
      %2744 = vset.pattern.permute.xlu0 0
      %2745 = vperm.xlu0 %2744, %v349
      %v2746 = vpop.permute.xlu0 %2745
      %2749 = vset.pattern.permute.xlu0 0
      %2750 = vperm.xlu0 %2749, %v350
      %v2751 = vpop.permute.xlu0 %2750
      %2754 = vset.pattern.permute.xlu0 0
      %2755 = vperm.xlu0 %2754, %v351
      %v2756 = vpop.permute.xlu0 %2755
      %2759 = vset.pattern.permute.xlu0 0
      %2760 = vperm.xlu0 %2759, %v352
      %v2761 = vpop.permute.xlu0 %2760
      %2764 = vset.pattern.permute.xlu0 0
      %2765 = vperm.xlu0 %2764, %v353
      %v2766 = vpop.permute.xlu0 %2765
      %2769 = vset.pattern.permute.xlu0 0
      %2770 = vperm.xlu0 %2769, %v354
      %v2771 = vpop.permute.xlu0 %2770
      %2774 = vset.pattern.permute.xlu0 0
      %2775 = vperm.xlu0 %2774, %v355
      %v2776 = vpop.permute.xlu0 %2775
      %2779 = vset.pattern.permute.xlu0 0
      %2780 = vperm.xlu0 %2779, %v356
      %v2781 = vpop.permute.xlu0 %2780
      %2784 = vset.pattern.permute.xlu0 0
      %2785 = vperm.xlu0 %2784, %v357
      %v2786 = vpop.permute.xlu0 %2785
      %v2788 = vmul.f32 %v2572, %v2611
      %v2789 = vmul.f32 %v2573, %v2616
      %v2790 = vmul.f32 %v2574, %v2621
      %v2791 = vmul.f32 %v2575, %v2626
      %v2792 = vmul.f32 %v2576, %v2631
      %v2793 = vmul.f32 %v2577, %v2636
      %v2794 = vmul.f32 %v2578, %v2641
      %v2795 = vmul.f32 %v2579, %v2646
      %v2796 = vmul.f32 %v2580, %v2651
      %v2797 = vmul.f32 %v2581, %v2656
      %v2798 = vmul.f32 %v2582, %v2661
      %v2799 = vmul.f32 %v2583, %v2666
      %v2800 = vmul.f32 %v2584, %v2671
      %v2801 = vmul.f32 %v2585, %v2676
      %v2802 = vmul.f32 %v2586, %v2681
      %v2803 = vmul.f32 %v2587, %v2686
      %v2804 = vmul.f32 %v2588, %v2691
      %v2805 = vmul.f32 %v2589, %v2696
      %v2806 = vmul.f32 %v2590, %v2701
      %v2807 = vmul.f32 %v2591, %v2706
      %v2808 = vmul.f32 %v2592, %v2711
      %v2809 = vmul.f32 %v2593, %v2716
      %v2810 = vmul.f32 %v2594, %v2721
      %v2811 = vmul.f32 %v2595, %v2726
      %v2812 = vmul.f32 %v2596, %v2731
      %v2813 = vmul.f32 %v2597, %v2736
      %v2814 = vmul.f32 %v2598, %v2741
      %v2815 = vmul.f32 %v2599, %v2746
      %v2816 = vmul.f32 %v2600, %v2751
      %v2817 = vmul.f32 %v2601, %v2756
      %v2818 = vmul.f32 %v2602, %v2761
      %v2819 = vmul.f32 %v2603, %v2766
      %v2820 = vmul.f32 %v2604, %v2771
      %v2821 = vmul.f32 %v2605, %v2776
      %v2822 = vmul.f32 %v2606, %v2781
      %v2823 = vmul.f32 %v2607, %v2786
      %2824 = vst.msk [vmem:[#allocation2 + $0x13] sm:$0xff] %vm198, %v2788
      %2825 = vst.msk [vmem:[#allocation2 + $0x1b] sm:$0xff] %vm198, %v2789
      %2826 = vst.msk [vmem:[#allocation2 + $0x23] sm:$0xff] %vm198, %v2790
      %2827 = vst.msk [vmem:[#allocation2 + $0x2b] sm:$0xff] %vm198, %v2791
      %2828 = vst.msk [vmem:[#allocation2 + $0x33] sm:$0xff] %vm198, %v2792
      %2829 = vst.msk [vmem:[#allocation2 + $0x3b] sm:$0xff] %vm198, %v2793
      %2830 = vst.msk [vmem:[#allocation2 + $0x43] sm:$0xff] %vm198, %v2794
      %2831 = vst.msk [vmem:[#allocation2 + $0x4b] sm:$0xff] %vm198, %v2795
      %2832 = vst.msk [vmem:[#allocation2 + $0x53] sm:$0xff] %vm198, %v2796
      %2833 = vst.msk [vmem:[#allocation2 + $0x5b] sm:$0xff] %vm198, %v2797
      %2834 = vst.msk [vmem:[#allocation2 + $0x63] sm:$0xff] %vm198, %v2798
      %2835 = vst.msk [vmem:[#allocation2 + $0x6b] sm:$0xff] %vm198, %v2799
      %2836 = vst.msk [vmem:[#allocation2 + $0x73] sm:$0xff] %vm198, %v2800
      %2837 = vst.msk [vmem:[#allocation2 + $0x7b] sm:$0xff] %vm198, %v2801
      %2838 = vst.msk [vmem:[#allocation2 + $0x83] sm:$0xff] %vm198, %v2802
      %2839 = vst.msk [vmem:[#allocation2 + $0x8b] sm:$0xff] %vm198, %v2803
      %2840 = vst.msk [vmem:[#allocation2 + $0x93] sm:$0xff] %vm198, %v2804
      %2841 = vst.msk [vmem:[#allocation2 + $0x9b] sm:$0xff] %vm198, %v2805
      %2842 = vst.msk [vmem:[#allocation2 + $0xa3] sm:$0xff] %vm198, %v2806
      %2843 = vst.msk [vmem:[#allocation2 + $0xab] sm:$0xff] %vm198, %v2807
      %2844 = vst.msk [vmem:[#allocation2 + $0xb3] sm:$0xff] %vm198, %v2808
      %2845 = vst.msk [vmem:[#allocation2 + $0xbb] sm:$0xff] %vm198, %v2809
      %2846 = vst.msk [vmem:[#allocation2 + $0xc3] sm:$0xff] %vm198, %v2810
      %2847 = vst.msk [vmem:[#allocation2 + $0xcb] sm:$0xff] %vm198, %v2811
      %2848 = vst.msk [vmem:[#allocation2 + $0xd3] sm:$0xff] %vm198, %v2812
      %2849 = vst.msk [vmem:[#allocation2 + $0xdb] sm:$0xff] %vm198, %v2813
      %2850 = vst.msk [vmem:[#allocation2 + $0xe3] sm:$0xff] %vm198, %v2814
      %2851 = vst.msk [vmem:[#allocation2 + $0xeb] sm:$0xff] %vm198, %v2815
      %2852 = vst.msk [vmem:[#allocation2 + $0xf3] sm:$0xff] %vm198, %v2816
      %2853 = vst.msk [vmem:[#allocation2 + $0xfb] sm:$0xff] %vm198, %v2817
      %2854 = vst.msk [vmem:[#allocation2 + $0x103] sm:$0xff] %vm198, %v2818
      %2855 = vst.msk [vmem:[#allocation2 + $0x10b] sm:$0xff] %vm198, %v2819
      %2856 = vst.msk [vmem:[#allocation2 + $0x113] sm:$0xff] %vm198, %v2820
      %2857 = vst.msk [vmem:[#allocation2 + $0x11b] sm:$0xff] %vm198, %v2821
      %2858 = vst.msk [vmem:[#allocation2 + $0x123] sm:$0xff] %vm198, %v2822
      %2859 = vst.msk [vmem:[#allocation2 + $0x12b] sm:$0xff] %vm198, %v2823
      %v2860 = vld [vmem:[#allocation2] sm:$0xff]
      %v2861 = vld [vmem:[#allocation2 + $0x8] sm:$0xff]
      %v2862 = vld [vmem:[#allocation2 + $0x10] sm:$0xff]
      %v2863 = vld [vmem:[#allocation2 + $0x18] sm:$0xff]
      %v2864 = vld [vmem:[#allocation2 + $0x20] sm:$0xff]
      %v2865 = vld [vmem:[#allocation2 + $0x28] sm:$0xff]
      %v2866 = vld [vmem:[#allocation2 + $0x30] sm:$0xff]
      %v2867 = vld [vmem:[#allocation2 + $0x38] sm:$0xff]
      %v2868 = vld [vmem:[#allocation2 + $0x40] sm:$0xff]
      %v2869 = vld [vmem:[#allocation2 + $0x48] sm:$0xff]
      %v2870 = vld [vmem:[#allocation2 + $0x50] sm:$0xff]
      %v2871 = vld [vmem:[#allocation2 + $0x58] sm:$0xff]
      %v2872 = vld [vmem:[#allocation2 + $0x60] sm:$0xff]
      %v2873 = vld [vmem:[#allocation2 + $0x68] sm:$0xff]
      %v2874 = vld [vmem:[#allocation2 + $0x70] sm:$0xff]
      %v2875 = vld [vmem:[#allocation2 + $0x78] sm:$0xff]
      %v2876 = vld [vmem:[#allocation2 + $0x80] sm:$0xff]
      %v2877 = vld [vmem:[#allocation2 + $0x88] sm:$0xff]
      %v2878 = vld [vmem:[#allocation2 + $0x90] sm:$0xff]
      %v2879 = vld [vmem:[#allocation2 + $0x98] sm:$0xff]
      %v2880 = vld [vmem:[#allocation2 + $0xa0] sm:$0xff]
      %v2881 = vld [vmem:[#allocation2 + $0xa8] sm:$0xff]
      %v2882 = vld [vmem:[#allocation2 + $0xb0] sm:$0xff]
      %v2883 = vld [vmem:[#allocation2 + $0xb8] sm:$0xff]
      %v2884 = vld [vmem:[#allocation2 + $0xc0] sm:$0xff]
      %v2885 = vld [vmem:[#allocation2 + $0xc8] sm:$0xff]
      %v2886 = vld [vmem:[#allocation2 + $0xd0] sm:$0xff]
      %v2887 = vld [vmem:[#allocation2 + $0xd8] sm:$0xff]
      %v2888 = vld [vmem:[#allocation2 + $0xe0] sm:$0xff]
      %v2889 = vld [vmem:[#allocation2 + $0xe8] sm:$0xff]
      %v2890 = vld [vmem:[#allocation2 + $0xf0] sm:$0xff]
      %v2891 = vld [vmem:[#allocation2 + $0xf8] sm:$0xff]
      %v2892 = vld [vmem:[#allocation2 + $0x100] sm:$0xff]
      %v2893 = vld [vmem:[#allocation2 + $0x108] sm:$0xff]
      %v2894 = vld [vmem:[#allocation2 + $0x110] sm:$0xff]
      %v2895 = vld [vmem:[#allocation2 + $0x118] sm:$0xff]
      %2896 = vst.msk [vmem:[#allocation3] sm:$0xff] %vm198, %v2860
      %2897 = vst.msk [vmem:[#allocation3 + $0x8] sm:$0xff] %vm198, %v2861
      %2898 = vst.msk [vmem:[#allocation3 + $0x10] sm:$0xff] %vm198, %v2862
      %2899 = vst.msk [vmem:[#allocation3 + $0x18] sm:$0xff] %vm198, %v2863
      %2900 = vst.msk [vmem:[#allocation3 + $0x20] sm:$0xff] %vm198, %v2864
      %2901 = vst.msk [vmem:[#allocation3 + $0x28] sm:$0xff] %vm198, %v2865
      %2902 = vst.msk [vmem:[#allocation3 + $0x30] sm:$0xff] %vm198, %v2866
      %2903 = vst.msk [vmem:[#allocation3 + $0x38] sm:$0xff] %vm198, %v2867
      %2904 = vst.msk [vmem:[#allocation3 + $0x40] sm:$0xff] %vm198, %v2868
      %2905 = vst.msk [vmem:[#allocation3 + $0x48] sm:$0xff] %vm198, %v2869
      %2906 = vst.msk [vmem:[#allocation3 + $0x50] sm:$0xff] %vm198, %v2870
      %2907 = vst.msk [vmem:[#allocation3 + $0x58] sm:$0xff] %vm198, %v2871
      %2908 = vst.msk [vmem:[#allocation3 + $0x60] sm:$0xff] %vm198, %v2872
      %2909 = vst.msk [vmem:[#allocation3 + $0x68] sm:$0xff] %vm198, %v2873
      %2910 = vst.msk [vmem:[#allocation3 + $0x70] sm:$0xff] %vm198, %v2874
      %2911 = vst.msk [vmem:[#allocation3 + $0x78] sm:$0xff] %vm198, %v2875
      %2912 = vst.msk [vmem:[#allocation3 + $0x80] sm:$0xff] %vm198, %v2876
      %2913 = vst.msk [vmem:[#allocation3 + $0x88] sm:$0xff] %vm198, %v2877
      %2914 = vst.msk [vmem:[#allocation3 + $0x90] sm:$0xff] %vm198, %v2878
      %2915 = vst.msk [vmem:[#allocation3 + $0x98] sm:$0xff] %vm198, %v2879
      %2916 = vst.msk [vmem:[#allocation3 + $0xa0] sm:$0xff] %vm198, %v2880
      %2917 = vst.msk [vmem:[#allocation3 + $0xa8] sm:$0xff] %vm198, %v2881
      %2918 = vst.msk [vmem:[#allocation3 + $0xb0] sm:$0xff] %vm198, %v2882
      %2919 = vst.msk [vmem:[#allocation3 + $0xb8] sm:$0xff] %vm198, %v2883
      %2920 = vst.msk [vmem:[#allocation3 + $0xc0] sm:$0xff] %vm198, %v2884
      %2921 = vst.msk [vmem:[#allocation3 + $0xc8] sm:$0xff] %vm198, %v2885
      %2922 = vst.msk [vmem:[#allocation3 + $0xd0] sm:$0xff] %vm198, %v2886
      %2923 = vst.msk [vmem:[#allocation3 + $0xd8] sm:$0xff] %vm198, %v2887
      %2924 = vst.msk [vmem:[#allocation3 + $0xe0] sm:$0xff] %vm198, %v2888
      %2925 = vst.msk [vmem:[#allocation3 + $0xe8] sm:$0xff] %vm198, %v2889
      %2926 = vst.msk [vmem:[#allocation3 + $0xf0] sm:$0xff] %vm198, %v2890
      %2927 = vst.msk [vmem:[#allocation3 + $0xf8] sm:$0xff] %vm198, %v2891
      %2928 = vst.msk [vmem:[#allocation3 + $0x100] sm:$0xff] %vm198, %v2892
      %2929 = vst.msk [vmem:[#allocation3 + $0x108] sm:$0xff] %vm198, %v2893
      %2930 = vst.msk [vmem:[#allocation3 + $0x110] sm:$0xff] %vm198, %v2894
      %2931 = vst.msk [vmem:[#allocation3 + $0x118] sm:$0xff] %vm198, %v2895
      %v2932 = vld [vmem:[#allocation2 + $0x1] sm:$0xff]
      %v2933 = vld [vmem:[#allocation2 + $0x9] sm:$0xff]
      %v2934 = vld [vmem:[#allocation2 + $0x11] sm:$0xff]
      %v2935 = vld [vmem:[#allocation2 + $0x19] sm:$0xff]
      %v2936 = vld [vmem:[#allocation2 + $0x21] sm:$0xff]
      %v2937 = vld [vmem:[#allocation2 + $0x29] sm:$0xff]
      %v2938 = vld [vmem:[#allocation2 + $0x31] sm:$0xff]
      %v2939 = vld [vmem:[#allocation2 + $0x39] sm:$0xff]
      %v2940 = vld [vmem:[#allocation2 + $0x41] sm:$0xff]
      %v2941 = vld [vmem:[#allocation2 + $0x49] sm:$0xff]
      %v2942 = vld [vmem:[#allocation2 + $0x51] sm:$0xff]
      %v2943 = vld [vmem:[#allocation2 + $0x59] sm:$0xff]
      %v2944 = vld [vmem:[#allocation2 + $0x61] sm:$0xff]
      %v2945 = vld [vmem:[#allocation2 + $0x69] sm:$0xff]
      %v2946 = vld [vmem:[#allocation2 + $0x71] sm:$0xff]
      %v2947 = vld [vmem:[#allocation2 + $0x79] sm:$0xff]
      %v2948 = vld [vmem:[#allocation2 + $0x81] sm:$0xff]
      %v2949 = vld [vmem:[#allocation2 + $0x89] sm:$0xff]
      %v2950 = vld [vmem:[#allocation2 + $0x91] sm:$0xff]
      %v2951 = vld [vmem:[#allocation2 + $0x99] sm:$0xff]
      %v2952 = vld [vmem:[#allocation2 + $0xa1] sm:$0xff]
      %v2953 = vld [vmem:[#allocation2 + $0xa9] sm:$0xff]
      %v2954 = vld [vmem:[#allocation2 + $0xb1] sm:$0xff]
      %v2955 = vld [vmem:[#allocation2 + $0xb9] sm:$0xff]
      %v2956 = vld [vmem:[#allocation2 + $0xc1] sm:$0xff]
      %v2957 = vld [vmem:[#allocation2 + $0xc9] sm:$0xff]
      %v2958 = vld [vmem:[#allocation2 + $0xd1] sm:$0xff]
      %v2959 = vld [vmem:[#allocation2 + $0xd9] sm:$0xff]
      %v2960 = vld [vmem:[#allocation2 + $0xe1] sm:$0xff]
      %v2961 = vld [vmem:[#allocation2 + $0xe9] sm:$0xff]
      %v2962 = vld [vmem:[#allocation2 + $0xf1] sm:$0xff]
      %v2963 = vld [vmem:[#allocation2 + $0xf9] sm:$0xff]
      %v2964 = vld [vmem:[#allocation2 + $0x101] sm:$0xff]
      %v2965 = vld [vmem:[#allocation2 + $0x109] sm:$0xff]
      %v2966 = vld [vmem:[#allocation2 + $0x111] sm:$0xff]
      %v2967 = vld [vmem:[#allocation2 + $0x119] sm:$0xff]
      %3004 = vrot.lane.b32.xlu0 %v2932, 8
      %v3005 = vpop.permute.xlu0 %3004
      %3006 = vrot.lane.b32.xlu0 %v2933, 8
      %v3007 = vpop.permute.xlu0 %3006
      %3008 = vrot.lane.b32.xlu0 %v2934, 8
      %v3009 = vpop.permute.xlu0 %3008
      %3010 = vrot.lane.b32.xlu0 %v2935, 8
      %v3011 = vpop.permute.xlu0 %3010
      %3012 = vrot.lane.b32.xlu0 %v2936, 8
      %v3013 = vpop.permute.xlu0 %3012
      %3014 = vrot.lane.b32.xlu0 %v2937, 8
      %v3015 = vpop.permute.xlu0 %3014
      %3016 = vrot.lane.b32.xlu0 %v2938, 8
      %v3017 = vpop.permute.xlu0 %3016
      %3018 = vrot.lane.b32.xlu0 %v2939, 8
      %v3019 = vpop.permute.xlu0 %3018
      %3020 = vrot.lane.b32.xlu0 %v2940, 8
      %v3021 = vpop.permute.xlu0 %3020
      %3022 = vrot.lane.b32.xlu0 %v2941, 8
      %v3023 = vpop.permute.xlu0 %3022
      %3024 = vrot.lane.b32.xlu0 %v2942, 8
      %v3025 = vpop.permute.xlu0 %3024
      %3026 = vrot.lane.b32.xlu0 %v2943, 8
      %v3027 = vpop.permute.xlu0 %3026
      %3028 = vrot.lane.b32.xlu0 %v2944, 8
      %v3029 = vpop.permute.xlu0 %3028
      %3030 = vrot.lane.b32.xlu0 %v2945, 8
      %v3031 = vpop.permute.xlu0 %3030
      %3032 = vrot.lane.b32.xlu0 %v2946, 8
      %v3033 = vpop.permute.xlu0 %3032
      %3034 = vrot.lane.b32.xlu0 %v2947, 8
      %v3035 = vpop.permute.xlu0 %3034
      %3036 = vrot.lane.b32.xlu0 %v2948, 8
      %v3037 = vpop.permute.xlu0 %3036
      %3038 = vrot.lane.b32.xlu0 %v2949, 8
      %v3039 = vpop.permute.xlu0 %3038
      %3040 = vrot.lane.b32.xlu0 %v2950, 8
      %v3041 = vpop.permute.xlu0 %3040
      %3042 = vrot.lane.b32.xlu0 %v2951, 8
      %v3043 = vpop.permute.xlu0 %3042
      %3044 = vrot.lane.b32.xlu0 %v2952, 8
      %v3045 = vpop.permute.xlu0 %3044
      %3046 = vrot.lane.b32.xlu0 %v2953, 8
      %v3047 = vpop.permute.xlu0 %3046
      %3048 = vrot.lane.b32.xlu0 %v2954, 8
      %v3049 = vpop.permute.xlu0 %3048
      %3050 = vrot.lane.b32.xlu0 %v2955, 8
      %v3051 = vpop.permute.xlu0 %3050
      %3052 = vrot.lane.b32.xlu0 %v2956, 8
      %v3053 = vpop.permute.xlu0 %3052
      %3054 = vrot.lane.b32.xlu0 %v2957, 8
      %v3055 = vpop.permute.xlu0 %3054
      %3056 = vrot.lane.b32.xlu0 %v2958, 8
      %v3057 = vpop.permute.xlu0 %3056
      %3058 = vrot.lane.b32.xlu0 %v2959, 8
      %v3059 = vpop.permute.xlu0 %3058
      %3060 = vrot.lane.b32.xlu0 %v2960, 8
      %v3061 = vpop.permute.xlu0 %3060
      %3062 = vrot.lane.b32.xlu0 %v2961, 8
      %v3063 = vpop.permute.xlu0 %3062
      %3064 = vrot.lane.b32.xlu0 %v2962, 8
      %v3065 = vpop.permute.xlu0 %3064
      %3066 = vrot.lane.b32.xlu0 %v2963, 8
      %v3067 = vpop.permute.xlu0 %3066
      %3068 = vrot.lane.b32.xlu0 %v2964, 8
      %v3069 = vpop.permute.xlu0 %3068
      %3070 = vrot.lane.b32.xlu0 %v2965, 8
      %v3071 = vpop.permute.xlu0 %3070
      %3072 = vrot.lane.b32.xlu0 %v2966, 8
      %v3073 = vpop.permute.xlu0 %3072
      %3074 = vrot.lane.b32.xlu0 %v2967, 8
      %v3075 = vpop.permute.xlu0 %3074
      %3112 = vst.msk [vmem:[#allocation3] sm:$0xff] %vm610, %v3005
      %3113 = vst.msk [vmem:[#allocation3 + $0x8] sm:$0xff] %vm610, %v3007
      %3114 = vst.msk [vmem:[#allocation3 + $0x10] sm:$0xff] %vm610, %v3009
      %3115 = vst.msk [vmem:[#allocation3 + $0x18] sm:$0xff] %vm610, %v3011
      %3116 = vst.msk [vmem:[#allocation3 + $0x20] sm:$0xff] %vm610, %v3013
      %3117 = vst.msk [vmem:[#allocation3 + $0x28] sm:$0xff] %vm610, %v3015
      %3118 = vst.msk [vmem:[#allocation3 + $0x30] sm:$0xff] %vm610, %v3017
      %3119 = vst.msk [vmem:[#allocation3 + $0x38] sm:$0xff] %vm610, %v3019
      %3120 = vst.msk [vmem:[#allocation3 + $0x40] sm:$0xff] %vm610, %v3021
      %3121 = vst.msk [vmem:[#allocation3 + $0x48] sm:$0xff] %vm610, %v3023
      %3122 = vst.msk [vmem:[#allocation3 + $0x50] sm:$0xff] %vm610, %v3025
      %3123 = vst.msk [vmem:[#allocation3 + $0x58] sm:$0xff] %vm610, %v3027
      %3124 = vst.msk [vmem:[#allocation3 + $0x60] sm:$0xff] %vm610, %v3029
      %3125 = vst.msk [vmem:[#allocation3 + $0x68] sm:$0xff] %vm610, %v3031
      %3126 = vst.msk [vmem:[#allocation3 + $0x70] sm:$0xff] %vm610, %v3033
      %3127 = vst.msk [vmem:[#allocation3 + $0x78] sm:$0xff] %vm610, %v3035
      %3128 = vst.msk [vmem:[#allocation3 + $0x80] sm:$0xff] %vm610, %v3037
      %3129 = vst.msk [vmem:[#allocation3 + $0x88] sm:$0xff] %vm610, %v3039
      %3130 = vst.msk [vmem:[#allocation3 + $0x90] sm:$0xff] %vm610, %v3041
      %3131 = vst.msk [vmem:[#allocation3 + $0x98] sm:$0xff] %vm610, %v3043
      %3132 = vst.msk [vmem:[#allocation3 + $0xa0] sm:$0xff] %vm610, %v3045
      %3133 = vst.msk [vmem:[#allocation3 + $0xa8] sm:$0xff] %vm610, %v3047
      %3134 = vst.msk [vmem:[#allocation3 + $0xb0] sm:$0xff] %vm610, %v3049
      %3135 = vst.msk [vmem:[#allocation3 + $0xb8] sm:$0xff] %vm610, %v3051
      %3136 = vst.msk [vmem:[#allocation3 + $0xc0] sm:$0xff] %vm610, %v3053
      %3137 = vst.msk [vmem:[#allocation3 + $0xc8] sm:$0xff] %vm610, %v3055
      %3138 = vst.msk [vmem:[#allocation3 + $0xd0] sm:$0xff] %vm610, %v3057
      %3139 = vst.msk [vmem:[#allocation3 + $0xd8] sm:$0xff] %vm610, %v3059
      %3140 = vst.msk [vmem:[#allocation3 + $0xe0] sm:$0xff] %vm610, %v3061
      %3141 = vst.msk [vmem:[#allocation3 + $0xe8] sm:$0xff] %vm610, %v3063
      %3142 = vst.msk [vmem:[#allocation3 + $0xf0] sm:$0xff] %vm610, %v3065
      %3143 = vst.msk [vmem:[#allocation3 + $0xf8] sm:$0xff] %vm610, %v3067
      %3144 = vst.msk [vmem:[#allocation3 + $0x100] sm:$0xff] %vm610, %v3069
      %3145 = vst.msk [vmem:[#allocation3 + $0x108] sm:$0xff] %vm610, %v3071
      %3146 = vst.msk [vmem:[#allocation3 + $0x110] sm:$0xff] %vm610, %v3073
      %3147 = vst.msk [vmem:[#allocation3 + $0x118] sm:$0xff] %vm610, %v3075
      %v3148 = vld [vmem:[#allocation2 + $0x2] sm:$0xff]
      %v3149 = vld [vmem:[#allocation2 + $0xa] sm:$0xff]
      %v3150 = vld [vmem:[#allocation2 + $0x12] sm:$0xff]
      %v3151 = vld [vmem:[#allocation2 + $0x1a] sm:$0xff]
      %v3152 = vld [vmem:[#allocation2 + $0x22] sm:$0xff]
      %v3153 = vld [vmem:[#allocation2 + $0x2a] sm:$0xff]
      %v3154 = vld [vmem:[#allocation2 + $0x32] sm:$0xff]
      %v3155 = vld [vmem:[#allocation2 + $0x3a] sm:$0xff]
      %v3156 = vld [vmem:[#allocation2 + $0x42] sm:$0xff]
      %v3157 = vld [vmem:[#allocation2 + $0x4a] sm:$0xff]
      %v3158 = vld [vmem:[#allocation2 + $0x52] sm:$0xff]
      %v3159 = vld [vmem:[#allocation2 + $0x5a] sm:$0xff]
      %v3160 = vld [vmem:[#allocation2 + $0x62] sm:$0xff]
      %v3161 = vld [vmem:[#allocation2 + $0x6a] sm:$0xff]
      %v3162 = vld [vmem:[#allocation2 + $0x72] sm:$0xff]
      %v3163 = vld [vmem:[#allocation2 + $0x7a] sm:$0xff]
      %v3164 = vld [vmem:[#allocation2 + $0x82] sm:$0xff]
      %v3165 = vld [vmem:[#allocation2 + $0x8a] sm:$0xff]
      %v3166 = vld [vmem:[#allocation2 + $0x92] sm:$0xff]
      %v3167 = vld [vmem:[#allocation2 + $0x9a] sm:$0xff]
      %v3168 = vld [vmem:[#allocation2 + $0xa2] sm:$0xff]
      %v3169 = vld [vmem:[#allocation2 + $0xaa] sm:$0xff]
      %v3170 = vld [vmem:[#allocation2 + $0xb2] sm:$0xff]
      %v3171 = vld [vmem:[#allocation2 + $0xba] sm:$0xff]
      %v3172 = vld [vmem:[#allocation2 + $0xc2] sm:$0xff]
      %v3173 = vld [vmem:[#allocation2 + $0xca] sm:$0xff]
      %v3174 = vld [vmem:[#allocation2 + $0xd2] sm:$0xff]
      %v3175 = vld [vmem:[#allocation2 + $0xda] sm:$0xff]
      %v3176 = vld [vmem:[#allocation2 + $0xe2] sm:$0xff]
      %v3177 = vld [vmem:[#allocation2 + $0xea] sm:$0xff]
      %v3178 = vld [vmem:[#allocation2 + $0xf2] sm:$0xff]
      %v3179 = vld [vmem:[#allocation2 + $0xfa] sm:$0xff]
      %v3180 = vld [vmem:[#allocation2 + $0x102] sm:$0xff]
      %v3181 = vld [vmem:[#allocation2 + $0x10a] sm:$0xff]
      %v3182 = vld [vmem:[#allocation2 + $0x112] sm:$0xff]
      %v3183 = vld [vmem:[#allocation2 + $0x11a] sm:$0xff]
      %3220 = vrot.lane.b32.xlu0 %v3148, 16
      %v3221 = vpop.permute.xlu0 %3220
      %3222 = vrot.lane.b32.xlu0 %v3149, 16
      %v3223 = vpop.permute.xlu0 %3222
      %3224 = vrot.lane.b32.xlu0 %v3150, 16
      %v3225 = vpop.permute.xlu0 %3224
      %3226 = vrot.lane.b32.xlu0 %v3151, 16
      %v3227 = vpop.permute.xlu0 %3226
      %3228 = vrot.lane.b32.xlu0 %v3152, 16
      %v3229 = vpop.permute.xlu0 %3228
      %3230 = vrot.lane.b32.xlu0 %v3153, 16
      %v3231 = vpop.permute.xlu0 %3230
      %3232 = vrot.lane.b32.xlu0 %v3154, 16
      %v3233 = vpop.permute.xlu0 %3232
      %3234 = vrot.lane.b32.xlu0 %v3155, 16
      %v3235 = vpop.permute.xlu0 %3234
      %3236 = vrot.lane.b32.xlu0 %v3156, 16
      %v3237 = vpop.permute.xlu0 %3236
      %3238 = vrot.lane.b32.xlu0 %v3157, 16
      %v3239 = vpop.permute.xlu0 %3238
      %3240 = vrot.lane.b32.xlu0 %v3158, 16
      %v3241 = vpop.permute.xlu0 %3240
      %3242 = vrot.lane.b32.xlu0 %v3159, 16
      %v3243 = vpop.permute.xlu0 %3242
      %3244 = vrot.lane.b32.xlu0 %v3160, 16
      %v3245 = vpop.permute.xlu0 %3244
      %3246 = vrot.lane.b32.xlu0 %v3161, 16
      %v3247 = vpop.permute.xlu0 %3246
      %3248 = vrot.lane.b32.xlu0 %v3162, 16
      %v3249 = vpop.permute.xlu0 %3248
      %3250 = vrot.lane.b32.xlu0 %v3163, 16
      %v3251 = vpop.permute.xlu0 %3250
      %3252 = vrot.lane.b32.xlu0 %v3164, 16
      %v3253 = vpop.permute.xlu0 %3252
      %3254 = vrot.lane.b32.xlu0 %v3165, 16
      %v3255 = vpop.permute.xlu0 %3254
      %3256 = vrot.lane.b32.xlu0 %v3166, 16
      %v3257 = vpop.permute.xlu0 %3256
      %3258 = vrot.lane.b32.xlu0 %v3167, 16
      %v3259 = vpop.permute.xlu0 %3258
      %3260 = vrot.lane.b32.xlu0 %v3168, 16
      %v3261 = vpop.permute.xlu0 %3260
      %3262 = vrot.lane.b32.xlu0 %v3169, 16
      %v3263 = vpop.permute.xlu0 %3262
      %3264 = vrot.lane.b32.xlu0 %v3170, 16
      %v3265 = vpop.permute.xlu0 %3264
      %3266 = vrot.lane.b32.xlu0 %v3171, 16
      %v3267 = vpop.permute.xlu0 %3266
      %3268 = vrot.lane.b32.xlu0 %v3172, 16
      %v3269 = vpop.permute.xlu0 %3268
      %3270 = vrot.lane.b32.xlu0 %v3173, 16
      %v3271 = vpop.permute.xlu0 %3270
      %3272 = vrot.lane.b32.xlu0 %v3174, 16
      %v3273 = vpop.permute.xlu0 %3272
      %3274 = vrot.lane.b32.xlu0 %v3175, 16
      %v3275 = vpop.permute.xlu0 %3274
      %3276 = vrot.lane.b32.xlu0 %v3176, 16
      %v3277 = vpop.permute.xlu0 %3276
      %3278 = vrot.lane.b32.xlu0 %v3177, 16
      %v3279 = vpop.permute.xlu0 %3278
      %3280 = vrot.lane.b32.xlu0 %v3178, 16
      %v3281 = vpop.permute.xlu0 %3280
      %3282 = vrot.lane.b32.xlu0 %v3179, 16
      %v3283 = vpop.permute.xlu0 %3282
      %3284 = vrot.lane.b32.xlu0 %v3180, 16
      %v3285 = vpop.permute.xlu0 %3284
      %3286 = vrot.lane.b32.xlu0 %v3181, 16
      %v3287 = vpop.permute.xlu0 %3286
      %3288 = vrot.lane.b32.xlu0 %v3182, 16
      %v3289 = vpop.permute.xlu0 %3288
      %3290 = vrot.lane.b32.xlu0 %v3183, 16
      %v3291 = vpop.permute.xlu0 %3290
      %3328 = vst.msk [vmem:[#allocation3] sm:$0xff] %vm827, %v3221
      %3329 = vst.msk [vmem:[#allocation3 + $0x8] sm:$0xff] %vm827, %v3223
      %3330 = vst.msk [vmem:[#allocation3 + $0x10] sm:$0xff] %vm827, %v3225
      %3331 = vst.msk [vmem:[#allocation3 + $0x18] sm:$0xff] %vm827, %v3227
      %3332 = vst.msk [vmem:[#allocation3 + $0x20] sm:$0xff] %vm827, %v3229
      %3333 = vst.msk [vmem:[#allocation3 + $0x28] sm:$0xff] %vm827, %v3231
      %3334 = vst.msk [vmem:[#allocation3 + $0x30] sm:$0xff] %vm827, %v3233
      %3335 = vst.msk [vmem:[#allocation3 + $0x38] sm:$0xff] %vm827, %v3235
      %3336 = vst.msk [vmem:[#allocation3 + $0x40] sm:$0xff] %vm827, %v3237
      %3337 = vst.msk [vmem:[#allocation3 + $0x48] sm:$0xff] %vm827, %v3239
      %3338 = vst.msk [vmem:[#allocation3 + $0x50] sm:$0xff] %vm827, %v3241
      %3339 = vst.msk [vmem:[#allocation3 + $0x58] sm:$0xff] %vm827, %v3243
      %3340 = vst.msk [vmem:[#allocation3 + $0x60] sm:$0xff] %vm827, %v3245
      %3341 = vst.msk [vmem:[#allocation3 + $0x68] sm:$0xff] %vm827, %v3247
      %3342 = vst.msk [vmem:[#allocation3 + $0x70] sm:$0xff] %vm827, %v3249
      %3343 = vst.msk [vmem:[#allocation3 + $0x78] sm:$0xff] %vm827, %v3251
      %3344 = vst.msk [vmem:[#allocation3 + $0x80] sm:$0xff] %vm827, %v3253
      %3345 = vst.msk [vmem:[#allocation3 + $0x88] sm:$0xff] %vm827, %v3255
      %3346 = vst.msk [vmem:[#allocation3 + $0x90] sm:$0xff] %vm827, %v3257
      %3347 = vst.msk [vmem:[#allocation3 + $0x98] sm:$0xff] %vm827, %v3259
      %3348 = vst.msk [vmem:[#allocation3 + $0xa0] sm:$0xff] %vm827, %v3261
      %3349 = vst.msk [vmem:[#allocation3 + $0xa8] sm:$0xff] %vm827, %v3263
      %3350 = vst.msk [vmem:[#allocation3 + $0xb0] sm:$0xff] %vm827, %v3265
      %3351 = vst.msk [vmem:[#allocation3 + $0xb8] sm:$0xff] %vm827, %v3267
      %3352 = vst.msk [vmem:[#allocation3 + $0xc0] sm:$0xff] %vm827, %v3269
      %3353 = vst.msk [vmem:[#allocation3 + $0xc8] sm:$0xff] %vm827, %v3271
      %3354 = vst.msk [vmem:[#allocation3 + $0xd0] sm:$0xff] %vm827, %v3273
      %3355 = vst.msk [vmem:[#allocation3 + $0xd8] sm:$0xff] %vm827, %v3275
      %3356 = vst.msk [vmem:[#allocation3 + $0xe0] sm:$0xff] %vm827, %v3277
      %3357 = vst.msk [vmem:[#allocation3 + $0xe8] sm:$0xff] %vm827, %v3279
      %3358 = vst.msk [vmem:[#allocation3 + $0xf0] sm:$0xff] %vm827, %v3281
      %3359 = vst.msk [vmem:[#allocation3 + $0xf8] sm:$0xff] %vm827, %v3283
      %3360 = vst.msk [vmem:[#allocation3 + $0x100] sm:$0xff] %vm827, %v3285
      %3361 = vst.msk [vmem:[#allocation3 + $0x108] sm:$0xff] %vm827, %v3287
      %3362 = vst.msk [vmem:[#allocation3 + $0x110] sm:$0xff] %vm827, %v3289
      %3363 = vst.msk [vmem:[#allocation3 + $0x118] sm:$0xff] %vm827, %v3291
      %v3364 = vld [vmem:[#allocation2 + $0x12] sm:$0xff]
      %v3365 = vld [vmem:[#allocation2 + $0x1a] sm:$0xff]
      %v3366 = vld [vmem:[#allocation2 + $0x22] sm:$0xff]
      %v3367 = vld [vmem:[#allocation2 + $0x2a] sm:$0xff]
      %v3368 = vld [vmem:[#allocation2 + $0x32] sm:$0xff]
      %v3369 = vld [vmem:[#allocation2 + $0x3a] sm:$0xff]
      %v3370 = vld [vmem:[#allocation2 + $0x42] sm:$0xff]
      %v3371 = vld [vmem:[#allocation2 + $0x4a] sm:$0xff]
      %v3372 = vld [vmem:[#allocation2 + $0x52] sm:$0xff]
      %v3373 = vld [vmem:[#allocation2 + $0x5a] sm:$0xff]
      %v3374 = vld [vmem:[#allocation2 + $0x62] sm:$0xff]
      %v3375 = vld [vmem:[#allocation2 + $0x6a] sm:$0xff]
      %v3376 = vld [vmem:[#allocation2 + $0x72] sm:$0xff]
      %v3377 = vld [vmem:[#allocation2 + $0x7a] sm:$0xff]
      %v3378 = vld [vmem:[#allocation2 + $0x82] sm:$0xff]
      %v3379 = vld [vmem:[#allocation2 + $0x8a] sm:$0xff]
      %v3380 = vld [vmem:[#allocation2 + $0x92] sm:$0xff]
      %v3381 = vld [vmem:[#allocation2 + $0x9a] sm:$0xff]
      %v3382 = vld [vmem:[#allocation2 + $0xa2] sm:$0xff]
      %v3383 = vld [vmem:[#allocation2 + $0xaa] sm:$0xff]
      %v3384 = vld [vmem:[#allocation2 + $0xb2] sm:$0xff]
      %v3385 = vld [vmem:[#allocation2 + $0xba] sm:$0xff]
      %v3386 = vld [vmem:[#allocation2 + $0xc2] sm:$0xff]
      %v3387 = vld [vmem:[#allocation2 + $0xca] sm:$0xff]
      %v3388 = vld [vmem:[#allocation2 + $0xd2] sm:$0xff]
      %v3389 = vld [vmem:[#allocation2 + $0xda] sm:$0xff]
      %v3390 = vld [vmem:[#allocation2 + $0xe2] sm:$0xff]
      %v3391 = vld [vmem:[#allocation2 + $0xea] sm:$0xff]
      %v3392 = vld [vmem:[#allocation2 + $0xf2] sm:$0xff]
      %v3393 = vld [vmem:[#allocation2 + $0xfa] sm:$0xff]
      %v3394 = vld [vmem:[#allocation2 + $0x102] sm:$0xff]
      %v3395 = vld [vmem:[#allocation2 + $0x10a] sm:$0xff]
      %v3396 = vld [vmem:[#allocation2 + $0x112] sm:$0xff]
      %v3397 = vld [vmem:[#allocation2 + $0x11a] sm:$0xff]
      %v3398 = vld [vmem:[#allocation2 + $0x122] sm:$0xff]
      %v3399 = vld [vmem:[#allocation2 + $0x12a] sm:$0xff]
      %3436 = vrot.lane.b32.xlu0 %v3364, 24
      %v3437 = vpop.permute.xlu0 %3436
      %3438 = vrot.lane.b32.xlu0 %v3365, 24
      %v3439 = vpop.permute.xlu0 %3438
      %3440 = vrot.lane.b32.xlu0 %v3366, 24
      %v3441 = vpop.permute.xlu0 %3440
      %3442 = vrot.lane.b32.xlu0 %v3367, 24
      %v3443 = vpop.permute.xlu0 %3442
      %3444 = vrot.lane.b32.xlu0 %v3368, 24
      %v3445 = vpop.permute.xlu0 %3444
      %3446 = vrot.lane.b32.xlu0 %v3369, 24
      %v3447 = vpop.permute.xlu0 %3446
      %3448 = vrot.lane.b32.xlu0 %v3370, 24
      %v3449 = vpop.permute.xlu0 %3448
      %3450 = vrot.lane.b32.xlu0 %v3371, 24
      %v3451 = vpop.permute.xlu0 %3450
      %3452 = vrot.lane.b32.xlu0 %v3372, 24
      %v3453 = vpop.permute.xlu0 %3452
      %3454 = vrot.lane.b32.xlu0 %v3373, 24
      %v3455 = vpop.permute.xlu0 %3454
      %3456 = vrot.lane.b32.xlu0 %v3374, 24
      %v3457 = vpop.permute.xlu0 %3456
      %3458 = vrot.lane.b32.xlu0 %v3375, 24
      %v3459 = vpop.permute.xlu0 %3458
      %3460 = vrot.lane.b32.xlu0 %v3376, 24
      %v3461 = vpop.permute.xlu0 %3460
      %3462 = vrot.lane.b32.xlu0 %v3377, 24
      %v3463 = vpop.permute.xlu0 %3462
      %3464 = vrot.lane.b32.xlu0 %v3378, 24
      %v3465 = vpop.permute.xlu0 %3464
      %3466 = vrot.lane.b32.xlu0 %v3379, 24
      %v3467 = vpop.permute.xlu0 %3466
      %3468 = vrot.lane.b32.xlu0 %v3380, 24
      %v3469 = vpop.permute.xlu0 %3468
      %3470 = vrot.lane.b32.xlu0 %v3381, 24
      %v3471 = vpop.permute.xlu0 %3470
      %3472 = vrot.lane.b32.xlu0 %v3382, 24
      %v3473 = vpop.permute.xlu0 %3472
      %3474 = vrot.lane.b32.xlu0 %v3383, 24
      %v3475 = vpop.permute.xlu0 %3474
      %3476 = vrot.lane.b32.xlu0 %v3384, 24
      %v3477 = vpop.permute.xlu0 %3476
      %3478 = vrot.lane.b32.xlu0 %v3385, 24
      %v3479 = vpop.permute.xlu0 %3478
      %3480 = vrot.lane.b32.xlu0 %v3386, 24
      %v3481 = vpop.permute.xlu0 %3480
      %3482 = vrot.lane.b32.xlu0 %v3387, 24
      %v3483 = vpop.permute.xlu0 %3482
      %3484 = vrot.lane.b32.xlu0 %v3388, 24
      %v3485 = vpop.permute.xlu0 %3484
      %3486 = vrot.lane.b32.xlu0 %v3389, 24
      %v3487 = vpop.permute.xlu0 %3486
      %3488 = vrot.lane.b32.xlu0 %v3390, 24
      %v3489 = vpop.permute.xlu0 %3488
      %3490 = vrot.lane.b32.xlu0 %v3391, 24
      %v3491 = vpop.permute.xlu0 %3490
      %3492 = vrot.lane.b32.xlu0 %v3392, 24
      %v3493 = vpop.permute.xlu0 %3492
      %3494 = vrot.lane.b32.xlu0 %v3393, 24
      %v3495 = vpop.permute.xlu0 %3494
      %3496 = vrot.lane.b32.xlu0 %v3394, 24
      %v3497 = vpop.permute.xlu0 %3496
      %3498 = vrot.lane.b32.xlu0 %v3395, 24
      %v3499 = vpop.permute.xlu0 %3498
      %3500 = vrot.lane.b32.xlu0 %v3396, 24
      %v3501 = vpop.permute.xlu0 %3500
      %3502 = vrot.lane.b32.xlu0 %v3397, 24
      %v3503 = vpop.permute.xlu0 %3502
      %3504 = vrot.lane.b32.xlu0 %v3398, 24
      %v3505 = vpop.permute.xlu0 %3504
      %3506 = vrot.lane.b32.xlu0 %v3399, 24
      %v3507 = vpop.permute.xlu0 %3506
      %3544 = vst.msk [vmem:[#allocation3] sm:$0xff] %vm1044, %v3437
      %3545 = vst.msk [vmem:[#allocation3 + $0x8] sm:$0xff] %vm1044, %v3439
      %3546 = vst.msk [vmem:[#allocation3 + $0x10] sm:$0xff] %vm1044, %v3441
      %3547 = vst.msk [vmem:[#allocation3 + $0x18] sm:$0xff] %vm1044, %v3443
      %3548 = vst.msk [vmem:[#allocation3 + $0x20] sm:$0xff] %vm1044, %v3445
      %3549 = vst.msk [vmem:[#allocation3 + $0x28] sm:$0xff] %vm1044, %v3447
      %3550 = vst.msk [vmem:[#allocation3 + $0x30] sm:$0xff] %vm1044, %v3449
      %3551 = vst.msk [vmem:[#allocation3 + $0x38] sm:$0xff] %vm1044, %v3451
      %3552 = vst.msk [vmem:[#allocation3 + $0x40] sm:$0xff] %vm1044, %v3453
      %3553 = vst.msk [vmem:[#allocation3 + $0x48] sm:$0xff] %vm1044, %v3455
      %3554 = vst.msk [vmem:[#allocation3 + $0x50] sm:$0xff] %vm1044, %v3457
      %3555 = vst.msk [vmem:[#allocation3 + $0x58] sm:$0xff] %vm1044, %v3459
      %3556 = vst.msk [vmem:[#allocation3 + $0x60] sm:$0xff] %vm1044, %v3461
      %3557 = vst.msk [vmem:[#allocation3 + $0x68] sm:$0xff] %vm1044, %v3463
      %3558 = vst.msk [vmem:[#allocation3 + $0x70] sm:$0xff] %vm1044, %v3465
      %3559 = vst.msk [vmem:[#allocation3 + $0x78] sm:$0xff] %vm1044, %v3467
      %3560 = vst.msk [vmem:[#allocation3 + $0x80] sm:$0xff] %vm1044, %v3469
      %3561 = vst.msk [vmem:[#allocation3 + $0x88] sm:$0xff] %vm1044, %v3471
      %3562 = vst.msk [vmem:[#allocation3 + $0x90] sm:$0xff] %vm1044, %v3473
      %3563 = vst.msk [vmem:[#allocation3 + $0x98] sm:$0xff] %vm1044, %v3475
      %3564 = vst.msk [vmem:[#allocation3 + $0xa0] sm:$0xff] %vm1044, %v3477
      %3565 = vst.msk [vmem:[#allocation3 + $0xa8] sm:$0xff] %vm1044, %v3479
      %3566 = vst.msk [vmem:[#allocation3 + $0xb0] sm:$0xff] %vm1044, %v3481
      %3567 = vst.msk [vmem:[#allocation3 + $0xb8] sm:$0xff] %vm1044, %v3483
      %3568 = vst.msk [vmem:[#allocation3 + $0xc0] sm:$0xff] %vm1044, %v3485
      %3569 = vst.msk [vmem:[#allocation3 + $0xc8] sm:$0xff] %vm1044, %v3487
      %3570 = vst.msk [vmem:[#allocation3 + $0xd0] sm:$0xff] %vm1044, %v3489
      %3571 = vst.msk [vmem:[#allocation3 + $0xd8] sm:$0xff] %vm1044, %v3491
      %3572 = vst.msk [vmem:[#allocation3 + $0xe0] sm:$0xff] %vm1044, %v3493
      %3573 = vst.msk [vmem:[#allocation3 + $0xe8] sm:$0xff] %vm1044, %v3495
      %3574 = vst.msk [vmem:[#allocation3 + $0xf0] sm:$0xff] %vm1044, %v3497
      %3575 = vst.msk [vmem:[#allocation3 + $0xf8] sm:$0xff] %vm1044, %v3499
      %3576 = vst.msk [vmem:[#allocation3 + $0x100] sm:$0xff] %vm1044, %v3501
      %3577 = vst.msk [vmem:[#allocation3 + $0x108] sm:$0xff] %vm1044, %v3503
      %3578 = vst.msk [vmem:[#allocation3 + $0x110] sm:$0xff] %vm1044, %v3505
      %3579 = vst.msk [vmem:[#allocation3 + $0x118] sm:$0xff] %vm1044, %v3507
      %v3580 = vld [vmem:[#allocation2 + $0x13] sm:$0xff]
      %v3581 = vld [vmem:[#allocation2 + $0x1b] sm:$0xff]
      %v3582 = vld [vmem:[#allocation2 + $0x23] sm:$0xff]
      %v3583 = vld [vmem:[#allocation2 + $0x2b] sm:$0xff]
      %v3584 = vld [vmem:[#allocation2 + $0x33] sm:$0xff]
      %v3585 = vld [vmem:[#allocation2 + $0x3b] sm:$0xff]
      %v3586 = vld [vmem:[#allocation2 + $0x43] sm:$0xff]
      %v3587 = vld [vmem:[#allocation2 + $0x4b] sm:$0xff]
      %v3588 = vld [vmem:[#allocation2 + $0x53] sm:$0xff]
      %v3589 = vld [vmem:[#allocation2 + $0x5b] sm:$0xff]
      %v3590 = vld [vmem:[#allocation2 + $0x63] sm:$0xff]
      %v3591 = vld [vmem:[#allocation2 + $0x6b] sm:$0xff]
      %v3592 = vld [vmem:[#allocation2 + $0x73] sm:$0xff]
      %v3593 = vld [vmem:[#allocation2 + $0x7b] sm:$0xff]
      %v3594 = vld [vmem:[#allocation2 + $0x83] sm:$0xff]
      %v3595 = vld [vmem:[#allocation2 + $0x8b] sm:$0xff]
      %v3596 = vld [vmem:[#allocation2 + $0x93] sm:$0xff]
      %v3597 = vld [vmem:[#allocation2 + $0x9b] sm:$0xff]
      %v3598 = vld [vmem:[#allocation2 + $0xa3] sm:$0xff]
      %v3599 = vld [vmem:[#allocation2 + $0xab] sm:$0xff]
      %v3600 = vld [vmem:[#allocation2 + $0xb3] sm:$0xff]
      %v3601 = vld [vmem:[#allocation2 + $0xbb] sm:$0xff]
      %v3602 = vld [vmem:[#allocation2 + $0xc3] sm:$0xff]
      %v3603 = vld [vmem:[#allocation2 + $0xcb] sm:$0xff]
      %v3604 = vld [vmem:[#allocation2 + $0xd3] sm:$0xff]
      %v3605 = vld [vmem:[#allocation2 + $0xdb] sm:$0xff]
      %v3606 = vld [vmem:[#allocation2 + $0xe3] sm:$0xff]
      %v3607 = vld [vmem:[#allocation2 + $0xeb] sm:$0xff]
      %v3608 = vld [vmem:[#allocation2 + $0xf3] sm:$0xff]
      %v3609 = vld [vmem:[#allocation2 + $0xfb] sm:$0xff]
      %v3610 = vld [vmem:[#allocation2 + $0x103] sm:$0xff]
      %v3611 = vld [vmem:[#allocation2 + $0x10b] sm:$0xff]
      %v3612 = vld [vmem:[#allocation2 + $0x113] sm:$0xff]
      %v3613 = vld [vmem:[#allocation2 + $0x11b] sm:$0xff]
      %v3614 = vld [vmem:[#allocation2 + $0x123] sm:$0xff]
      %v3615 = vld [vmem:[#allocation2 + $0x12b] sm:$0xff]
      %3652 = vrot.lane.b32.xlu0 %v3580, 32
      %v3653 = vpop.permute.xlu0 %3652
      %3654 = vrot.lane.b32.xlu0 %v3581, 32
      %v3655 = vpop.permute.xlu0 %3654
      %3656 = vrot.lane.b32.xlu0 %v3582, 32
      %v3657 = vpop.permute.xlu0 %3656
      %3658 = vrot.lane.b32.xlu0 %v3583, 32
      %v3659 = vpop.permute.xlu0 %3658
      %3660 = vrot.lane.b32.xlu0 %v3584, 32
      %v3661 = vpop.permute.xlu0 %3660
      %3662 = vrot.lane.b32.xlu0 %v3585, 32
      %v3663 = vpop.permute.xlu0 %3662
      %3664 = vrot.lane.b32.xlu0 %v3586, 32
      %v3665 = vpop.permute.xlu0 %3664
      %3666 = vrot.lane.b32.xlu0 %v3587, 32
      %v3667 = vpop.permute.xlu0 %3666
      %3668 = vrot.lane.b32.xlu0 %v3588, 32
      %v3669 = vpop.permute.xlu0 %3668
      %3670 = vrot.lane.b32.xlu0 %v3589, 32
      %v3671 = vpop.permute.xlu0 %3670
      %3672 = vrot.lane.b32.xlu0 %v3590, 32
      %v3673 = vpop.permute.xlu0 %3672
      %3674 = vrot.lane.b32.xlu0 %v3591, 32
      %v3675 = vpop.permute.xlu0 %3674
      %3676 = vrot.lane.b32.xlu0 %v3592, 32
      %v3677 = vpop.permute.xlu0 %3676
      %3678 = vrot.lane.b32.xlu0 %v3593, 32
      %v3679 = vpop.permute.xlu0 %3678
      %3680 = vrot.lane.b32.xlu0 %v3594, 32
      %v3681 = vpop.permute.xlu0 %3680
      %3682 = vrot.lane.b32.xlu0 %v3595, 32
      %v3683 = vpop.permute.xlu0 %3682
      %3684 = vrot.lane.b32.xlu0 %v3596, 32
      %v3685 = vpop.permute.xlu0 %3684
      %3686 = vrot.lane.b32.xlu0 %v3597, 32
      %v3687 = vpop.permute.xlu0 %3686
      %3688 = vrot.lane.b32.xlu0 %v3598, 32
      %v3689 = vpop.permute.xlu0 %3688
      %3690 = vrot.lane.b32.xlu0 %v3599, 32
      %v3691 = vpop.permute.xlu0 %3690
      %3692 = vrot.lane.b32.xlu0 %v3600, 32
      %v3693 = vpop.permute.xlu0 %3692
      %3694 = vrot.lane.b32.xlu0 %v3601, 32
      %v3695 = vpop.permute.xlu0 %3694
      %3696 = vrot.lane.b32.xlu0 %v3602, 32
      %v3697 = vpop.permute.xlu0 %3696
      %3698 = vrot.lane.b32.xlu0 %v3603, 32
      %v3699 = vpop.permute.xlu0 %3698
      %3700 = vrot.lane.b32.xlu0 %v3604, 32
      %v3701 = vpop.permute.xlu0 %3700
      %3702 = vrot.lane.b32.xlu0 %v3605, 32
      %v3703 = vpop.permute.xlu0 %3702
      %3704 = vrot.lane.b32.xlu0 %v3606, 32
      %v3705 = vpop.permute.xlu0 %3704
      %3706 = vrot.lane.b32.xlu0 %v3607, 32
      %v3707 = vpop.permute.xlu0 %3706
      %3708 = vrot.lane.b32.xlu0 %v3608, 32
      %v3709 = vpop.permute.xlu0 %3708
      %3710 = vrot.lane.b32.xlu0 %v3609, 32
      %v3711 = vpop.permute.xlu0 %3710
      %3712 = vrot.lane.b32.xlu0 %v3610, 32
      %v3713 = vpop.permute.xlu0 %3712
      %3714 = vrot.lane.b32.xlu0 %v3611, 32
      %v3715 = vpop.permute.xlu0 %3714
      %3716 = vrot.lane.b32.xlu0 %v3612, 32
      %v3717 = vpop.permute.xlu0 %3716
      %3718 = vrot.lane.b32.xlu0 %v3613, 32
      %v3719 = vpop.permute.xlu0 %3718
      %3720 = vrot.lane.b32.xlu0 %v3614, 32
      %v3721 = vpop.permute.xlu0 %3720
      %3722 = vrot.lane.b32.xlu0 %v3615, 32
      %v3723 = vpop.permute.xlu0 %3722
      %3760 = vst.msk [vmem:[#allocation3] sm:$0xff] %vm1261, %v3653
      %3761 = vst.msk [vmem:[#allocation3 + $0x8] sm:$0xff] %vm1261, %v3655
      %3762 = vst.msk [vmem:[#allocation3 + $0x10] sm:$0xff] %vm1261, %v3657
      %3763 = vst.msk [vmem:[#allocation3 + $0x18] sm:$0xff] %vm1261, %v3659
      %3764 = vst.msk [vmem:[#allocation3 + $0x20] sm:$0xff] %vm1261, %v3661
      %3765 = vst.msk [vmem:[#allocation3 + $0x28] sm:$0xff] %vm1261, %v3663
      %3766 = vst.msk [vmem:[#allocation3 + $0x30] sm:$0xff] %vm1261, %v3665
      %3767 = vst.msk [vmem:[#allocation3 + $0x38] sm:$0xff] %vm1261, %v3667
      %3768 = vst.msk [vmem:[#allocation3 + $0x40] sm:$0xff] %vm1261, %v3669
      %3769 = vst.msk [vmem:[#allocation3 + $0x48] sm:$0xff] %vm1261, %v3671
      %3770 = vst.msk [vmem:[#allocation3 + $0x50] sm:$0xff] %vm1261, %v3673
      %3771 = vst.msk [vmem:[#allocation3 + $0x58] sm:$0xff] %vm1261, %v3675
      %3772 = vst.msk [vmem:[#allocation3 + $0x60] sm:$0xff] %vm1261, %v3677
      %3773 = vst.msk [vmem:[#allocation3 + $0x68] sm:$0xff] %vm1261, %v3679
      %3774 = vst.msk [vmem:[#allocation3 + $0x70] sm:$0xff] %vm1261, %v3681
      %3775 = vst.msk [vmem:[#allocation3 + $0x78] sm:$0xff] %vm1261, %v3683
      %3776 = vst.msk [vmem:[#allocation3 + $0x80] sm:$0xff] %vm1261, %v3685
      %3777 = vst.msk [vmem:[#allocation3 + $0x88] sm:$0xff] %vm1261, %v3687
      %3778 = vst.msk [vmem:[#allocation3 + $0x90] sm:$0xff] %vm1261, %v3689
      %3779 = vst.msk [vmem:[#allocation3 + $0x98] sm:$0xff] %vm1261, %v3691
      %3780 = vst.msk [vmem:[#allocation3 + $0xa0] sm:$0xff] %vm1261, %v3693
      %3781 = vst.msk [vmem:[#allocation3 + $0xa8] sm:$0xff] %vm1261, %v3695
      %3782 = vst.msk [vmem:[#allocation3 + $0xb0] sm:$0xff] %vm1261, %v3697
      %3783 = vst.msk [vmem:[#allocation3 + $0xb8] sm:$0xff] %vm1261, %v3699
      %3784 = vst.msk [vmem:[#allocation3 + $0xc0] sm:$0xff] %vm1261, %v3701
      %3785 = vst.msk [vmem:[#allocation3 + $0xc8] sm:$0xff] %vm1261, %v3703
      %3786 = vst.msk [vmem:[#allocation3 + $0xd0] sm:$0xff] %vm1261, %v3705
      %3787 = vst.msk [vmem:[#allocation3 + $0xd8] sm:$0xff] %vm1261, %v3707
      %3788 = vst.msk [vmem:[#allocation3 + $0xe0] sm:$0xff] %vm1261, %v3709
      %3789 = vst.msk [vmem:[#allocation3 + $0xe8] sm:$0xff] %vm1261, %v3711
      %3790 = vst.msk [vmem:[#allocation3 + $0xf0] sm:$0xff] %vm1261, %v3713
      %3791 = vst.msk [vmem:[#allocation3 + $0xf8] sm:$0xff] %vm1261, %v3715
      %3792 = vst.msk [vmem:[#allocation3 + $0x100] sm:$0xff] %vm1261, %v3717
      %3793 = vst.msk [vmem:[#allocation3 + $0x108] sm:$0xff] %vm1261, %v3719
      %3794 = vst.msk [vmem:[#allocation3 + $0x110] sm:$0xff] %vm1261, %v3721
      %3795 = vst.msk [vmem:[#allocation3 + $0x118] sm:$0xff] %vm1261, %v3723
      %v3796 = vld [vmem:[#allocation2 + $0x14] sm:$0xff]
      %v3797 = vld [vmem:[#allocation2 + $0x1c] sm:$0xff]
      %v3798 = vld [vmem:[#allocation2 + $0x24] sm:$0xff]
      %v3799 = vld [vmem:[#allocation2 + $0x2c] sm:$0xff]
      %v3800 = vld [vmem:[#allocation2 + $0x34] sm:$0xff]
      %v3801 = vld [vmem:[#allocation2 + $0x3c] sm:$0xff]
      %v3802 = vld [vmem:[#allocation2 + $0x44] sm:$0xff]
      %v3803 = vld [vmem:[#allocation2 + $0x4c] sm:$0xff]
      %v3804 = vld [vmem:[#allocation2 + $0x54] sm:$0xff]
      %v3805 = vld [vmem:[#allocation2 + $0x5c] sm:$0xff]
      %v3806 = vld [vmem:[#allocation2 + $0x64] sm:$0xff]
      %v3807 = vld [vmem:[#allocation2 + $0x6c] sm:$0xff]
      %v3808 = vld [vmem:[#allocation2 + $0x74] sm:$0xff]
      %v3809 = vld [vmem:[#allocation2 + $0x7c] sm:$0xff]
      %v3810 = vld [vmem:[#allocation2 + $0x84] sm:$0xff]
      %v3811 = vld [vmem:[#allocation2 + $0x8c] sm:$0xff]
      %v3812 = vld [vmem:[#allocation2 + $0x94] sm:$0xff]
      %v3813 = vld [vmem:[#allocation2 + $0x9c] sm:$0xff]
      %v3814 = vld [vmem:[#allocation2 + $0xa4] sm:$0xff]
      %v3815 = vld [vmem:[#allocation2 + $0xac] sm:$0xff]
      %v3816 = vld [vmem:[#allocation2 + $0xb4] sm:$0xff]
      %v3817 = vld [vmem:[#allocation2 + $0xbc] sm:$0xff]
      %v3818 = vld [vmem:[#allocation2 + $0xc4] sm:$0xff]
      %v3819 = vld [vmem:[#allocation2 + $0xcc] sm:$0xff]
      %v3820 = vld [vmem:[#allocation2 + $0xd4] sm:$0xff]
      %v3821 = vld [vmem:[#allocation2 + $0xdc] sm:$0xff]
      %v3822 = vld [vmem:[#allocation2 + $0xe4] sm:$0xff]
      %v3823 = vld [vmem:[#allocation2 + $0xec] sm:$0xff]
      %v3824 = vld [vmem:[#allocation2 + $0xf4] sm:$0xff]
      %v3825 = vld [vmem:[#allocation2 + $0xfc] sm:$0xff]
      %v3826 = vld [vmem:[#allocation2 + $0x104] sm:$0xff]
      %v3827 = vld [vmem:[#allocation2 + $0x10c] sm:$0xff]
      %v3828 = vld [vmem:[#allocation2 + $0x114] sm:$0xff]
      %v3829 = vld [vmem:[#allocation2 + $0x11c] sm:$0xff]
      %v3830 = vld [vmem:[#allocation2 + $0x124] sm:$0xff]
      %v3831 = vld [vmem:[#allocation2 + $0x12c] sm:$0xff]
      %3868 = vrot.lane.b32.xlu0 %v3796, 40
      %v3869 = vpop.permute.xlu0 %3868
      %3870 = vrot.lane.b32.xlu0 %v3797, 40
      %v3871 = vpop.permute.xlu0 %3870
      %3872 = vrot.lane.b32.xlu0 %v3798, 40
      %v3873 = vpop.permute.xlu0 %3872
      %3874 = vrot.lane.b32.xlu0 %v3799, 40
      %v3875 = vpop.permute.xlu0 %3874
      %3876 = vrot.lane.b32.xlu0 %v3800, 40
      %v3877 = vpop.permute.xlu0 %3876
      %3878 = vrot.lane.b32.xlu0 %v3801, 40
      %v3879 = vpop.permute.xlu0 %3878
      %3880 = vrot.lane.b32.xlu0 %v3802, 40
      %v3881 = vpop.permute.xlu0 %3880
      %3882 = vrot.lane.b32.xlu0 %v3803, 40
      %v3883 = vpop.permute.xlu0 %3882
      %3884 = vrot.lane.b32.xlu0 %v3804, 40
      %v3885 = vpop.permute.xlu0 %3884
      %3886 = vrot.lane.b32.xlu0 %v3805, 40
      %v3887 = vpop.permute.xlu0 %3886
      %3888 = vrot.lane.b32.xlu0 %v3806, 40
      %v3889 = vpop.permute.xlu0 %3888
      %3890 = vrot.lane.b32.xlu0 %v3807, 40
      %v3891 = vpop.permute.xlu0 %3890
      %3892 = vrot.lane.b32.xlu0 %v3808, 40
      %v3893 = vpop.permute.xlu0 %3892
      %3894 = vrot.lane.b32.xlu0 %v3809, 40
      %v3895 = vpop.permute.xlu0 %3894
      %3896 = vrot.lane.b32.xlu0 %v3810, 40
      %v3897 = vpop.permute.xlu0 %3896
      %3898 = vrot.lane.b32.xlu0 %v3811, 40
      %v3899 = vpop.permute.xlu0 %3898
      %3900 = vrot.lane.b32.xlu0 %v3812, 40
      %v3901 = vpop.permute.xlu0 %3900
      %3902 = vrot.lane.b32.xlu0 %v3813, 40
      %v3903 = vpop.permute.xlu0 %3902
      %3904 = vrot.lane.b32.xlu0 %v3814, 40
      %v3905 = vpop.permute.xlu0 %3904
      %3906 = vrot.lane.b32.xlu0 %v3815, 40
      %v3907 = vpop.permute.xlu0 %3906
      %3908 = vrot.lane.b32.xlu0 %v3816, 40
      %v3909 = vpop.permute.xlu0 %3908
      %3910 = vrot.lane.b32.xlu0 %v3817, 40
      %v3911 = vpop.permute.xlu0 %3910
      %3912 = vrot.lane.b32.xlu0 %v3818, 40
      %v3913 = vpop.permute.xlu0 %3912
      %3914 = vrot.lane.b32.xlu0 %v3819, 40
      %v3915 = vpop.permute.xlu0 %3914
      %3916 = vrot.lane.b32.xlu0 %v3820, 40
      %v3917 = vpop.permute.xlu0 %3916
      %3918 = vrot.lane.b32.xlu0 %v3821, 40
      %v3919 = vpop.permute.xlu0 %3918
      %3920 = vrot.lane.b32.xlu0 %v3822, 40
      %v3921 = vpop.permute.xlu0 %3920
      %3922 = vrot.lane.b32.xlu0 %v3823, 40
      %v3923 = vpop.permute.xlu0 %3922
      %3924 = vrot.lane.b32.xlu0 %v3824, 40
      %v3925 = vpop.permute.xlu0 %3924
      %3926 = vrot.lane.b32.xlu0 %v3825, 40
      %v3927 = vpop.permute.xlu0 %3926
      %3928 = vrot.lane.b32.xlu0 %v3826, 40
      %v3929 = vpop.permute.xlu0 %3928
      %3930 = vrot.lane.b32.xlu0 %v3827, 40
      %v3931 = vpop.permute.xlu0 %3930
      %3932 = vrot.lane.b32.xlu0 %v3828, 40
      %v3933 = vpop.permute.xlu0 %3932
      %3934 = vrot.lane.b32.xlu0 %v3829, 40
      %v3935 = vpop.permute.xlu0 %3934
      %3936 = vrot.lane.b32.xlu0 %v3830, 40
      %v3937 = vpop.permute.xlu0 %3936
      %3938 = vrot.lane.b32.xlu0 %v3831, 40
      %v3939 = vpop.permute.xlu0 %3938
      %3976 = vst.msk [vmem:[#allocation3] sm:$0xff] %vm1478, %v3869
      %3977 = vst.msk [vmem:[#allocation3 + $0x8] sm:$0xff] %vm1478, %v3871
      %3978 = vst.msk [vmem:[#allocation3 + $0x10] sm:$0xff] %vm1478, %v3873
      %3979 = vst.msk [vmem:[#allocation3 + $0x18] sm:$0xff] %vm1478, %v3875
      %3980 = vst.msk [vmem:[#allocation3 + $0x20] sm:$0xff] %vm1478, %v3877
      %3981 = vst.msk [vmem:[#allocation3 + $0x28] sm:$0xff] %vm1478, %v3879
      %3982 = vst.msk [vmem:[#allocation3 + $0x30] sm:$0xff] %vm1478, %v3881
      %3983 = vst.msk [vmem:[#allocation3 + $0x38] sm:$0xff] %vm1478, %v3883
      %3984 = vst.msk [vmem:[#allocation3 + $0x40] sm:$0xff] %vm1478, %v3885
      %3985 = vst.msk [vmem:[#allocation3 + $0x48] sm:$0xff] %vm1478, %v3887
      %3986 = vst.msk [vmem:[#allocation3 + $0x50] sm:$0xff] %vm1478, %v3889
      %3987 = vst.msk [vmem:[#allocation3 + $0x58] sm:$0xff] %vm1478, %v3891
      %3988 = vst.msk [vmem:[#allocation3 + $0x60] sm:$0xff] %vm1478, %v3893
      %3989 = vst.msk [vmem:[#allocation3 + $0x68] sm:$0xff] %vm1478, %v3895
      %3990 = vst.msk [vmem:[#allocation3 + $0x70] sm:$0xff] %vm1478, %v3897
      %3991 = vst.msk [vmem:[#allocation3 + $0x78] sm:$0xff] %vm1478, %v3899
      %3992 = vst.msk [vmem:[#allocation3 + $0x80] sm:$0xff] %vm1478, %v3901
      %3993 = vst.msk [vmem:[#allocation3 + $0x88] sm:$0xff] %vm1478, %v3903
      %3994 = vst.msk [vmem:[#allocation3 + $0x90] sm:$0xff] %vm1478, %v3905
      %3995 = vst.msk [vmem:[#allocation3 + $0x98] sm:$0xff] %vm1478, %v3907
      %3996 = vst.msk [vmem:[#allocation3 + $0xa0] sm:$0xff] %vm1478, %v3909
      %3997 = vst.msk [vmem:[#allocation3 + $0xa8] sm:$0xff] %vm1478, %v3911
      %3998 = vst.msk [vmem:[#allocation3 + $0xb0] sm:$0xff] %vm1478, %v3913
      %3999 = vst.msk [vmem:[#allocation3 + $0xb8] sm:$0xff] %vm1478, %v3915
      %4000 = vst.msk [vmem:[#allocation3 + $0xc0] sm:$0xff] %vm1478, %v3917
      %4001 = vst.msk [vmem:[#allocation3 + $0xc8] sm:$0xff] %vm1478, %v3919
      %4002 = vst.msk [vmem:[#allocation3 + $0xd0] sm:$0xff] %vm1478, %v3921
      %4003 = vst.msk [vmem:[#allocation3 + $0xd8] sm:$0xff] %vm1478, %v3923
      %4004 = vst.msk [vmem:[#allocation3 + $0xe0] sm:$0xff] %vm1478, %v3925
      %4005 = vst.msk [vmem:[#allocation3 + $0xe8] sm:$0xff] %vm1478, %v3927
      %4006 = vst.msk [vmem:[#allocation3 + $0xf0] sm:$0xff] %vm1478, %v3929
      %4007 = vst.msk [vmem:[#allocation3 + $0xf8] sm:$0xff] %vm1478, %v3931
      %4008 = vst.msk [vmem:[#allocation3 + $0x100] sm:$0xff] %vm1478, %v3933
      %4009 = vst.msk [vmem:[#allocation3 + $0x108] sm:$0xff] %vm1478, %v3935
      %4010 = vst.msk [vmem:[#allocation3 + $0x110] sm:$0xff] %vm1478, %v3937
      %4011 = vst.msk [vmem:[#allocation3 + $0x118] sm:$0xff] %vm1478, %v3939
      %v4012 = vld [vmem:[#allocation2 + $0x24] sm:$0xff]
      %v4013 = vld [vmem:[#allocation2 + $0x2c] sm:$0xff]
      %v4014 = vld [vmem:[#allocation2 + $0x34] sm:$0xff]
      %v4015 = vld [vmem:[#allocation2 + $0x3c] sm:$0xff]
      %v4016 = vld [vmem:[#allocation2 + $0x44] sm:$0xff]
      %v4017 = vld [vmem:[#allocation2 + $0x4c] sm:$0xff]
      %v4018 = vld [vmem:[#allocation2 + $0x54] sm:$0xff]
      %v4019 = vld [vmem:[#allocation2 + $0x5c] sm:$0xff]
      %v4020 = vld [vmem:[#allocation2 + $0x64] sm:$0xff]
      %v4021 = vld [vmem:[#allocation2 + $0x6c] sm:$0xff]
      %v4022 = vld [vmem:[#allocation2 + $0x74] sm:$0xff]
      %v4023 = vld [vmem:[#allocation2 + $0x7c] sm:$0xff]
      %v4024 = vld [vmem:[#allocation2 + $0x84] sm:$0xff]
      %v4025 = vld [vmem:[#allocation2 + $0x8c] sm:$0xff]
      %v4026 = vld [vmem:[#allocation2 + $0x94] sm:$0xff]
      %v4027 = vld [vmem:[#allocation2 + $0x9c] sm:$0xff]
      %v4028 = vld [vmem:[#allocation2 + $0xa4] sm:$0xff]
      %v4029 = vld [vmem:[#allocation2 + $0xac] sm:$0xff]
      %v4030 = vld [vmem:[#allocation2 + $0xb4] sm:$0xff]
      %v4031 = vld [vmem:[#allocation2 + $0xbc] sm:$0xff]
      %v4032 = vld [vmem:[#allocation2 + $0xc4] sm:$0xff]
      %v4033 = vld [vmem:[#allocation2 + $0xcc] sm:$0xff]
      %v4034 = vld [vmem:[#allocation2 + $0xd4] sm:$0xff]
      %v4035 = vld [vmem:[#allocation2 + $0xdc] sm:$0xff]
      %v4036 = vld [vmem:[#allocation2 + $0xe4] sm:$0xff]
      %v4037 = vld [vmem:[#allocation2 + $0xec] sm:$0xff]
      %v4038 = vld [vmem:[#allocation2 + $0xf4] sm:$0xff]
      %v4039 = vld [vmem:[#allocation2 + $0xfc] sm:$0xff]
      %v4040 = vld [vmem:[#allocation2 + $0x104] sm:$0xff]
      %v4041 = vld [vmem:[#allocation2 + $0x10c] sm:$0xff]
      %v4042 = vld [vmem:[#allocation2 + $0x114] sm:$0xff]
      %v4043 = vld [vmem:[#allocation2 + $0x11c] sm:$0xff]
      %v4044 = vld [vmem:[#allocation2 + $0x124] sm:$0xff]
      %v4045 = vld [vmem:[#allocation2 + $0x12c] sm:$0xff]
      %v4046 = vld [vmem:[#allocation2 + $0x134] sm:$0xff]
      %v4047 = vld [vmem:[#allocation2 + $0x13c] sm:$0xff]
      %4084 = vrot.lane.b32.xlu0 %v4012, 48
      %v4085 = vpop.permute.xlu0 %4084
      %4086 = vrot.lane.b32.xlu0 %v4013, 48
      %v4087 = vpop.permute.xlu0 %4086
      %4088 = vrot.lane.b32.xlu0 %v4014, 48
      %v4089 = vpop.permute.xlu0 %4088
      %4090 = vrot.lane.b32.xlu0 %v4015, 48
      %v4091 = vpop.permute.xlu0 %4090
      %4092 = vrot.lane.b32.xlu0 %v4016, 48
      %v4093 = vpop.permute.xlu0 %4092
      %4094 = vrot.lane.b32.xlu0 %v4017, 48
      %v4095 = vpop.permute.xlu0 %4094
      %4096 = vrot.lane.b32.xlu0 %v4018, 48
      %v4097 = vpop.permute.xlu0 %4096
      %4098 = vrot.lane.b32.xlu0 %v4019, 48
      %v4099 = vpop.permute.xlu0 %4098
      %4100 = vrot.lane.b32.xlu0 %v4020, 48
      %v4101 = vpop.permute.xlu0 %4100
      %4102 = vrot.lane.b32.xlu0 %v4021, 48
      %v4103 = vpop.permute.xlu0 %4102
      %4104 = vrot.lane.b32.xlu0 %v4022, 48
      %v4105 = vpop.permute.xlu0 %4104
      %4106 = vrot.lane.b32.xlu0 %v4023, 48
      %v4107 = vpop.permute.xlu0 %4106
      %4108 = vrot.lane.b32.xlu0 %v4024, 48
      %v4109 = vpop.permute.xlu0 %4108
      %4110 = vrot.lane.b32.xlu0 %v4025, 48
      %v4111 = vpop.permute.xlu0 %4110
      %4112 = vrot.lane.b32.xlu0 %v4026, 48
      %v4113 = vpop.permute.xlu0 %4112
      %4114 = vrot.lane.b32.xlu0 %v4027, 48
      %v4115 = vpop.permute.xlu0 %4114
      %4116 = vrot.lane.b32.xlu0 %v4028, 48
      %v4117 = vpop.permute.xlu0 %4116
      %4118 = vrot.lane.b32.xlu0 %v4029, 48
      %v4119 = vpop.permute.xlu0 %4118
      %4120 = vrot.lane.b32.xlu0 %v4030, 48
      %v4121 = vpop.permute.xlu0 %4120
      %4122 = vrot.lane.b32.xlu0 %v4031, 48
      %v4123 = vpop.permute.xlu0 %4122
      %4124 = vrot.lane.b32.xlu0 %v4032, 48
      %v4125 = vpop.permute.xlu0 %4124
      %4126 = vrot.lane.b32.xlu0 %v4033, 48
      %v4127 = vpop.permute.xlu0 %4126
      %4128 = vrot.lane.b32.xlu0 %v4034, 48
      %v4129 = vpop.permute.xlu0 %4128
      %4130 = vrot.lane.b32.xlu0 %v4035, 48
      %v4131 = vpop.permute.xlu0 %4130
      %4132 = vrot.lane.b32.xlu0 %v4036, 48
      %v4133 = vpop.permute.xlu0 %4132
      %4134 = vrot.lane.b32.xlu0 %v4037, 48
      %v4135 = vpop.permute.xlu0 %4134
      %4136 = vrot.lane.b32.xlu0 %v4038, 48
      %v4137 = vpop.permute.xlu0 %4136
      %4138 = vrot.lane.b32.xlu0 %v4039, 48
      %v4139 = vpop.permute.xlu0 %4138
      %4140 = vrot.lane.b32.xlu0 %v4040, 48
      %v4141 = vpop.permute.xlu0 %4140
      %4142 = vrot.lane.b32.xlu0 %v4041, 48
      %v4143 = vpop.permute.xlu0 %4142
      %4144 = vrot.lane.b32.xlu0 %v4042, 48
      %v4145 = vpop.permute.xlu0 %4144
      %4146 = vrot.lane.b32.xlu0 %v4043, 48
      %v4147 = vpop.permute.xlu0 %4146
      %4148 = vrot.lane.b32.xlu0 %v4044, 48
      %v4149 = vpop.permute.xlu0 %4148
      %4150 = vrot.lane.b32.xlu0 %v4045, 48
      %v4151 = vpop.permute.xlu0 %4150
      %4152 = vrot.lane.b32.xlu0 %v4046, 48
      %v4153 = vpop.permute.xlu0 %4152
      %4154 = vrot.lane.b32.xlu0 %v4047, 48
      %v4155 = vpop.permute.xlu0 %4154
      %4192 = vst.msk [vmem:[#allocation3] sm:$0xff] %vm1695, %v4085
      %4193 = vst.msk [vmem:[#allocation3 + $0x8] sm:$0xff] %vm1695, %v4087
      %4194 = vst.msk [vmem:[#allocation3 + $0x10] sm:$0xff] %vm1695, %v4089
      %4195 = vst.msk [vmem:[#allocation3 + $0x18] sm:$0xff] %vm1695, %v4091
      %4196 = vst.msk [vmem:[#allocation3 + $0x20] sm:$0xff] %vm1695, %v4093
      %4197 = vst.msk [vmem:[#allocation3 + $0x28] sm:$0xff] %vm1695, %v4095
      %4198 = vst.msk [vmem:[#allocation3 + $0x30] sm:$0xff] %vm1695, %v4097
      %4199 = vst.msk [vmem:[#allocation3 + $0x38] sm:$0xff] %vm1695, %v4099
      %4200 = vst.msk [vmem:[#allocation3 + $0x40] sm:$0xff] %vm1695, %v4101
      %4201 = vst.msk [vmem:[#allocation3 + $0x48] sm:$0xff] %vm1695, %v4103
      %4202 = vst.msk [vmem:[#allocation3 + $0x50] sm:$0xff] %vm1695, %v4105
      %4203 = vst.msk [vmem:[#allocation3 + $0x58] sm:$0xff] %vm1695, %v4107
      %4204 = vst.msk [vmem:[#allocation3 + $0x60] sm:$0xff] %vm1695, %v4109
      %4205 = vst.msk [vmem:[#allocation3 + $0x68] sm:$0xff] %vm1695, %v4111
      %4206 = vst.msk [vmem:[#allocation3 + $0x70] sm:$0xff] %vm1695, %v4113
      %4207 = vst.msk [vmem:[#allocation3 + $0x78] sm:$0xff] %vm1695, %v4115
      %4208 = vst.msk [vmem:[#allocation3 + $0x80] sm:$0xff] %vm1695, %v4117
      %4209 = vst.msk [vmem:[#allocation3 + $0x88] sm:$0xff] %vm1695, %v4119
      %4210 = vst.msk [vmem:[#allocation3 + $0x90] sm:$0xff] %vm1695, %v4121
      %4211 = vst.msk [vmem:[#allocation3 + $0x98] sm:$0xff] %vm1695, %v4123
      %4212 = vst.msk [vmem:[#allocation3 + $0xa0] sm:$0xff] %vm1695, %v4125
      %4213 = vst.msk [vmem:[#allocation3 + $0xa8] sm:$0xff] %vm1695, %v4127
      %4214 = vst.msk [vmem:[#allocation3 + $0xb0] sm:$0xff] %vm1695, %v4129
      %4215 = vst.msk [vmem:[#allocation3 + $0xb8] sm:$0xff] %vm1695, %v4131
      %4216 = vst.msk [vmem:[#allocation3 + $0xc0] sm:$0xff] %vm1695, %v4133
      %4217 = vst.msk [vmem:[#allocation3 + $0xc8] sm:$0xff] %vm1695, %v4135
      %4218 = vst.msk [vmem:[#allocation3 + $0xd0] sm:$0xff] %vm1695, %v4137
      %4219 = vst.msk [vmem:[#allocation3 + $0xd8] sm:$0xff] %vm1695, %v4139
      %4220 = vst.msk [vmem:[#allocation3 + $0xe0] sm:$0xff] %vm1695, %v4141
      %4221 = vst.msk [vmem:[#allocation3 + $0xe8] sm:$0xff] %vm1695, %v4143
      %4222 = vst.msk [vmem:[#allocation3 + $0xf0] sm:$0xff] %vm1695, %v4145
      %4223 = vst.msk [vmem:[#allocation3 + $0xf8] sm:$0xff] %vm1695, %v4147
      %4224 = vst.msk [vmem:[#allocation3 + $0x100] sm:$0xff] %vm1695, %v4149
      %4225 = vst.msk [vmem:[#allocation3 + $0x108] sm:$0xff] %vm1695, %v4151
      %4226 = vst.msk [vmem:[#allocation3 + $0x110] sm:$0xff] %vm1695, %v4153
      %4227 = vst.msk [vmem:[#allocation3 + $0x118] sm:$0xff] %vm1695, %v4155
      %v4228 = vld [vmem:[#allocation2 + $0x25] sm:$0xff]
      %v4229 = vld [vmem:[#allocation2 + $0x2d] sm:$0xff]
      %v4230 = vld [vmem:[#allocation2 + $0x35] sm:$0xff]
      %v4231 = vld [vmem:[#allocation2 + $0x3d] sm:$0xff]
      %v4232 = vld [vmem:[#allocation2 + $0x45] sm:$0xff]
      %v4233 = vld [vmem:[#allocation2 + $0x4d] sm:$0xff]
      %v4234 = vld [vmem:[#allocation2 + $0x55] sm:$0xff]
      %v4235 = vld [vmem:[#allocation2 + $0x5d] sm:$0xff]
      %v4236 = vld [vmem:[#allocation2 + $0x65] sm:$0xff]
      %v4237 = vld [vmem:[#allocation2 + $0x6d] sm:$0xff]
      %v4238 = vld [vmem:[#allocation2 + $0x75] sm:$0xff]
      %v4239 = vld [vmem:[#allocation2 + $0x7d] sm:$0xff]
      %v4240 = vld [vmem:[#allocation2 + $0x85] sm:$0xff]
      %v4241 = vld [vmem:[#allocation2 + $0x8d] sm:$0xff]
      %v4242 = vld [vmem:[#allocation2 + $0x95] sm:$0xff]
      %v4243 = vld [vmem:[#allocation2 + $0x9d] sm:$0xff]
      %v4244 = vld [vmem:[#allocation2 + $0xa5] sm:$0xff]
      %v4245 = vld [vmem:[#allocation2 + $0xad] sm:$0xff]
      %v4246 = vld [vmem:[#allocation2 + $0xb5] sm:$0xff]
      %v4247 = vld [vmem:[#allocation2 + $0xbd] sm:$0xff]
      %v4248 = vld [vmem:[#allocation2 + $0xc5] sm:$0xff]
      %v4249 = vld [vmem:[#allocation2 + $0xcd] sm:$0xff]
      %v4250 = vld [vmem:[#allocation2 + $0xd5] sm:$0xff]
      %v4251 = vld [vmem:[#allocation2 + $0xdd] sm:$0xff]
      %v4252 = vld [vmem:[#allocation2 + $0xe5] sm:$0xff]
      %v4253 = vld [vmem:[#allocation2 + $0xed] sm:$0xff]
      %v4254 = vld [vmem:[#allocation2 + $0xf5] sm:$0xff]
      %v4255 = vld [vmem:[#allocation2 + $0xfd] sm:$0xff]
      %v4256 = vld [vmem:[#allocation2 + $0x105] sm:$0xff]
      %v4257 = vld [vmem:[#allocation2 + $0x10d] sm:$0xff]
      %v4258 = vld [vmem:[#allocation2 + $0x115] sm:$0xff]
      %v4259 = vld [vmem:[#allocation2 + $0x11d] sm:$0xff]
      %v4260 = vld [vmem:[#allocation2 + $0x125] sm:$0xff]
      %v4261 = vld [vmem:[#allocation2 + $0x12d] sm:$0xff]
      %v4262 = vld [vmem:[#allocation2 + $0x135] sm:$0xff]
      %v4263 = vld [vmem:[#allocation2 + $0x13d] sm:$0xff]
      %4300 = vrot.lane.b32.xlu0 %v4228, 56
      %v4301 = vpop.permute.xlu0 %4300
      %4302 = vrot.lane.b32.xlu0 %v4229, 56
      %v4303 = vpop.permute.xlu0 %4302
      %4304 = vrot.lane.b32.xlu0 %v4230, 56
      %v4305 = vpop.permute.xlu0 %4304
      %4306 = vrot.lane.b32.xlu0 %v4231, 56
      %v4307 = vpop.permute.xlu0 %4306
      %4308 = vrot.lane.b32.xlu0 %v4232, 56
      %v4309 = vpop.permute.xlu0 %4308
      %4310 = vrot.lane.b32.xlu0 %v4233, 56
      %v4311 = vpop.permute.xlu0 %4310
      %4312 = vrot.lane.b32.xlu0 %v4234, 56
      %v4313 = vpop.permute.xlu0 %4312
      %4314 = vrot.lane.b32.xlu0 %v4235, 56
      %v4315 = vpop.permute.xlu0 %4314
      %4316 = vrot.lane.b32.xlu0 %v4236, 56
      %v4317 = vpop.permute.xlu0 %4316
      %4318 = vrot.lane.b32.xlu0 %v4237, 56
      %v4319 = vpop.permute.xlu0 %4318
      %4320 = vrot.lane.b32.xlu0 %v4238, 56
      %v4321 = vpop.permute.xlu0 %4320
      %4322 = vrot.lane.b32.xlu0 %v4239, 56
      %v4323 = vpop.permute.xlu0 %4322
      %4324 = vrot.lane.b32.xlu0 %v4240, 56
      %v4325 = vpop.permute.xlu0 %4324
      %4326 = vrot.lane.b32.xlu0 %v4241, 56
      %v4327 = vpop.permute.xlu0 %4326
      %4328 = vrot.lane.b32.xlu0 %v4242, 56
      %v4329 = vpop.permute.xlu0 %4328
      %4330 = vrot.lane.b32.xlu0 %v4243, 56
      %v4331 = vpop.permute.xlu0 %4330
      %4332 = vrot.lane.b32.xlu0 %v4244, 56
      %v4333 = vpop.permute.xlu0 %4332
      %4334 = vrot.lane.b32.xlu0 %v4245, 56
      %v4335 = vpop.permute.xlu0 %4334
      %4336 = vrot.lane.b32.xlu0 %v4246, 56
      %v4337 = vpop.permute.xlu0 %4336
      %4338 = vrot.lane.b32.xlu0 %v4247, 56
      %v4339 = vpop.permute.xlu0 %4338
      %4340 = vrot.lane.b32.xlu0 %v4248, 56
      %v4341 = vpop.permute.xlu0 %4340
      %4342 = vrot.lane.b32.xlu0 %v4249, 56
      %v4343 = vpop.permute.xlu0 %4342
      %4344 = vrot.lane.b32.xlu0 %v4250, 56
      %v4345 = vpop.permute.xlu0 %4344
      %4346 = vrot.lane.b32.xlu0 %v4251, 56
      %v4347 = vpop.permute.xlu0 %4346
      %4348 = vrot.lane.b32.xlu0 %v4252, 56
      %v4349 = vpop.permute.xlu0 %4348
      %4350 = vrot.lane.b32.xlu0 %v4253, 56
      %v4351 = vpop.permute.xlu0 %4350
      %4352 = vrot.lane.b32.xlu0 %v4254, 56
      %v4353 = vpop.permute.xlu0 %4352
      %4354 = vrot.lane.b32.xlu0 %v4255, 56
      %v4355 = vpop.permute.xlu0 %4354
      %4356 = vrot.lane.b32.xlu0 %v4256, 56
      %v4357 = vpop.permute.xlu0 %4356
      %4358 = vrot.lane.b32.xlu0 %v4257, 56
      %v4359 = vpop.permute.xlu0 %4358
      %4360 = vrot.lane.b32.xlu0 %v4258, 56
      %v4361 = vpop.permute.xlu0 %4360
      %4362 = vrot.lane.b32.xlu0 %v4259, 56
      %v4363 = vpop.permute.xlu0 %4362
      %4364 = vrot.lane.b32.xlu0 %v4260, 56
      %v4365 = vpop.permute.xlu0 %4364
      %4366 = vrot.lane.b32.xlu0 %v4261, 56
      %v4367 = vpop.permute.xlu0 %4366
      %4368 = vrot.lane.b32.xlu0 %v4262, 56
      %v4369 = vpop.permute.xlu0 %4368
      %4370 = vrot.lane.b32.xlu0 %v4263, 56
      %v4371 = vpop.permute.xlu0 %4370
      %4408 = vst.msk [vmem:[#allocation3] sm:$0xff] %vm1912, %v4301
      %4409 = vst.msk [vmem:[#allocation3 + $0x8] sm:$0xff] %vm1912, %v4303
      %4410 = vst.msk [vmem:[#allocation3 + $0x10] sm:$0xff] %vm1912, %v4305
      %4411 = vst.msk [vmem:[#allocation3 + $0x18] sm:$0xff] %vm1912, %v4307
      %4412 = vst.msk [vmem:[#allocation3 + $0x20] sm:$0xff] %vm1912, %v4309
      %4413 = vst.msk [vmem:[#allocation3 + $0x28] sm:$0xff] %vm1912, %v4311
      %4414 = vst.msk [vmem:[#allocation3 + $0x30] sm:$0xff] %vm1912, %v4313
      %4415 = vst.msk [vmem:[#allocation3 + $0x38] sm:$0xff] %vm1912, %v4315
      %4416 = vst.msk [vmem:[#allocation3 + $0x40] sm:$0xff] %vm1912, %v4317
      %4417 = vst.msk [vmem:[#allocation3 + $0x48] sm:$0xff] %vm1912, %v4319
      %4418 = vst.msk [vmem:[#allocation3 + $0x50] sm:$0xff] %vm1912, %v4321
      %4419 = vst.msk [vmem:[#allocation3 + $0x58] sm:$0xff] %vm1912, %v4323
      %4420 = vst.msk [vmem:[#allocation3 + $0x60] sm:$0xff] %vm1912, %v4325
      %4421 = vst.msk [vmem:[#allocation3 + $0x68] sm:$0xff] %vm1912, %v4327
      %4422 = vst.msk [vmem:[#allocation3 + $0x70] sm:$0xff] %vm1912, %v4329
      %4423 = vst.msk [vmem:[#allocation3 + $0x78] sm:$0xff] %vm1912, %v4331
      %4424 = vst.msk [vmem:[#allocation3 + $0x80] sm:$0xff] %vm1912, %v4333
      %4425 = vst.msk [vmem:[#allocation3 + $0x88] sm:$0xff] %vm1912, %v4335
      %4426 = vst.msk [vmem:[#allocation3 + $0x90] sm:$0xff] %vm1912, %v4337
      %4427 = vst.msk [vmem:[#allocation3 + $0x98] sm:$0xff] %vm1912, %v4339
      %4428 = vst.msk [vmem:[#allocation3 + $0xa0] sm:$0xff] %vm1912, %v4341
      %4429 = vst.msk [vmem:[#allocation3 + $0xa8] sm:$0xff] %vm1912, %v4343
      %4430 = vst.msk [vmem:[#allocation3 + $0xb0] sm:$0xff] %vm1912, %v4345
      %4431 = vst.msk [vmem:[#allocation3 + $0xb8] sm:$0xff] %vm1912, %v4347
      %4432 = vst.msk [vmem:[#allocation3 + $0xc0] sm:$0xff] %vm1912, %v4349
      %4433 = vst.msk [vmem:[#allocation3 + $0xc8] sm:$0xff] %vm1912, %v4351
      %4434 = vst.msk [vmem:[#allocation3 + $0xd0] sm:$0xff] %vm1912, %v4353
      %4435 = vst.msk [vmem:[#allocation3 + $0xd8] sm:$0xff] %vm1912, %v4355
      %4436 = vst.msk [vmem:[#allocation3 + $0xe0] sm:$0xff] %vm1912, %v4357
      %4437 = vst.msk [vmem:[#allocation3 + $0xe8] sm:$0xff] %vm1912, %v4359
      %4438 = vst.msk [vmem:[#allocation3 + $0xf0] sm:$0xff] %vm1912, %v4361
      %4439 = vst.msk [vmem:[#allocation3 + $0xf8] sm:$0xff] %vm1912, %v4363
      %4440 = vst.msk [vmem:[#allocation3 + $0x100] sm:$0xff] %vm1912, %v4365
      %4441 = vst.msk [vmem:[#allocation3 + $0x108] sm:$0xff] %vm1912, %v4367
      %4442 = vst.msk [vmem:[#allocation3 + $0x110] sm:$0xff] %vm1912, %v4369
      %4443 = vst.msk [vmem:[#allocation3 + $0x118] sm:$0xff] %vm1912, %v4371
      %v4444 = vld [vmem:[#allocation2 + $0x26] sm:$0xff]
      %v4445 = vld [vmem:[#allocation2 + $0x2e] sm:$0xff]
      %v4446 = vld [vmem:[#allocation2 + $0x36] sm:$0xff]
      %v4447 = vld [vmem:[#allocation2 + $0x3e] sm:$0xff]
      %v4448 = vld [vmem:[#allocation2 + $0x46] sm:$0xff]
      %v4449 = vld [vmem:[#allocation2 + $0x4e] sm:$0xff]
      %v4450 = vld [vmem:[#allocation2 + $0x56] sm:$0xff]
      %v4451 = vld [vmem:[#allocation2 + $0x5e] sm:$0xff]
      %v4452 = vld [vmem:[#allocation2 + $0x66] sm:$0xff]
      %v4453 = vld [vmem:[#allocation2 + $0x6e] sm:$0xff]
      %v4454 = vld [vmem:[#allocation2 + $0x76] sm:$0xff]
      %v4455 = vld [vmem:[#allocation2 + $0x7e] sm:$0xff]
      %v4456 = vld [vmem:[#allocation2 + $0x86] sm:$0xff]
      %v4457 = vld [vmem:[#allocation2 + $0x8e] sm:$0xff]
      %v4458 = vld [vmem:[#allocation2 + $0x96] sm:$0xff]
      %v4459 = vld [vmem:[#allocation2 + $0x9e] sm:$0xff]
      %v4460 = vld [vmem:[#allocation2 + $0xa6] sm:$0xff]
      %v4461 = vld [vmem:[#allocation2 + $0xae] sm:$0xff]
      %v4462 = vld [vmem:[#allocation2 + $0xb6] sm:$0xff]
      %v4463 = vld [vmem:[#allocation2 + $0xbe] sm:$0xff]
      %v4464 = vld [vmem:[#allocation2 + $0xc6] sm:$0xff]
      %v4465 = vld [vmem:[#allocation2 + $0xce] sm:$0xff]
      %v4466 = vld [vmem:[#allocation2 + $0xd6] sm:$0xff]
      %v4467 = vld [vmem:[#allocation2 + $0xde] sm:$0xff]
      %v4468 = vld [vmem:[#allocation2 + $0xe6] sm:$0xff]
      %v4469 = vld [vmem:[#allocation2 + $0xee] sm:$0xff]
      %v4470 = vld [vmem:[#allocation2 + $0xf6] sm:$0xff]
      %v4471 = vld [vmem:[#allocation2 + $0xfe] sm:$0xff]
      %v4472 = vld [vmem:[#allocation2 + $0x106] sm:$0xff]
      %v4473 = vld [vmem:[#allocation2 + $0x10e] sm:$0xff]
      %v4474 = vld [vmem:[#allocation2 + $0x116] sm:$0xff]
      %v4475 = vld [vmem:[#allocation2 + $0x11e] sm:$0xff]
      %v4476 = vld [vmem:[#allocation2 + $0x126] sm:$0xff]
      %v4477 = vld [vmem:[#allocation2 + $0x12e] sm:$0xff]
      %v4478 = vld [vmem:[#allocation2 + $0x136] sm:$0xff]
      %v4479 = vld [vmem:[#allocation2 + $0x13e] sm:$0xff]
      %4516 = vrot.lane.b32.xlu0 %v4444, 64
      %v4517 = vpop.permute.xlu0 %4516
      %4518 = vrot.lane.b32.xlu0 %v4445, 64
      %v4519 = vpop.permute.xlu0 %4518
      %4520 = vrot.lane.b32.xlu0 %v4446, 64
      %v4521 = vpop.permute.xlu0 %4520
      %4522 = vrot.lane.b32.xlu0 %v4447, 64
      %v4523 = vpop.permute.xlu0 %4522
      %4524 = vrot.lane.b32.xlu0 %v4448, 64
      %v4525 = vpop.permute.xlu0 %4524
      %4526 = vrot.lane.b32.xlu0 %v4449, 64
      %v4527 = vpop.permute.xlu0 %4526
      %4528 = vrot.lane.b32.xlu0 %v4450, 64
      %v4529 = vpop.permute.xlu0 %4528
      %4530 = vrot.lane.b32.xlu0 %v4451, 64
      %v4531 = vpop.permute.xlu0 %4530
      %4532 = vrot.lane.b32.xlu0 %v4452, 64
      %v4533 = vpop.permute.xlu0 %4532
      %4534 = vrot.lane.b32.xlu0 %v4453, 64
      %v4535 = vpop.permute.xlu0 %4534
      %4536 = vrot.lane.b32.xlu0 %v4454, 64
      %v4537 = vpop.permute.xlu0 %4536
      %4538 = vrot.lane.b32.xlu0 %v4455, 64
      %v4539 = vpop.permute.xlu0 %4538
      %4540 = vrot.lane.b32.xlu0 %v4456, 64
      %v4541 = vpop.permute.xlu0 %4540
      %4542 = vrot.lane.b32.xlu0 %v4457, 64
      %v4543 = vpop.permute.xlu0 %4542
      %4544 = vrot.lane.b32.xlu0 %v4458, 64
      %v4545 = vpop.permute.xlu0 %4544
      %4546 = vrot.lane.b32.xlu0 %v4459, 64
      %v4547 = vpop.permute.xlu0 %4546
      %4548 = vrot.lane.b32.xlu0 %v4460, 64
      %v4549 = vpop.permute.xlu0 %4548
      %4550 = vrot.lane.b32.xlu0 %v4461, 64
      %v4551 = vpop.permute.xlu0 %4550
      %4552 = vrot.lane.b32.xlu0 %v4462, 64
      %v4553 = vpop.permute.xlu0 %4552
      %4554 = vrot.lane.b32.xlu0 %v4463, 64
      %v4555 = vpop.permute.xlu0 %4554
      %4556 = vrot.lane.b32.xlu0 %v4464, 64
      %v4557 = vpop.permute.xlu0 %4556
      %4558 = vrot.lane.b32.xlu0 %v4465, 64
      %v4559 = vpop.permute.xlu0 %4558
      %4560 = vrot.lane.b32.xlu0 %v4466, 64
      %v4561 = vpop.permute.xlu0 %4560
      %4562 = vrot.lane.b32.xlu0 %v4467, 64
      %v4563 = vpop.permute.xlu0 %4562
      %4564 = vrot.lane.b32.xlu0 %v4468, 64
      %v4565 = vpop.permute.xlu0 %4564
      %4566 = vrot.lane.b32.xlu0 %v4469, 64
      %v4567 = vpop.permute.xlu0 %4566
      %4568 = vrot.lane.b32.xlu0 %v4470, 64
      %v4569 = vpop.permute.xlu0 %4568
      %4570 = vrot.lane.b32.xlu0 %v4471, 64
      %v4571 = vpop.permute.xlu0 %4570
      %4572 = vrot.lane.b32.xlu0 %v4472, 64
      %v4573 = vpop.permute.xlu0 %4572
      %4574 = vrot.lane.b32.xlu0 %v4473, 64
      %v4575 = vpop.permute.xlu0 %4574
      %4576 = vrot.lane.b32.xlu0 %v4474, 64
      %v4577 = vpop.permute.xlu0 %4576
      %4578 = vrot.lane.b32.xlu0 %v4475, 64
      %v4579 = vpop.permute.xlu0 %4578
      %4580 = vrot.lane.b32.xlu0 %v4476, 64
      %v4581 = vpop.permute.xlu0 %4580
      %4582 = vrot.lane.b32.xlu0 %v4477, 64
      %v4583 = vpop.permute.xlu0 %4582
      %4584 = vrot.lane.b32.xlu0 %v4478, 64
      %v4585 = vpop.permute.xlu0 %4584
      %4586 = vrot.lane.b32.xlu0 %v4479, 64
      %v4587 = vpop.permute.xlu0 %4586
      %4624 = vst.msk [vmem:[#allocation3] sm:$0xff] %vm2129, %v4517
      %4625 = vst.msk [vmem:[#allocation3 + $0x8] sm:$0xff] %vm2129, %v4519
      %4626 = vst.msk [vmem:[#allocation3 + $0x10] sm:$0xff] %vm2129, %v4521
      %4627 = vst.msk [vmem:[#allocation3 + $0x18] sm:$0xff] %vm2129, %v4523
      %4628 = vst.msk [vmem:[#allocation3 + $0x20] sm:$0xff] %vm2129, %v4525
      %4629 = vst.msk [vmem:[#allocation3 + $0x28] sm:$0xff] %vm2129, %v4527
      %4630 = vst.msk [vmem:[#allocation3 + $0x30] sm:$0xff] %vm2129, %v4529
      %4631 = vst.msk [vmem:[#allocation3 + $0x38] sm:$0xff] %vm2129, %v4531
      %4632 = vst.msk [vmem:[#allocation3 + $0x40] sm:$0xff] %vm2129, %v4533
      %4633 = vst.msk [vmem:[#allocation3 + $0x48] sm:$0xff] %vm2129, %v4535
      %4634 = vst.msk [vmem:[#allocation3 + $0x50] sm:$0xff] %vm2129, %v4537
      %4635 = vst.msk [vmem:[#allocation3 + $0x58] sm:$0xff] %vm2129, %v4539
      %4636 = vst.msk [vmem:[#allocation3 + $0x60] sm:$0xff] %vm2129, %v4541
      %4637 = vst.msk [vmem:[#allocation3 + $0x68] sm:$0xff] %vm2129, %v4543
      %4638 = vst.msk [vmem:[#allocation3 + $0x70] sm:$0xff] %vm2129, %v4545
      %4639 = vst.msk [vmem:[#allocation3 + $0x78] sm:$0xff] %vm2129, %v4547
      %4640 = vst.msk [vmem:[#allocation3 + $0x80] sm:$0xff] %vm2129, %v4549
      %4641 = vst.msk [vmem:[#allocation3 + $0x88] sm:$0xff] %vm2129, %v4551
      %4642 = vst.msk [vmem:[#allocation3 + $0x90] sm:$0xff] %vm2129, %v4553
      %4643 = vst.msk [vmem:[#allocation3 + $0x98] sm:$0xff] %vm2129, %v4555
      %4644 = vst.msk [vmem:[#allocation3 + $0xa0] sm:$0xff] %vm2129, %v4557
      %4645 = vst.msk [vmem:[#allocation3 + $0xa8] sm:$0xff] %vm2129, %v4559
      %4646 = vst.msk [vmem:[#allocation3 + $0xb0] sm:$0xff] %vm2129, %v4561
      %4647 = vst.msk [vmem:[#allocation3 + $0xb8] sm:$0xff] %vm2129, %v4563
      %4648 = vst.msk [vmem:[#allocation3 + $0xc0] sm:$0xff] %vm2129, %v4565
      %4649 = vst.msk [vmem:[#allocation3 + $0xc8] sm:$0xff] %vm2129, %v4567
      %4650 = vst.msk [vmem:[#allocation3 + $0xd0] sm:$0xff] %vm2129, %v4569
      %4651 = vst.msk [vmem:[#allocation3 + $0xd8] sm:$0xff] %vm2129, %v4571
      %4652 = vst.msk [vmem:[#allocation3 + $0xe0] sm:$0xff] %vm2129, %v4573
      %4653 = vst.msk [vmem:[#allocation3 + $0xe8] sm:$0xff] %vm2129, %v4575
      %4654 = vst.msk [vmem:[#allocation3 + $0xf0] sm:$0xff] %vm2129, %v4577
      %4655 = vst.msk [vmem:[#allocation3 + $0xf8] sm:$0xff] %vm2129, %v4579
      %4656 = vst.msk [vmem:[#allocation3 + $0x100] sm:$0xff] %vm2129, %v4581
      %4657 = vst.msk [vmem:[#allocation3 + $0x108] sm:$0xff] %vm2129, %v4583
      %4658 = vst.msk [vmem:[#allocation3 + $0x110] sm:$0xff] %vm2129, %v4585
      %4659 = vst.msk [vmem:[#allocation3 + $0x118] sm:$0xff] %vm2129, %v4587
      %v4660 = vld [vmem:[#allocation3] sm:$0xff]
      %v4661 = vld [vmem:[#allocation3 + $0x8] sm:$0xff]
      %v4662 = vld [vmem:[#allocation3 + $0x10] sm:$0xff]
      %v4663 = vld [vmem:[#allocation3 + $0x18] sm:$0xff]
      %v4664 = vld [vmem:[#allocation3 + $0x20] sm:$0xff]
      %v4665 = vld [vmem:[#allocation3 + $0x28] sm:$0xff]
      %v4666 = vld [vmem:[#allocation3 + $0x30] sm:$0xff]
      %v4667 = vld [vmem:[#allocation3 + $0x38] sm:$0xff]
      %v4668 = vld [vmem:[#allocation3 + $0x40] sm:$0xff]
      %v4669 = vld [vmem:[#allocation3 + $0x48] sm:$0xff]
      %v4670 = vld [vmem:[#allocation3 + $0x50] sm:$0xff]
      %v4671 = vld [vmem:[#allocation3 + $0x58] sm:$0xff]
      %v4672 = vld [vmem:[#allocation3 + $0x60] sm:$0xff]
      %v4673 = vld [vmem:[#allocation3 + $0x68] sm:$0xff]
      %v4674 = vld [vmem:[#allocation3 + $0x70] sm:$0xff]
      %v4675 = vld [vmem:[#allocation3 + $0x78] sm:$0xff]
      %v4676 = vld [vmem:[#allocation3 + $0x80] sm:$0xff]
      %v4677 = vld [vmem:[#allocation3 + $0x88] sm:$0xff]
      %v4678 = vld [vmem:[#allocation3 + $0x90] sm:$0xff]
      %v4679 = vld [vmem:[#allocation3 + $0x98] sm:$0xff]
      %v4680 = vld [vmem:[#allocation3 + $0xa0] sm:$0xff]
      %v4681 = vld [vmem:[#allocation3 + $0xa8] sm:$0xff]
      %v4682 = vld [vmem:[#allocation3 + $0xb0] sm:$0xff]
      %v4683 = vld [vmem:[#allocation3 + $0xb8] sm:$0xff]
      %v4684 = vld [vmem:[#allocation3 + $0xc0] sm:$0xff]
      %v4685 = vld [vmem:[#allocation3 + $0xc8] sm:$0xff]
      %v4686 = vld [vmem:[#allocation3 + $0xd0] sm:$0xff]
      %v4687 = vld [vmem:[#allocation3 + $0xd8] sm:$0xff]
      %v4688 = vld [vmem:[#allocation3 + $0xe0] sm:$0xff]
      %v4689 = vld [vmem:[#allocation3 + $0xe8] sm:$0xff]
      %v4690 = vld [vmem:[#allocation3 + $0xf0] sm:$0xff]
      %v4691 = vld [vmem:[#allocation3 + $0xf8] sm:$0xff]
      %v4692 = vld [vmem:[#allocation3 + $0x100] sm:$0xff]
      %v4693 = vld [vmem:[#allocation3 + $0x108] sm:$0xff]
      %v4694 = vld [vmem:[#allocation3 + $0x110] sm:$0xff]
      %v4695 = vld [vmem:[#allocation3 + $0x118] sm:$0xff]
      %s4696 = scalar_lea.vmem %s2, 72
      %v4697 = vld [vmem:[%s4696] sm:$0xff]
      %v4698 = vld [vmem:[%s4696 + $0x8] sm:$0xff]
      %v4699 = vld [vmem:[%s4696 + $0x10] sm:$0xff]
      %v4700 = vld [vmem:[%s4696 + $0x18] sm:$0xff]
      %v4701 = vld [vmem:[%s4696 + $0x20] sm:$0xff]
      %v4702 = vld [vmem:[%s4696 + $0x28] sm:$0xff]
      %v4703 = vld [vmem:[%s4696 + $0x30] sm:$0xff]
      %v4704 = vld [vmem:[%s4696 + $0x38] sm:$0xff]
      %v4705 = vld [vmem:[%s4696 + $0x40] sm:$0xff]
      %s4706 = scalar_lea.vmem %s3, 1
      %v4707 = vld [vmem:[%s4706] sm:$0x1]
      %v4709 = vlaneseq
      %v4710 = vshrl.u32 %v4709, 7
      %v4711 = vsub.s32 0, %v4710
      %v4712 = vrot.slane %v4707, %v4711
      %v4715 = vsel %vm2218, %v4660, 0
      %v4718 = vsel %vm2218, %v4661, 0
      %v4721 = vsel %vm2218, %v4662, 0
      %v4724 = vsel %vm2218, %v4663, 0
      %v4727 = vsel %vm2218, %v4664, 0
      %v4730 = vsel %vm2218, %v4665, 0
      %v4733 = vsel %vm2218, %v4666, 0
      %v4736 = vsel %vm2218, %v4667, 0
      %v4739 = vsel %vm2218, %v4668, 0
      %v4742 = vsel %vm2218, %v4669, 0
      %v4745 = vsel %vm2218, %v4670, 0
      %v4748 = vsel %vm2218, %v4671, 0
      %v4751 = vsel %vm2218, %v4672, 0
      %v4754 = vsel %vm2218, %v4673, 0
      %v4757 = vsel %vm2218, %v4674, 0
      %v4760 = vsel %vm2218, %v4675, 0
      %v4763 = vsel %vm2218, %v4676, 0
      %v4766 = vsel %vm2218, %v4677, 0
      %v4769 = vsel %vm2218, %v4678, 0
      %v4772 = vsel %vm2218, %v4679, 0
      %v4775 = vsel %vm2218, %v4680, 0
      %v4778 = vsel %vm2218, %v4681, 0
      %v4781 = vsel %vm2218, %v4682, 0
      %v4784 = vsel %vm2218, %v4683, 0
      %v4787 = vsel %vm2218, %v4684, 0
      %v4790 = vsel %vm2218, %v4685, 0
      %v4793 = vsel %vm2218, %v4686, 0
      %v4796 = vsel %vm2218, %v4687, 0
      %v4799 = vsel %vm2218, %v4688, 0
      %v4802 = vsel %vm2218, %v4689, 0
      %v4805 = vsel %vm2218, %v4690, 0
      %v4808 = vsel %vm2218, %v4691, 0
      %v4811 = vsel %vm2218, %v4692, 0
      %v4814 = vsel %vm2218, %v4693, 0
      %v4817 = vsel %vm2218, %v4694, 0
      %v4820 = vsel %vm2218, %v4695, 0
      %4822 = vmatprep.subr.mxu0 0.0
      %4823 = vmatpush1.msra.mxu0 %v4697
      %4824 = vmatprep.subr.mxu0 0.0
      %4825 = vmatpush1.msra.mxu0 %v4698
      %4826 = vmatprep.subr.mxu0 0.0
      %4827 = vmatpush1.msra.mxu0 %v4699
      %4828 = vmatprep.subr.mxu0 0.0
      %4829 = vmatpush1.msra.mxu0 %v4700
      %4830 = vmatprep.subr.mxu0 0.0
      %4831 = vmatpush1.msra.mxu0 %v4701
      %4832 = vmatprep.subr.mxu0 0.0
      %4833 = vmatpush1.msra.mxu0 %v4702
      %4834 = vmatprep.subr.mxu0 0.0
      %4835 = vmatpush1.msra.mxu0 %v4703
      %4836 = vmatprep.subr.mxu0 0.0
      %4837 = vmatpush1.msra.mxu0 %v4704
      %4838 = vmatprep.subr.mxu0 0.0
      %4839 = vmatpush1.msra.mxu0 %v4705
      %4840 = vmatprep.subr.mxu0 0.0
      %4841 = vmatpush1.msra.mxu0 0.0
      %4842 = vmatprep.subr.mxu0 0.0
      %4843 = vmatpush1.msra.mxu0 0.0
      %4844 = vmatprep.subr.mxu0 0.0
      %4845 = vmatpush1.msra.mxu0 0.0
      %4846 = vmatprep.subr.mxu0 0.0
      %4847 = vmatpush1.msra.mxu0 0.0
      %4848 = vmatprep.subr.mxu0 0.0
      %4849 = vmatpush1.msra.mxu0 0.0
      %4850 = vmatprep.subr.mxu0 0.0
      %4851 = vmatpush1.msra.mxu0 0.0
      %4852 = vmatprep.subr.mxu0 0.0
      %4853 = vmatpush1.msra.mxu0 0.0
      %4854 = vmatprep.subr.mxu0 0.0
      %4855 = vmatpush1.msra.mxu0 0.0
      %4856 = vmatprep.subr.mxu0 0.0
      %4857 = vmatpush1.msra.mxu0 0.0
      %4858 = vmatprep.subr.mxu0 0.0
      %4859 = vmatpush1.msra.mxu0 0.0
      %4860 = vmatprep.subr.mxu0 0.0
      %4861 = vmatpush1.msra.mxu0 0.0
      %4862 = vmatprep.subr.mxu0 0.0
      %4863 = vmatpush1.msra.mxu0 0.0
      %4864 = vmatprep.subr.mxu0 0.0
      %4865 = vmatpush1.msra.mxu0 0.0
      %4866 = vmatprep.subr.mxu0 0.0
      %4867 = vmatpush1.msra.mxu0 0.0
      %4868 = vmatprep.subr.mxu0 0.0
      %4869 = vmatpush1.msra.mxu0 0.0
      %4870 = vmatprep.subr.mxu0 0.0
      %4871 = vmatpush1.msra.mxu0 0.0
      %4872 = vmatprep.subr.mxu0 0.0
      %4873 = vmatpush1.msra.mxu0 0.0
      %4874 = vmatprep.subr.mxu0 0.0
      %4875 = vmatpush1.msra.mxu0 0.0
      %4876 = vmatprep.subr.mxu0 0.0
      %4877 = vmatpush1.msra.mxu0 0.0
      %4878 = vmatprep.subr.mxu0 0.0
      %4879 = vmatpush1.msra.mxu0 0.0
      %4880 = vmatprep.subr.mxu0 0.0
      %4881 = vmatpush1.msra.mxu0 0.0
      %4882 = vmatprep.subr.mxu0 0.0
      %4883 = vmatpush1.msra.mxu0 0.0
      %4884 = vmatprep.subr.mxu0 0.0
      %4885 = vmatpush1.msra.mxu0 0.0
      %4886 = vmatprep.mubr.f32.mxu0 0.0
      %4887 = vmatmul.mubr.f32.gmra.mrb[0].mxu0 %v4715
      %v4888 = vpop.f32.mrb[0].mxu0
      %v4889 = vadd.f32 %v4712, %v4888
      %v4890 = vpop.f32.mrb[0].mxu0
      %4891 = vmatprep.mubr.f32.mxu0 0.0
      %4892 = vmatmul.mubr.f32.gmra.mrb[0].mxu0 %v4718
      %v4893 = vpop.f32.mrb[0].mxu0
      %v4894 = vadd.f32 %v4712, %v4893
      %v4895 = vpop.f32.mrb[0].mxu0
      %4896 = vmatprep.mubr.f32.mxu0 0.0
      %4897 = vmatmul.mubr.f32.gmra.mrb[0].mxu0 %v4721
      %v4898 = vpop.f32.mrb[0].mxu0
      %v4899 = vadd.f32 %v4712, %v4898
      %v4900 = vpop.f32.mrb[0].mxu0
      %4901 = vmatprep.mubr.f32.mxu0 0.0
      %4902 = vmatmul.mubr.f32.gmra.mrb[0].mxu0 %v4724
      %v4903 = vpop.f32.mrb[0].mxu0
      %v4904 = vadd.f32 %v4712, %v4903
      %v4905 = vpop.f32.mrb[0].mxu0
      %4906 = vmatprep.mubr.f32.mxu0 0.0
      %4907 = vmatmul.mubr.f32.gmra.mrb[0].mxu0 %v4727
      %v4908 = vpop.f32.mrb[0].mxu0
      %v4909 = vadd.f32 %v4712, %v4908
      %v4910 = vpop.f32.mrb[0].mxu0
      %4911 = vmatprep.mubr.f32.mxu0 0.0
      %4912 = vmatmul.mubr.f32.gmra.mrb[0].mxu0 %v4730
      %v4913 = vpop.f32.mrb[0].mxu0
      %v4914 = vadd.f32 %v4712, %v4913
      %v4915 = vpop.f32.mrb[0].mxu0
      %4916 = vmatprep.mubr.f32.mxu0 0.0
      %4917 = vmatmul.mubr.f32.gmra.mrb[0].mxu0 %v4733
      %v4918 = vpop.f32.mrb[0].mxu0
      %v4919 = vadd.f32 %v4712, %v4918
      %v4920 = vpop.f32.mrb[0].mxu0
      %4921 = vmatprep.mubr.f32.mxu0 0.0
      %4922 = vmatmul.mubr.f32.gmra.mrb[0].mxu0 %v4736
      %v4923 = vpop.f32.mrb[0].mxu0
      %v4924 = vadd.f32 %v4712, %v4923
      %v4925 = vpop.f32.mrb[0].mxu0
      %4926 = vmatprep.mubr.f32.mxu0 0.0
      %4927 = vmatmul.mubr.f32.gmra.mrb[0].mxu0 %v4739
      %v4928 = vpop.f32.mrb[0].mxu0
      %v4929 = vadd.f32 %v4712, %v4928
      %v4930 = vpop.f32.mrb[0].mxu0
      %4931 = vmatprep.mubr.f32.mxu0 0.0
      %4932 = vmatmul.mubr.f32.gmra.mrb[0].mxu0 %v4742
      %v4933 = vpop.f32.mrb[0].mxu0
      %v4934 = vadd.f32 %v4712, %v4933
      %v4935 = vpop.f32.mrb[0].mxu0
      %4936 = vmatprep.mubr.f32.mxu0 0.0
      %4937 = vmatmul.mubr.f32.gmra.mrb[0].mxu0 %v4745
      %v4938 = vpop.f32.mrb[0].mxu0
      %v4939 = vadd.f32 %v4712, %v4938
      %v4940 = vpop.f32.mrb[0].mxu0
      %4941 = vmatprep.mubr.f32.mxu0 0.0
      %4942 = vmatmul.mubr.f32.gmra.mrb[0].mxu0 %v4748
      %v4943 = vpop.f32.mrb[0].mxu0
      %v4944 = vadd.f32 %v4712, %v4943
      %v4945 = vpop.f32.mrb[0].mxu0
      %4946 = vmatprep.mubr.f32.mxu0 0.0
      %4947 = vmatmul.mubr.f32.gmra.mrb[0].mxu0 %v4751
      %v4948 = vpop.f32.mrb[0].mxu0
      %v4949 = vadd.f32 %v4712, %v4948
      %v4950 = vpop.f32.mrb[0].mxu0
      %4951 = vmatprep.mubr.f32.mxu0 0.0
      %4952 = vmatmul.mubr.f32.gmra.mrb[0].mxu0 %v4754
      %v4953 = vpop.f32.mrb[0].mxu0
      %v4954 = vadd.f32 %v4712, %v4953
      %v4955 = vpop.f32.mrb[0].mxu0
      %4956 = vmatprep.mubr.f32.mxu0 0.0
      %4957 = vmatmul.mubr.f32.gmra.mrb[0].mxu0 %v4757
      %v4958 = vpop.f32.mrb[0].mxu0
      %v4959 = vadd.f32 %v4712, %v4958
      %v4960 = vpop.f32.mrb[0].mxu0
      %4961 = vmatprep.mubr.f32.mxu0 0.0
      %4962 = vmatmul.mubr.f32.gmra.mrb[0].mxu0 %v4760
      %v4963 = vpop.f32.mrb[0].mxu0
      %v4964 = vadd.f32 %v4712, %v4963
      %v4965 = vpop.f32.mrb[0].mxu0
      %4966 = vmatprep.mubr.f32.mxu0 0.0
      %4967 = vmatmul.mubr.f32.gmra.mrb[0].mxu0 %v4763
      %v4968 = vpop.f32.mrb[0].mxu0
      %v4969 = vadd.f32 %v4712, %v4968
      %v4970 = vpop.f32.mrb[0].mxu0
      %4971 = vmatprep.mubr.f32.mxu0 0.0
      %4972 = vmatmul.mubr.f32.gmra.mrb[0].mxu0 %v4766
      %v4973 = vpop.f32.mrb[0].mxu0
      %v4974 = vadd.f32 %v4712, %v4973
      %v4975 = vpop.f32.mrb[0].mxu0
      %4976 = vmatprep.mubr.f32.mxu0 0.0
      %4977 = vmatmul.mubr.f32.gmra.mrb[0].mxu0 %v4769
      %v4978 = vpop.f32.mrb[0].mxu0
      %v4979 = vadd.f32 %v4712, %v4978
      %v4980 = vpop.f32.mrb[0].mxu0
      %4981 = vmatprep.mubr.f32.mxu0 0.0
      %4982 = vmatmul.mubr.f32.gmra.mrb[0].mxu0 %v4772
      %v4983 = vpop.f32.mrb[0].mxu0
      %v4984 = vadd.f32 %v4712, %v4983
      %v4985 = vpop.f32.mrb[0].mxu0
      %4986 = vmatprep.mubr.f32.mxu0 0.0
      %4987 = vmatmul.mubr.f32.gmra.mrb[0].mxu0 %v4775
      %v4988 = vpop.f32.mrb[0].mxu0
      %v4989 = vadd.f32 %v4712, %v4988
      %v4990 = vpop.f32.mrb[0].mxu0
      %4991 = vmatprep.mubr.f32.mxu0 0.0
      %4992 = vmatmul.mubr.f32.gmra.mrb[0].mxu0 %v4778
      %v4993 = vpop.f32.mrb[0].mxu0
      %v4994 = vadd.f32 %v4712, %v4993
      %v4995 = vpop.f32.mrb[0].mxu0
      %4996 = vmatprep.mubr.f32.mxu0 0.0
      %4997 = vmatmul.mubr.f32.gmra.mrb[0].mxu0 %v4781
      %v4998 = vpop.f32.mrb[0].mxu0
      %v4999 = vadd.f32 %v4712, %v4998
      %v5000 = vpop.f32.mrb[0].mxu0
      %5001 = vmatprep.mubr.f32.mxu0 0.0
      %5002 = vmatmul.mubr.f32.gmra.mrb[0].mxu0 %v4784
      %v5003 = vpop.f32.mrb[0].mxu0
      %v5004 = vadd.f32 %v4712, %v5003
      %v5005 = vpop.f32.mrb[0].mxu0
      %5006 = vmatprep.mubr.f32.mxu0 0.0
      %5007 = vmatmul.mubr.f32.gmra.mrb[0].mxu0 %v4787
      %v5008 = vpop.f32.mrb[0].mxu0
      %v5009 = vadd.f32 %v4712, %v5008
      %v5010 = vpop.f32.mrb[0].mxu0
      %5011 = vmatprep.mubr.f32.mxu0 0.0
      %5012 = vmatmul.mubr.f32.gmra.mrb[0].mxu0 %v4790
      %v5013 = vpop.f32.mrb[0].mxu0
      %v5014 = vadd.f32 %v4712, %v5013
      %v5015 = vpop.f32.mrb[0].mxu0
      %5016 = vmatprep.mubr.f32.mxu0 0.0
      %5017 = vmatmul.mubr.f32.gmra.mrb[0].mxu0 %v4793
      %v5018 = vpop.f32.mrb[0].mxu0
      %v5019 = vadd.f32 %v4712, %v5018
      %v5020 = vpop.f32.mrb[0].mxu0
      %5021 = vmatprep.mubr.f32.mxu0 0.0
      %5022 = vmatmul.mubr.f32.gmra.mrb[0].mxu0 %v4796
      %v5023 = vpop.f32.mrb[0].mxu0
      %v5024 = vadd.f32 %v4712, %v5023
      %v5025 = vpop.f32.mrb[0].mxu0
      %5026 = vmatprep.mubr.f32.mxu0 0.0
      %5027 = vmatmul.mubr.f32.gmra.mrb[0].mxu0 %v4799
      %v5028 = vpop.f32.mrb[0].mxu0
      %v5029 = vadd.f32 %v4712, %v5028
      %v5030 = vpop.f32.mrb[0].mxu0
      %5031 = vmatprep.mubr.f32.mxu0 0.0
      %5032 = vmatmul.mubr.f32.gmra.mrb[0].mxu0 %v4802
      %v5033 = vpop.f32.mrb[0].mxu0
      %v5034 = vadd.f32 %v4712, %v5033
      %v5035 = vpop.f32.mrb[0].mxu0
      %5036 = vmatprep.mubr.f32.mxu0 0.0
      %5037 = vmatmul.mubr.f32.gmra.mrb[0].mxu0 %v4805
      %v5038 = vpop.f32.mrb[0].mxu0
      %v5039 = vadd.f32 %v4712, %v5038
      %v5040 = vpop.f32.mrb[0].mxu0
      %5041 = vmatprep.mubr.f32.mxu0 0.0
      %5042 = vmatmul.mubr.f32.gmra.mrb[0].mxu0 %v4808
      %v5043 = vpop.f32.mrb[0].mxu0
      %v5044 = vadd.f32 %v4712, %v5043
      %v5045 = vpop.f32.mrb[0].mxu0
      %5046 = vmatprep.mubr.f32.mxu0 0.0
      %5047 = vmatmul.mubr.f32.gmra.mrb[0].mxu0 %v4811
      %v5048 = vpop.f32.mrb[0].mxu0
      %v5049 = vadd.f32 %v4712, %v5048
      %v5050 = vpop.f32.mrb[0].mxu0
      %5051 = vmatprep.mubr.f32.mxu0 0.0
      %5052 = vmatmul.mubr.f32.gmra.mrb[0].mxu0 %v4814
      %v5053 = vpop.f32.mrb[0].mxu0
      %v5054 = vadd.f32 %v4712, %v5053
      %v5055 = vpop.f32.mrb[0].mxu0
      %5056 = vmatprep.mubr.f32.mxu0 0.0
      %5057 = vmatmul.mubr.f32.gmra.mrb[0].mxu0 %v4817
      %v5058 = vpop.f32.mrb[0].mxu0
      %v5059 = vadd.f32 %v4712, %v5058
      %v5060 = vpop.f32.mrb[0].mxu0
      %5061 = vmatprep.mubr.f32.mxu0 0.0
      %5062 = vmatmul.mubr.f32.gmra.mrb[0].mxu0 %v4820
      %v5063 = vpop.f32.mrb[0].mxu0
      %v5064 = vadd.f32 %v4712, %v5063
      %v5065 = vpop.f32.mrb[0].mxu0
      %5066 = vdwg.mxu0
      %v5067 = vmax.f32 %v4889, 0.0
      %v5068 = vmax.f32 %v4894, 0.0
      %v5069 = vmax.f32 %v4899, 0.0
      %v5070 = vmax.f32 %v4904, 0.0
      %v5071 = vmax.f32 %v4909, 0.0
      %v5072 = vmax.f32 %v4914, 0.0
      %v5073 = vmax.f32 %v4919, 0.0
      %v5074 = vmax.f32 %v4924, 0.0
      %v5075 = vmax.f32 %v4929, 0.0
      %v5076 = vmax.f32 %v4934, 0.0
      %v5077 = vmax.f32 %v4939, 0.0
      %v5078 = vmax.f32 %v4944, 0.0
      %v5079 = vmax.f32 %v4949, 0.0
      %v5080 = vmax.f32 %v4954, 0.0
      %v5081 = vmax.f32 %v4959, 0.0
      %v5082 = vmax.f32 %v4964, 0.0
      %v5083 = vmax.f32 %v4969, 0.0
      %v5084 = vmax.f32 %v4974, 0.0
      %v5085 = vmax.f32 %v4979, 0.0
      %v5086 = vmax.f32 %v4984, 0.0
      %v5087 = vmax.f32 %v4989, 0.0
      %v5088 = vmax.f32 %v4994, 0.0
      %v5089 = vmax.f32 %v4999, 0.0
      %v5090 = vmax.f32 %v5004, 0.0
      %v5091 = vmax.f32 %v5009, 0.0
      %v5092 = vmax.f32 %v5014, 0.0
      %v5093 = vmax.f32 %v5019, 0.0
      %v5094 = vmax.f32 %v5024, 0.0
      %v5095 = vmax.f32 %v5029, 0.0
      %v5096 = vmax.f32 %v5034, 0.0
      %v5097 = vmax.f32 %v5039, 0.0
      %v5098 = vmax.f32 %v5044, 0.0
      %v5099 = vmax.f32 %v5049, 0.0
      %v5100 = vmax.f32 %v5054, 0.0
      %v5101 = vmax.f32 %v5059, 0.0
      %v5102 = vmax.f32 %v5064, 0.0
      %v5103 = vmul.f32 %v5067, %v2611
      %v5104 = vmul.f32 %v5068, %v2616
      %v5105 = vmul.f32 %v5069, %v2621
      %v5106 = vmul.f32 %v5070, %v2626
      %v5107 = vmul.f32 %v5071, %v2631
      %v5108 = vmul.f32 %v5072, %v2636
      %v5109 = vmul.f32 %v5073, %v2641
      %v5110 = vmul.f32 %v5074, %v2646
      %v5111 = vmul.f32 %v5075, %v2651
      %v5112 = vmul.f32 %v5076, %v2656
      %v5113 = vmul.f32 %v5077, %v2661
      %v5114 = vmul.f32 %v5078, %v2666
      %v5115 = vmul.f32 %v5079, %v2671
      %v5116 = vmul.f32 %v5080, %v2676
      %v5117 = vmul.f32 %v5081, %v2681
      %v5118 = vmul.f32 %v5082, %v2686
      %v5119 = vmul.f32 %v5083, %v2691
      %v5120 = vmul.f32 %v5084, %v2696
      %v5121 = vmul.f32 %v5085, %v2701
      %v5122 = vmul.f32 %v5086, %v2706
      %v5123 = vmul.f32 %v5087, %v2711
      %v5124 = vmul.f32 %v5088, %v2716
      %v5125 = vmul.f32 %v5089, %v2721
      %v5126 = vmul.f32 %v5090, %v2726
      %v5127 = vmul.f32 %v5091, %v2731
      %v5128 = vmul.f32 %v5092, %v2736
      %v5129 = vmul.f32 %v5093, %v2741
      %v5130 = vmul.f32 %v5094, %v2746
      %v5131 = vmul.f32 %v5095, %v2751
      %v5132 = vmul.f32 %v5096, %v2756
      %v5133 = vmul.f32 %v5097, %v2761
      %v5134 = vmul.f32 %v5098, %v2766
      %v5135 = vmul.f32 %v5099, %v2771
      %v5136 = vmul.f32 %v5100, %v2776
      %v5137 = vmul.f32 %v5101, %v2781
      %v5138 = vmul.f32 %v5102, %v2786
      %5139 = vst.msk [vmem:[#allocation2 + $0x13] sm:$0xff] %vm198, %v5103
      %5140 = vst.msk [vmem:[#allocation2 + $0x1b] sm:$0xff] %vm198, %v5104
      %5141 = vst.msk [vmem:[#allocation2 + $0x23] sm:$0xff] %vm198, %v5105
      %5142 = vst.msk [vmem:[#allocation2 + $0x2b] sm:$0xff] %vm198, %v5106
      %5143 = vst.msk [vmem:[#allocation2 + $0x33] sm:$0xff] %vm198, %v5107
      %5144 = vst.msk [vmem:[#allocation2 + $0x3b] sm:$0xff] %vm198, %v5108
      %5145 = vst.msk [vmem:[#allocation2 + $0x43] sm:$0xff] %vm198, %v5109
      %5146 = vst.msk [vmem:[#allocation2 + $0x4b] sm:$0xff] %vm198, %v5110
      %5147 = vst.msk [vmem:[#allocation2 + $0x53] sm:$0xff] %vm198, %v5111
      %5148 = vst.msk [vmem:[#allocation2 + $0x5b] sm:$0xff] %vm198, %v5112
      %5149 = vst.msk [vmem:[#allocation2 + $0x63] sm:$0xff] %vm198, %v5113
      %5150 = vst.msk [vmem:[#allocation2 + $0x6b] sm:$0xff] %vm198, %v5114
      %5151 = vst.msk [vmem:[#allocation2 + $0x73] sm:$0xff] %vm198, %v5115
      %5152 = vst.msk [vmem:[#allocation2 + $0x7b] sm:$0xff] %vm198, %v5116
      %5153 = vst.msk [vmem:[#allocation2 + $0x83] sm:$0xff] %vm198, %v5117
      %5154 = vst.msk [vmem:[#allocation2 + $0x8b] sm:$0xff] %vm198, %v5118
      %5155 = vst.msk [vmem:[#allocation2 + $0x93] sm:$0xff] %vm198, %v5119
      %5156 = vst.msk [vmem:[#allocation2 + $0x9b] sm:$0xff] %vm198, %v5120
      %5157 = vst.msk [vmem:[#allocation2 + $0xa3] sm:$0xff] %vm198, %v5121
      %5158 = vst.msk [vmem:[#allocation2 + $0xab] sm:$0xff] %vm198, %v5122
      %5159 = vst.msk [vmem:[#allocation2 + $0xb3] sm:$0xff] %vm198, %v5123
      %5160 = vst.msk [vmem:[#allocation2 + $0xbb] sm:$0xff] %vm198, %v5124
      %5161 = vst.msk [vmem:[#allocation2 + $0xc3] sm:$0xff] %vm198, %v5125
      %5162 = vst.msk [vmem:[#allocation2 + $0xcb] sm:$0xff] %vm198, %v5126
      %5163 = vst.msk [vmem:[#allocation2 + $0xd3] sm:$0xff] %vm198, %v5127
      %5164 = vst.msk [vmem:[#allocation2 + $0xdb] sm:$0xff] %vm198, %v5128
      %5165 = vst.msk [vmem:[#allocation2 + $0xe3] sm:$0xff] %vm198, %v5129
      %5166 = vst.msk [vmem:[#allocation2 + $0xeb] sm:$0xff] %vm198, %v5130
      %5167 = vst.msk [vmem:[#allocation2 + $0xf3] sm:$0xff] %vm198, %v5131
      %5168 = vst.msk [vmem:[#allocation2 + $0xfb] sm:$0xff] %vm198, %v5132
      %5169 = vst.msk [vmem:[#allocation2 + $0x103] sm:$0xff] %vm198, %v5133
      %5170 = vst.msk [vmem:[#allocation2 + $0x10b] sm:$0xff] %vm198, %v5134
      %5171 = vst.msk [vmem:[#allocation2 + $0x113] sm:$0xff] %vm198, %v5135
      %5172 = vst.msk [vmem:[#allocation2 + $0x11b] sm:$0xff] %vm198, %v5136
      %5173 = vst.msk [vmem:[#allocation2 + $0x123] sm:$0xff] %vm198, %v5137
      %5174 = vst.msk [vmem:[#allocation2 + $0x12b] sm:$0xff] %vm198, %v5138
      %s5175 = scalar_lea.vmem [#allocation2], 19
      %v5176 = vld [vmem:[%s5175] ss:$2 sm:$0xff]
      %s5177 = scalar_lea.vmem [#allocation2], 20
      %v5178 = vld [vmem:[%s5177] ss:$2 sm:$0xff]
      %v5179 = vmax.f32 %v5176, %v5178
      %s5180 = scalar_lea.vmem [#allocation2], 37
      %v5181 = vld [vmem:[%s5180] ss:$2 sm:$0xff]
      %s5182 = scalar_lea.vmem [#allocation2], 38
      %v5183 = vld [vmem:[%s5182] ss:$2 sm:$0xff]
      %v5184 = vmax.f32 %v5181, %v5183
      %v5185 = vmax.f32 %v5179, %v5184
      %5186 = vst.msk [vmem:[%s197] sm:$0xff] %vm198, %v5185
      %s5187 = scalar_lea.vmem [#allocation2], 55
      %v5188 = vld [vmem:[%s5187] ss:$2 sm:$0xff]
      %s5189 = scalar_lea.vmem [#allocation2], 56
      %v5190 = vld [vmem:[%s5189] ss:$2 sm:$0xff]
      %v5191 = vmax.f32 %v5188, %v5190
      %s5192 = scalar_lea.vmem [#allocation2], 73
      %v5193 = vld [vmem:[%s5192] ss:$2 sm:$0xff]
      %s5194 = scalar_lea.vmem [#allocation2], 74
      %v5195 = vld [vmem:[%s5194] ss:$2 sm:$0xff]
      %v5196 = vmax.f32 %v5193, %v5195
      %v5197 = vmax.f32 %v5191, %v5196
      %s5198 = scalar_lea.vmem %s197, 8
      %5199 = vst.msk [vmem:[%s5198] sm:$0xff] %vm198, %v5197
      %s5200 = scalar_lea.vmem [#allocation2], 91
      %v5201 = vld [vmem:[%s5200] ss:$2 sm:$0xff]
      %s5202 = scalar_lea.vmem [#allocation2], 92
      %v5203 = vld [vmem:[%s5202] ss:$2 sm:$0xff]
      %v5204 = vmax.f32 %v5201, %v5203
      %s5205 = scalar_lea.vmem [#allocation2], 109
      %v5206 = vld [vmem:[%s5205] ss:$2 sm:$0xff]
      %s5207 = scalar_lea.vmem [#allocation2], 110
      %v5208 = vld [vmem:[%s5207] ss:$2 sm:$0xff]
      %v5209 = vmax.f32 %v5206, %v5208
      %v5210 = vmax.f32 %v5204, %v5209
      %s5211 = scalar_lea.vmem %s197, 16
      %5212 = vst.msk [vmem:[%s5211] sm:$0xff] %vm198, %v5210
      %s5213 = scalar_lea.vmem [#allocation2], 127
      %v5214 = vld [vmem:[%s5213] ss:$2 sm:$0xff]
      %s5215 = scalar_lea.vmem [#allocation2], 128
      %v5216 = vld [vmem:[%s5215] ss:$2 sm:$0xff]
      %v5217 = vmax.f32 %v5214, %v5216
      %s5218 = scalar_lea.vmem [#allocation2], 145
      %v5219 = vld [vmem:[%s5218] ss:$2 sm:$0xff]
      %s5220 = scalar_lea.vmem [#allocation2], 146
      %v5221 = vld [vmem:[%s5220] ss:$2 sm:$0xff]
      %v5222 = vmax.f32 %v5219, %v5221
      %v5223 = vmax.f32 %v5217, %v5222
      %s5224 = scalar_lea.vmem %s197, 24
      %5225 = vst.msk [vmem:[%s5224] sm:$0xff] %vm198, %v5223
      %s5226 = scalar_lea.vmem [#allocation2], 163
      %v5227 = vld [vmem:[%s5226] ss:$2 sm:$0xff]
      %s5228 = scalar_lea.vmem [#allocation2], 164
      %v5229 = vld [vmem:[%s5228] ss:$2 sm:$0xff]
      %v5230 = vmax.f32 %v5227, %v5229
      %s5231 = scalar_lea.vmem [#allocation2], 181
      %v5232 = vld [vmem:[%s5231] ss:$2 sm:$0xff]
      %s5233 = scalar_lea.vmem [#allocation2], 182
      %v5234 = vld [vmem:[%s5233] ss:$2 sm:$0xff]
      %v5235 = vmax.f32 %v5232, %v5234
      %v5236 = vmax.f32 %v5230, %v5235
      %s5237 = scalar_lea.vmem %s197, 32
      %5238 = vst.msk [vmem:[%s5237] sm:$0xff] %vm198, %v5236
      %s5239 = scalar_lea.vmem [#allocation2], 199
      %v5240 = vld [vmem:[%s5239] ss:$2 sm:$0xff]
      %s5241 = scalar_lea.vmem [#allocation2], 200
      %v5242 = vld [vmem:[%s5241] ss:$2 sm:$0xff]
      %v5243 = vmax.f32 %v5240, %v5242
      %s5244 = scalar_lea.vmem [#allocation2], 217
      %v5245 = vld [vmem:[%s5244] ss:$2 sm:$0xff]
      %s5246 = scalar_lea.vmem [#allocation2], 218
      %v5247 = vld [vmem:[%s5246] ss:$2 sm:$0xff]
      %v5248 = vmax.f32 %v5245, %v5247
      %v5249 = vmax.f32 %v5243, %v5248
      %s5250 = scalar_lea.vmem %s197, 40
      %5251 = vst.msk [vmem:[%s5250] sm:$0xff] %vm198, %v5249
      %s5252 = scalar_lea.vmem [#allocation2], 235
      %v5253 = vld [vmem:[%s5252] ss:$2 sm:$0xff]
      %s5254 = scalar_lea.vmem [#allocation2], 236
      %v5255 = vld [vmem:[%s5254] ss:$2 sm:$0xff]
      %v5256 = vmax.f32 %v5253, %v5255
      %s5257 = scalar_lea.vmem [#allocation2], 253
      %v5258 = vld [vmem:[%s5257] ss:$2 sm:$0xff]
      %s5259 = scalar_lea.vmem [#allocation2], 254
      %v5260 = vld [vmem:[%s5259] ss:$2 sm:$0xff]
      %v5261 = vmax.f32 %v5258, %v5260
      %v5262 = vmax.f32 %v5256, %v5261
      %s5263 = scalar_lea.vmem %s197, 48
      %5264 = vst.msk [vmem:[%s5263] sm:$0xff] %vm198, %v5262
      %s5265 = scalar_lea.vmem [#allocation2], 271
      %v5266 = vld [vmem:[%s5265] ss:$2 sm:$0xff]
      %s5267 = scalar_lea.vmem [#allocation2], 272
      %v5268 = vld [vmem:[%s5267] ss:$2 sm:$0xff]
      %v5269 = vmax.f32 %v5266, %v5268
      %s5270 = scalar_lea.vmem [#allocation2], 289
      %v5271 = vld [vmem:[%s5270] ss:$2 sm:$0xff]
      %s5272 = scalar_lea.vmem [#allocation2], 290
      %v5273 = vld [vmem:[%s5272] ss:$2 sm:$0xff]
      %v5274 = vmax.f32 %v5271, %v5273
      %v5275 = vmax.f32 %v5269, %v5274
      %s5276 = scalar_lea.vmem %s197, 56
      %5277 = vst.msk [vmem:[%s5276] sm:$0xff] %vm198, %v5275
      %p5278 = scmp.lt.s32.totalorder %s15, 1
      %s5279 = scalar_select %p5278, %s15, 1
      %s5280 = smul.addr %s5279, 8
      %s5281 = smul.addr %s5280, 8
      %s5282 = scalar_lea.vmem %s4, %s5281
      // Predicated region
      $region37: #{conv_block_forward.1} parent=35 // pred_check
        %p5283 = pneg %p122
      $region38: #{conv_block_forward.1} parent=35 // pred_check_branch
        %5285 = sbr.rel (%p5283) target = $region40
      $region39: #{conv_block_forward.1} parent=35 // pred_region
        _
      $region40: #{conv_block_forward.1} parent=35 // pred_fallthru
        _
    $region36: #{conv_block_forward.1} parent=5 // pred_fallthru
      _
    %p5286 = scmp.le.s32.totalorder 2, %s10
    // Predicated region
    $region41: #{conv_block_forward.1} parent=5 // pred_check
      %p5287 = pneg %p5286
    $region42: #{conv_block_forward.1} parent=5 // pred_check_branch
      %5289 = sbr.rel (%p5287) target = $region44
    $region43: #{conv_block_forward.1} parent=5 // pred_region
      %s5290 = ssub.s32 %s10, 2
      // Predicated region
      $region45: #{conv_block_forward.1} parent=43 // pred_check
        %p5291 = pneg %p128
      $region46: #{conv_block_forward.1} parent=43 // pred_check_branch
        %5293 = sbr.rel (%p5291) target = $region48
      $region47: #{conv_block_forward.1} parent=43 // pred_region
        %p5294 = scmp.lt.s32.totalorder %s16, 1
        %s5295 = scalar_select %p5294, %s16, 1
        %s5296 = smul.addr %s5295, 8
        %s5297 = smul.addr %s5296, 8
        %s5298 = scalar_lea.vmem %s4, %s5297
      $region48: #{conv_block_forward.1} parent=43 // pred_fallthru
        _
    $region44: #{conv_block_forward.1} parent=5 // pred_fallthru
      _
  $region6: #{conv_block_forward.1} parent=0 // loop_footer
    %s14 = sadd.s32 1, %s10
  $region7: #{conv_block_forward.1} parent=0 // loop_footer_branch
    %9 = sbr.rel target = $region3
  $region8: #{conv_block_forward.1} parent=0 // loop_exit
    _

</llo_original>
